<compile_context>
chip_gen: v6e
topology: v6e:2x2x1
jax: 0.10.0
libtpu: 0.0.40
codegen_flags: <defaults>
</compile_context>

<pallas_src>
import functools

import jax
import jax.numpy as jnp
from jax import lax
from jax.experimental import pallas as pl
from jax.experimental.pallas import tpu as pltpu


def resblock_kernel(x_ref, w1_ref, b1_ref, w2_ref, b2_ref, o_ref,
                    xpad_ref, hpad_ref, *, res_scale, tile_rows):
    """One batch element per grid step.

    x_ref   : (H, W, Cp)      input block (leading batch dim squeezed)
    w1_ref  : (3, 3, Cp, Cp)  conv1 weight (HWIO, channel-padded)
    b1_ref  : (1, Cp)
    w2_ref  : (3, 3, Cp, Cp)  conv2 weight
    b2_ref  : (1, Cp)
    o_ref   : (H, W, Cp)
    xpad_ref: (H+2, W+2, Cp)  VMEM scratch: zero-padded input
    hpad_ref: (H+2, W+2, Cp)  VMEM scratch: zero-padded ReLU intermediate
    """
    H, W, Cp = x_ref.shape
    TR = tile_rows
    n_strips = H // TR

    # Zero only the 1-px borders every step (interiors are fully overwritten
    # below).  Doing it per-step instead of under pl.when(program_id == 0)
    # keeps the kernel correct when the "parallel" batch axis is sharded
    # across TensorCores (each core sees only a subset of grid steps).
    zrow = jnp.zeros((1, W + 2, Cp), jnp.float32)
    zcol = jnp.zeros((H + 2, 1, Cp), jnp.float32)
    for ref in (xpad_ref, hpad_ref):
        ref[0:1, :, :] = zrow
        ref[H + 1:H + 2, :, :] = zrow
        ref[:, 0:1, :] = zcol
        ref[:, W + 1:W + 2, :] = zcol

    # Pad the input into VMEM (single VMEM->VMEM copy; the image was DMA'd
    # from HBM exactly once via the BlockSpec).
    xpad_ref[1:H + 1, 1:W + 1, :] = x_ref[...]

    def conv_strip(src_ref, w_ref, b_ref, r0):
        """3x3 'SAME' conv for output rows [r0, r0+TR), returns (TR*W, Cp) f32."""
        acc = jnp.zeros((TR * W, Cp), jnp.float32)
        for kh in range(3):
            rows = src_ref[pl.ds(r0 + kh, TR), :, :]            # (TR, W+2, Cp)
            for kw in range(3):
                patch = rows[:, kw:kw + W, :].reshape(TR * W, Cp)
                acc = acc + jnp.dot(patch, w_ref[kh, kw],
                                    preferred_element_type=jnp.float32)
        return acc + b_ref[...]

    # ---- conv1 + ReLU -> padded intermediate (interior only) ----
    @pl.loop(0, n_strips)
    def _conv1(s):
        r0 = pl.multiple_of(s * TR, TR)
        h = jnp.maximum(conv_strip(xpad_ref, w1_ref, b1_ref, r0), 0.0)
        hpad_ref[pl.ds(r0 + 1, TR), 1:W + 1, :] = h.reshape(TR, W, Cp)

    # ---- conv2 + scale + residual add -> lane-dense output store ----
    @pl.loop(0, n_strips)
    def _conv2(s):
        r0 = pl.multiple_of(s * TR, TR)
        y = conv_strip(hpad_ref, w2_ref, b2_ref, r0).reshape(TR, W, Cp)
        o_ref[pl.ds(r0, TR), :, :] = (
            x_ref[pl.ds(r0, TR), :, :] + y * res_scale).astype(o_ref.dtype)


def residual_block(x_nchw, w1, b1, w2, b2, *, res_scale=0.1):
    """x_nchw: (N, C, H, W) f32; w*: PyTorch OIHW (Cout, Cin, 3, 3); b*: (Cout,)."""
    N, C, H, W = x_nchw.shape
    Cmid = w1.shape[0]
    Cout = w2.shape[0]

    # Pack every channel count to the 128-lane width so all matmuls and the
    # output store are lane-dense.  (Real EDSR channel counts of 64/128/256
    # pad little or not at all; the toy C=4 demo pads a lot but stays tiny.)
    LANE = 128
    Cp = ((max(C, Cmid, Cout) + LANE - 1) // LANE) * LANE

    x = jnp.transpose(x_nchw, (0, 2, 3, 1))                         # NHWC
    x = jnp.pad(x, ((0, 0), (0, 0), (0, 0), (0, Cp - C)))

    def pack_w(w):                                                  # OIHW -> HWIO, padded
        hwio = jnp.transpose(w, (2, 3, 1, 0))
        return jnp.pad(hwio, ((0, 0), (0, 0),
                              (0, Cp - hwio.shape[2]),
                              (0, Cp - hwio.shape[3])))

    w1k = pack_w(w1)
    w2k = pack_w(w2)
    b1k = jnp.pad(b1, (0, Cp - Cmid)).reshape(1, Cp)
    b2k = jnp.pad(b2, (0, Cp - Cout)).reshape(1, Cp)

    tile_rows = 8 if H % 8 == 0 else 1

    kernel = functools.partial(resblock_kernel, res_scale=res_scale,
                               tile_rows=tile_rows)

    out_nhwc = pl.pallas_call(
        kernel,
        out_shape=jax.ShapeDtypeStruct((N, H, W, Cp), x.dtype),
        grid_spec=pltpu.PrefetchScalarGridSpec(
            num_scalar_prefetch=0,
            grid=(N,),
            in_specs=[
                pl.BlockSpec((None, H, W, Cp), lambda n: (n, 0, 0, 0)),
                pl.BlockSpec((3, 3, Cp, Cp), lambda n: (0, 0, 0, 0)),
                pl.BlockSpec((1, Cp), lambda n: (0, 0)),
                pl.BlockSpec((3, 3, Cp, Cp), lambda n: (0, 0, 0, 0)),
                pl.BlockSpec((1, Cp), lambda n: (0, 0)),
            ],
            out_specs=pl.BlockSpec((None, H, W, Cp), lambda n: (n, 0, 0, 0)),
            scratch_shapes=[
                pltpu.VMEM((H + 2, W + 2, Cp), jnp.float32),   # padded input
                pltpu.VMEM((H + 2, W + 2, Cp), jnp.float32),   # padded ReLU mid
            ],
        ),
        compiler_params=pltpu.CompilerParams(
            dimension_semantics=("parallel",)),
    )(x, w1k, b1k, w2k, b2k)

    return jnp.transpose(out_nhwc[..., :Cout], (0, 3, 1, 2))        # back to NCHW


def reference_forward(x_nchw, w1, b1, w2, b2, *, res_scale=0.1):
    """Pure-JAX reference mirroring the PyTorch module (NCHW / OIHW)."""
    dn = ("NCHW", "OIHW", "NCHW")
    y = lax.conv_general_dilated(x_nchw, w1, (1, 1), "SAME",
                                 dimension_numbers=dn) + b1[None, :, None, None]
    y = jnp.maximum(y, 0.0)
    y = lax.conv_general_dilated(y, w2, (1, 1), "SAME",
                                 dimension_numbers=dn) + b2[None, :, None, None]
    return x_nchw + y * res_scale


if __name__ == "__main__":
    key = jax.random.PRNGKey(0)
    k_x, k_w1, k_b1, k_w2, k_b2 = jax.random.split(key, 5)

    N, C, H, W = 2, 4, 16, 16
    res_scale = 0.1

    # Deterministic synthetic parameters (PyTorch Conv2d shapes: OIHW + bias).
    x = jax.random.normal(k_x, (N, C, H, W), jnp.float32)
    w1 = jax.random.normal(k_w1, (C, C, 3, 3), jnp.float32) * 0.1
    b1 = jax.random.normal(k_b1, (C,), jnp.float32) * 0.1
    w2 = jax.random.normal(k_w2, (C, C, 3, 3), jnp.float32) * 0.1
    b2 = jax.random.normal(k_b2, (C,), jnp.float32) * 0.1

    out = residual_block(x, w1, b1, w2, b2, res_scale=res_scale)
    out = jax.block_until_ready(out)

    ref = reference_forward(x, w1, b1, w2, b2, res_scale=res_scale)
    assert out.shape == ref.shape == (N, C, H, W)
    assert jnp.allclose(out, ref, atol=1e-3, rtol=1e-3), float(
        jnp.max(jnp.abs(out - ref)))

    print("KERNEL_OK")
</pallas_src>

<mosaic_0001>
module attributes {stable_mosaic.version = 11 : i64} {
  func.func @resblock_kernel(%arg0: i32, %arg1: memref<1x16x16x128xf32, #tpu.memory_space<vmem>>, %arg2: memref<3x3x128x128xf32, #tpu.memory_space<vmem>>, %arg3: memref<1x128xf32, #tpu.memory_space<vmem>>, %arg4: memref<3x3x128x128xf32, #tpu.memory_space<vmem>>, %arg5: memref<1x128xf32, #tpu.memory_space<vmem>>, %arg6: memref<1x16x16x128xf32, #tpu.memory_space<vmem>>, %arg7: memref<18x18x128xf32, #tpu.memory_space<vmem>>, %arg8: memref<18x18x128xf32, #tpu.memory_space<vmem>>) attributes {dimension_semantics = [#tpu.dimension_semantics<parallel>], iteration_bounds = array<i64: 2>, scalar_prefetch = 0 : i64, scratch_operands = 2 : i64, tpu.core_type = #tpu.core_type<tc>, window_params = [{transform_indices = @transform_0, window_bounds = array<i64: 1, 16, 16, 128>}, {pipeline_mode = #tpu.pipeline_mode<synchronous>, transform_indices = @transform_1, window_bounds = array<i64: 3, 3, 128, 128>}, {pipeline_mode = #tpu.pipeline_mode<synchronous>, transform_indices = @transform_2, window_bounds = array<i64: 1, 128>}, {pipeline_mode = #tpu.pipeline_mode<synchronous>, transform_indices = @transform_3, window_bounds = array<i64: 3, 3, 128, 128>}, {pipeline_mode = #tpu.pipeline_mode<synchronous>, transform_indices = @transform_4, window_bounds = array<i64: 1, 128>}, {transform_indices = @transform_5, window_bounds = array<i64: 1, 16, 16, 128>}]} {
    %cst = arith.constant 0.000000e+00 : f32
    %0 = vector.broadcast %cst : f32 to vector<1x18x128xf32>
    %cst_0 = arith.constant 0.000000e+00 : f32
    %1 = vector.broadcast %cst_0 : f32 to vector<18x1x128xf32>
    %c0 = arith.constant 0 : index
    %c0_1 = arith.constant 0 : index
    %c0_2 = arith.constant 0 : index
    %2 = vector.load %arg7[%c0, %c0_1, %c0_2] : memref<18x18x128xf32, #tpu.memory_space<vmem>>, vector<1x18x128xf32>
    tpu.vector_store %arg7[%c0, %c0_1, %c0_2], %0 {strides = array<i32>} : memref<18x18x128xf32, #tpu.memory_space<vmem>>, vector<1x18x128xf32>,
    %c17 = arith.constant 17 : index
    %c0_3 = arith.constant 0 : index
    %c0_4 = arith.constant 0 : index
    %3 = vector.load %arg7[%c17, %c0_3, %c0_4] : memref<18x18x128xf32, #tpu.memory_space<vmem>>, vector<1x18x128xf32>
    tpu.vector_store %arg7[%c17, %c0_3, %c0_4], %0 {strides = array<i32>} : memref<18x18x128xf32, #tpu.memory_space<vmem>>, vector<1x18x128xf32>,
    %c0_5 = arith.constant 0 : index
    %c0_6 = arith.constant 0 : index
    %c0_7 = arith.constant 0 : index
    %4 = vector.load %arg7[%c0_5, %c0_6, %c0_7] : memref<18x18x128xf32, #tpu.memory_space<vmem>>, vector<18x1x128xf32>
    tpu.vector_store %arg7[%c0_5, %c0_6, %c0_7], %1 {strides = array<i32>} : memref<18x18x128xf32, #tpu.memory_space<vmem>>, vector<18x1x128xf32>,
    %c0_8 = arith.constant 0 : index
    %c17_9 = arith.constant 17 : index
    %c0_10 = arith.constant 0 : index
    %5 = vector.load %arg7[%c0_8, %c17_9, %c0_10] : memref<18x18x128xf32, #tpu.memory_space<vmem>>, vector<18x1x128xf32>
    tpu.vector_store %arg7[%c0_8, %c17_9, %c0_10], %1 {strides = array<i32>} : memref<18x18x128xf32, #tpu.memory_space<vmem>>, vector<18x1x128xf32>,
    %c0_11 = arith.constant 0 : index
    %c0_12 = arith.constant 0 : index
    %c0_13 = arith.constant 0 : index
    %6 = vector.load %arg8[%c0_11, %c0_12, %c0_13] : memref<18x18x128xf32, #tpu.memory_space<vmem>>, vector<1x18x128xf32>
    tpu.vector_store %arg8[%c0_11, %c0_12, %c0_13], %0 {strides = array<i32>} : memref<18x18x128xf32, #tpu.memory_space<vmem>>, vector<1x18x128xf32>,
    %c17_14 = arith.constant 17 : index
    %c0_15 = arith.constant 0 : index
    %c0_16 = arith.constant 0 : index
    %7 = vector.load %arg8[%c17_14, %c0_15, %c0_16] : memref<18x18x128xf32, #tpu.memory_space<vmem>>, vector<1x18x128xf32>
    tpu.vector_store %arg8[%c17_14, %c0_15, %c0_16], %0 {strides = array<i32>} : memref<18x18x128xf32, #tpu.memory_space<vmem>>, vector<1x18x128xf32>,
    %c0_17 = arith.constant 0 : index
    %c0_18 = arith.constant 0 : index
    %c0_19 = arith.constant 0 : index
    %8 = vector.load %arg8[%c0_17, %c0_18, %c0_19] : memref<18x18x128xf32, #tpu.memory_space<vmem>>, vector<18x1x128xf32>
    tpu.vector_store %arg8[%c0_17, %c0_18, %c0_19], %1 {strides = array<i32>} : memref<18x18x128xf32, #tpu.memory_space<vmem>>, vector<18x1x128xf32>,
    %c0_20 = arith.constant 0 : index
    %c17_21 = arith.constant 17 : index
    %c0_22 = arith.constant 0 : index
    %9 = vector.load %arg8[%c0_20, %c17_21, %c0_22] : memref<18x18x128xf32, #tpu.memory_space<vmem>>, vector<18x1x128xf32>
    tpu.vector_store %arg8[%c0_20, %c17_21, %c0_22], %1 {strides = array<i32>} : memref<18x18x128xf32, #tpu.memory_space<vmem>>, vector<18x1x128xf32>,
    %c0_23 = arith.constant 0 : index
    %c0_24 = arith.constant 0 : index
    %c0_25 = arith.constant 0 : index
    %c0_26 = arith.constant 0 : index
    %10 = vector.load %arg1[%c0_23, %c0_24, %c0_25, %c0_26] : memref<1x16x16x128xf32, #tpu.memory_space<vmem>>, vector<1x16x16x128xf32>
    %11 = vector.shape_cast %10 : vector<1x16x16x128xf32> to vector<16x16x128xf32>
    %c1 = arith.constant 1 : index
    %c1_27 = arith.constant 1 : index
    %c0_28 = arith.constant 0 : index
    %12 = vector.load %arg7[%c1, %c1_27, %c0_28] : memref<18x18x128xf32, #tpu.memory_space<vmem>>, vector<16x16x128xf32>
    tpu.vector_store %arg7[%c1, %c1_27, %c0_28], %11 {strides = array<i32>} : memref<18x18x128xf32, #tpu.memory_space<vmem>>, vector<16x16x128xf32>,
    %c0_i32 = arith.constant 0 : i32
    %c2_i32 = arith.constant 2 : i32
    %13 = arith.addi %c0_i32, %c2_i32 : i32
    %c1_i32 = arith.constant 1 : i32
    scf.for %arg9 = %c0_i32 to %13 step %c1_i32  : i32 {
      %c1_i32_34 = arith.constant 1 : i32
      %15 = arith.muli %arg9, %c1_i32_34 : i32
      %c0_i32_35 = arith.constant 0 : i32
      %16 = arith.addi %c0_i32_35, %15 : i32
      %c8_i32 = arith.constant 8 : i32
      %17 = arith.muli %16, %c8_i32 : i32
      %18 = tpu.assume_multiple %17, 8 : i32
      %cst_36 = arith.constant 0.000000e+00 : f32
      %19 = vector.broadcast %cst_36 : f32 to vector<128x128xf32>
      %c0_i32_37 = arith.constant 0 : i32
      %20 = arith.addi %18, %c0_i32_37 : i32
      %21 = arith.index_cast %20 : i32 to index
      %c0_38 = arith.constant 0 : index
      %c0_39 = arith.constant 0 : index
      %22 = vector.load %arg7[%21, %c0_38, %c0_39] : memref<18x18x128xf32, #tpu.memory_space<vmem>>, vector<8x18x128xf32>
      %23 = vector.extract_strided_slice %22 {offsets = [0, 0, 0], sizes = [8, 16, 128], strides = [1, 1, 1]} : vector<8x18x128xf32> to vector<8x16x128xf32>
      %24 = vector.shape_cast %23 : vector<8x16x128xf32> to vector<128x128xf32>
      %c0_40 = arith.constant 0 : index
      %c0_41 = arith.constant 0 : index
      %c0_42 = arith.constant 0 : index
      %c0_43 = arith.constant 0 : index
      %25 = vector.load %arg2[%c0_40, %c0_41, %c0_42, %c0_43] : memref<3x3x128x128xf32, #tpu.memory_space<vmem>>, vector<1x1x128x128xf32>
      %26 = vector.shape_cast %25 : vector<1x1x128x128xf32> to vector<128x128xf32>
      %cst_44 = arith.constant dense<0.000000e+00> : vector<128x128xf32>
      %27 = tpu.matmul %24, %26, %cst_44 {dimension_numbers = #tpu.dot_dimension_numbers<[1], [0], [0], [1], [0, 0, 1, 1], [], []>} : vector<128x128xf32>, vector<128x128xf32>, vector<128x128xf32> -> vector<128x128xf32>
      %28 = arith.addf %19, %27 : vector<128x128xf32>
      %29 = vector.extract_strided_slice %22 {offsets = [0, 1, 0], sizes = [8, 16, 128], strides = [1, 1, 1]} : vector<8x18x128xf32> to vector<8x16x128xf32>
      %30 = vector.shape_cast %29 : vector<8x16x128xf32> to vector<128x128xf32>
      %c0_45 = arith.constant 0 : index
      %c1_46 = arith.constant 1 : index
      %c0_47 = arith.constant 0 : index
      %c0_48 = arith.constant 0 : index
      %31 = vector.load %arg2[%c0_45, %c1_46, %c0_47, %c0_48] : memref<3x3x128x128xf32, #tpu.memory_space<vmem>>, vector<1x1x128x128xf32>
      %32 = vector.shape_cast %31 : vector<1x1x128x128xf32> to vector<128x128xf32>
      %cst_49 = arith.constant dense<0.000000e+00> : vector<128x128xf32>
      %33 = tpu.matmul %30, %32, %cst_49 {dimension_numbers = #tpu.dot_dimension_numbers<[1], [0], [0], [1], [0, 0, 1, 1], [], []>} : vector<128x128xf32>, vector<128x128xf32>, vector<128x128xf32> -> vector<128x128xf32>
      %34 = arith.addf %28, %33 : vector<128x128xf32>
      %35 = vector.extract_strided_slice %22 {offsets = [0, 2, 0], sizes = [8, 16, 128], strides = [1, 1, 1]} : vector<8x18x128xf32> to vector<8x16x128xf32>
      %36 = vector.shape_cast %35 : vector<8x16x128xf32> to vector<128x128xf32>
      %c0_50 = arith.constant 0 : index
      %c2 = arith.constant 2 : index
      %c0_51 = arith.constant 0 : index
      %c0_52 = arith.constant 0 : index
      %37 = vector.load %arg2[%c0_50, %c2, %c0_51, %c0_52] : memref<3x3x128x128xf32, #tpu.memory_space<vmem>>, vector<1x1x128x128xf32>
      %38 = vector.shape_cast %37 : vector<1x1x128x128xf32> to vector<128x128xf32>
      %cst_53 = arith.constant dense<0.000000e+00> : vector<128x128xf32>
      %39 = tpu.matmul %36, %38, %cst_53 {dimension_numbers = #tpu.dot_dimension_numbers<[1], [0], [0], [1], [0, 0, 1, 1], [], []>} : vector<128x128xf32>, vector<128x128xf32>, vector<128x128xf32> -> vector<128x128xf32>
      %40 = arith.addf %34, %39 : vector<128x128xf32>
      %c1_i32_54 = arith.constant 1 : i32
      %41 = arith.addi %18, %c1_i32_54 : i32
      %42 = arith.index_cast %41 : i32 to index
      %c0_55 = arith.constant 0 : index
      %c0_56 = arith.constant 0 : index
      %43 = vector.load %arg7[%42, %c0_55, %c0_56] : memref<18x18x128xf32, #tpu.memory_space<vmem>>, vector<8x18x128xf32>
      %44 = vector.extract_strided_slice %43 {offsets = [0, 0, 0], sizes = [8, 16, 128], strides = [1, 1, 1]} : vector<8x18x128xf32> to vector<8x16x128xf32>
      %45 = vector.shape_cast %44 : vector<8x16x128xf32> to vector<128x128xf32>
      %c1_57 = arith.constant 1 : index
      %c0_58 = arith.constant 0 : index
      %c0_59 = arith.constant 0 : index
      %c0_60 = arith.constant 0 : index
      %46 = vector.load %arg2[%c1_57, %c0_58, %c0_59, %c0_60] : memref<3x3x128x128xf32, #tpu.memory_space<vmem>>, vector<1x1x128x128xf32>
      %47 = vector.shape_cast %46 : vector<1x1x128x128xf32> to vector<128x128xf32>
      %cst_61 = arith.constant dense<0.000000e+00> : vector<128x128xf32>
      %48 = tpu.matmul %45, %47, %cst_61 {dimension_numbers = #tpu.dot_dimension_numbers<[1], [0], [0], [1], [0, 0, 1, 1], [], []>} : vector<128x128xf32>, vector<128x128xf32>, vector<128x128xf32> -> vector<128x128xf32>
      %49 = arith.addf %40, %48 : vector<128x128xf32>
      %50 = vector.extract_strided_slice %43 {offsets = [0, 1, 0], sizes = [8, 16, 128], strides = [1, 1, 1]} : vector<8x18x128xf32> to vector<8x16x128xf32>
      %51 = vector.shape_cast %50 : vector<8x16x128xf32> to vector<128x128xf32>
      %c1_62 = arith.constant 1 : index
      %c1_63 = arith.constant 1 : index
      %c0_64 = arith.constant 0 : index
      %c0_65 = arith.constant 0 : index
      %52 = vector.load %arg2[%c1_62, %c1_63, %c0_64, %c0_65] : memref<3x3x128x128xf32, #tpu.memory_space<vmem>>, vector<1x1x128x128xf32>
      %53 = vector.shape_cast %52 : vector<1x1x128x128xf32> to vector<128x128xf32>
      %cst_66 = arith.constant dense<0.000000e+00> : vector<128x128xf32>
      %54 = tpu.matmul %51, %53, %cst_66 {dimension_numbers = #tpu.dot_dimension_numbers<[1], [0], [0], [1], [0, 0, 1, 1], [], []>} : vector<128x128xf32>, vector<128x128xf32>, vector<128x128xf32> -> vector<128x128xf32>
      %55 = arith.addf %49, %54 : vector<128x128xf32>
      %56 = vector.extract_strided_slice %43 {offsets = [0, 2, 0], sizes = [8, 16, 128], strides = [1, 1, 1]} : vector<8x18x128xf32> to vector<8x16x128xf32>
      %57 = vector.shape_cast %56 : vector<8x16x128xf32> to vector<128x128xf32>
      %c1_67 = arith.constant 1 : index
      %c2_68 = arith.constant 2 : index
      %c0_69 = arith.constant 0 : index
      %c0_70 = arith.constant 0 : index
      %58 = vector.load %arg2[%c1_67, %c2_68, %c0_69, %c0_70] : memref<3x3x128x128xf32, #tpu.memory_space<vmem>>, vector<1x1x128x128xf32>
      %59 = vector.shape_cast %58 : vector<1x1x128x128xf32> to vector<128x128xf32>
      %cst_71 = arith.constant dense<0.000000e+00> : vector<128x128xf32>
      %60 = tpu.matmul %57, %59, %cst_71 {dimension_numbers = #tpu.dot_dimension_numbers<[1], [0], [0], [1], [0, 0, 1, 1], [], []>} : vector<128x128xf32>, vector<128x128xf32>, vector<128x128xf32> -> vector<128x128xf32>
      %61 = arith.addf %55, %60 : vector<128x128xf32>
      %c2_i32_72 = arith.constant 2 : i32
      %62 = arith.addi %18, %c2_i32_72 : i32
      %63 = arith.index_cast %62 : i32 to index
      %c0_73 = arith.constant 0 : index
      %c0_74 = arith.constant 0 : index
      %64 = vector.load %arg7[%63, %c0_73, %c0_74] : memref<18x18x128xf32, #tpu.memory_space<vmem>>, vector<8x18x128xf32>
      %65 = vector.extract_strided_slice %64 {offsets = [0, 0, 0], sizes = [8, 16, 128], strides = [1, 1, 1]} : vector<8x18x128xf32> to vector<8x16x128xf32>
      %66 = vector.shape_cast %65 : vector<8x16x128xf32> to vector<128x128xf32>
      %c2_75 = arith.constant 2 : index
      %c0_76 = arith.constant 0 : index
      %c0_77 = arith.constant 0 : index
      %c0_78 = arith.constant 0 : index
      %67 = vector.load %arg2[%c2_75, %c0_76, %c0_77, %c0_78] : memref<3x3x128x128xf32, #tpu.memory_space<vmem>>, vector<1x1x128x128xf32>
      %68 = vector.shape_cast %67 : vector<1x1x128x128xf32> to vector<128x128xf32>
      %cst_79 = arith.constant dense<0.000000e+00> : vector<128x128xf32>
      %69 = tpu.matmul %66, %68, %cst_79 {dimension_numbers = #tpu.dot_dimension_numbers<[1], [0], [0], [1], [0, 0, 1, 1], [], []>} : vector<128x128xf32>, vector<128x128xf32>, vector<128x128xf32> -> vector<128x128xf32>
      %70 = arith.addf %61, %69 : vector<128x128xf32>
      %71 = vector.extract_strided_slice %64 {offsets = [0, 1, 0], sizes = [8, 16, 128], strides = [1, 1, 1]} : vector<8x18x128xf32> to vector<8x16x128xf32>
      %72 = vector.shape_cast %71 : vector<8x16x128xf32> to vector<128x128xf32>
      %c2_80 = arith.constant 2 : index
      %c1_81 = arith.constant 1 : index
      %c0_82 = arith.constant 0 : index
      %c0_83 = arith.constant 0 : index
      %73 = vector.load %arg2[%c2_80, %c1_81, %c0_82, %c0_83] : memref<3x3x128x128xf32, #tpu.memory_space<vmem>>, vector<1x1x128x128xf32>
      %74 = vector.shape_cast %73 : vector<1x1x128x128xf32> to vector<128x128xf32>
      %cst_84 = arith.constant dense<0.000000e+00> : vector<128x128xf32>
      %75 = tpu.matmul %72, %74, %cst_84 {dimension_numbers = #tpu.dot_dimension_numbers<[1], [0], [0], [1], [0, 0, 1, 1], [], []>} : vector<128x128xf32>, vector<128x128xf32>, vector<128x128xf32> -> vector<128x128xf32>
      %76 = arith.addf %70, %75 : vector<128x128xf32>
      %77 = vector.extract_strided_slice %64 {offsets = [0, 2, 0], sizes = [8, 16, 128], strides = [1, 1, 1]} : vector<8x18x128xf32> to vector<8x16x128xf32>
      %78 = vector.shape_cast %77 : vector<8x16x128xf32> to vector<128x128xf32>
      %c2_85 = arith.constant 2 : index
      %c2_86 = arith.constant 2 : index
      %c0_87 = arith.constant 0 : index
      %c0_88 = arith.constant 0 : index
      %79 = vector.load %arg2[%c2_85, %c2_86, %c0_87, %c0_88] : memref<3x3x128x128xf32, #tpu.memory_space<vmem>>, vector<1x1x128x128xf32>
      %80 = vector.shape_cast %79 : vector<1x1x128x128xf32> to vector<128x128xf32>
      %cst_89 = arith.constant dense<0.000000e+00> : vector<128x128xf32>
      %81 = tpu.matmul %78, %80, %cst_89 {dimension_numbers = #tpu.dot_dimension_numbers<[1], [0], [0], [1], [0, 0, 1, 1], [], []>} : vector<128x128xf32>, vector<128x128xf32>, vector<128x128xf32> -> vector<128x128xf32>
      %82 = arith.addf %76, %81 : vector<128x128xf32>
      %c0_90 = arith.constant 0 : index
      %c0_91 = arith.constant 0 : index
      %83 = vector.load %arg3[%c0_90, %c0_91] : memref<1x128xf32, #tpu.memory_space<vmem>>, vector<1x128xf32>
      %84 = vector.broadcast %83 : vector<1x128xf32> to vector<128x128xf32>
      %85 = arith.addf %82, %84 : vector<128x128xf32>
      %cst_92 = arith.constant 0.000000e+00 : f32
      %86 = vector.broadcast %cst_92 : f32 to vector<128x128xf32>
      %87 = arith.maximumf %85, %86 : vector<128x128xf32>
      %88 = vector.shape_cast %87 : vector<128x128xf32> to vector<8x16x128xf32>
      %c1_i32_93 = arith.constant 1 : i32
      %89 = arith.addi %18, %c1_i32_93 : i32
      %90 = arith.index_cast %89 : i32 to index
      %c1_94 = arith.constant 1 : index
      %c0_95 = arith.constant 0 : index
      %91 = vector.load %arg8[%90, %c1_94, %c0_95] : memref<18x18x128xf32, #tpu.memory_space<vmem>>, vector<8x16x128xf32>
      tpu.vector_store %arg8[%90, %c1_94, %c0_95], %88 {strides = array<i32>} : memref<18x18x128xf32, #tpu.memory_space<vmem>>, vector<8x16x128xf32>,
    }
    %c2_i32_29 = arith.constant 2 : i32
    %c0_i32_30 = arith.constant 0 : i32
    %c2_i32_31 = arith.constant 2 : i32
    %14 = arith.addi %c0_i32_30, %c2_i32_31 : i32
    %c1_i32_32 = arith.constant 1 : i32
    scf.for %arg9 = %c0_i32_30 to %14 step %c1_i32_32  : i32 {
      %c1_i32_34 = arith.constant 1 : i32
      %15 = arith.muli %arg9, %c1_i32_34 : i32
      %c0_i32_35 = arith.constant 0 : i32
      %16 = arith.addi %c0_i32_35, %15 : i32
      %c8_i32 = arith.constant 8 : i32
      %17 = arith.muli %16, %c8_i32 : i32
      %18 = tpu.assume_multiple %17, 8 : i32
      %cst_36 = arith.constant 0.000000e+00 : f32
      %19 = vector.broadcast %cst_36 : f32 to vector<128x128xf32>
      %c0_i32_37 = arith.constant 0 : i32
      %20 = arith.addi %18, %c0_i32_37 : i32
      %21 = arith.index_cast %20 : i32 to index
      %c0_38 = arith.constant 0 : index
      %c0_39 = arith.constant 0 : index
      %22 = vector.load %arg8[%21, %c0_38, %c0_39] : memref<18x18x128xf32, #tpu.memory_space<vmem>>, vector<8x18x128xf32>
      %23 = vector.extract_strided_slice %22 {offsets = [0, 0, 0], sizes = [8, 16, 128], strides = [1, 1, 1]} : vector<8x18x128xf32> to vector<8x16x128xf32>
      %24 = vector.shape_cast %23 : vector<8x16x128xf32> to vector<128x128xf32>
      %c0_40 = arith.constant 0 : index
      %c0_41 = arith.constant 0 : index
      %c0_42 = arith.constant 0 : index
      %c0_43 = arith.constant 0 : index
      %25 = vector.load %arg4[%c0_40, %c0_41, %c0_42, %c0_43] : memref<3x3x128x128xf32, #tpu.memory_space<vmem>>, vector<1x1x128x128xf32>
      %26 = vector.shape_cast %25 : vector<1x1x128x128xf32> to vector<128x128xf32>
      %cst_44 = arith.constant dense<0.000000e+00> : vector<128x128xf32>
      %27 = tpu.matmul %24, %26, %cst_44 {dimension_numbers = #tpu.dot_dimension_numbers<[1], [0], [0], [1], [0, 0, 1, 1], [], []>} : vector<128x128xf32>, vector<128x128xf32>, vector<128x128xf32> -> vector<128x128xf32>
      %28 = arith.addf %19, %27 : vector<128x128xf32>
      %29 = vector.extract_strided_slice %22 {offsets = [0, 1, 0], sizes = [8, 16, 128], strides = [1, 1, 1]} : vector<8x18x128xf32> to vector<8x16x128xf32>
      %30 = vector.shape_cast %29 : vector<8x16x128xf32> to vector<128x128xf32>
      %c0_45 = arith.constant 0 : index
      %c1_46 = arith.constant 1 : index
      %c0_47 = arith.constant 0 : index
      %c0_48 = arith.constant 0 : index
      %31 = vector.load %arg4[%c0_45, %c1_46, %c0_47, %c0_48] : memref<3x3x128x128xf32, #tpu.memory_space<vmem>>, vector<1x1x128x128xf32>
      %32 = vector.shape_cast %31 : vector<1x1x128x128xf32> to vector<128x128xf32>
      %cst_49 = arith.constant dense<0.000000e+00> : vector<128x128xf32>
      %33 = tpu.matmul %30, %32, %cst_49 {dimension_numbers = #tpu.dot_dimension_numbers<[1], [0], [0], [1], [0, 0, 1, 1], [], []>} : vector<128x128xf32>, vector<128x128xf32>, vector<128x128xf32> -> vector<128x128xf32>
      %34 = arith.addf %28, %33 : vector<128x128xf32>
      %35 = vector.extract_strided_slice %22 {offsets = [0, 2, 0], sizes = [8, 16, 128], strides = [1, 1, 1]} : vector<8x18x128xf32> to vector<8x16x128xf32>
      %36 = vector.shape_cast %35 : vector<8x16x128xf32> to vector<128x128xf32>
      %c0_50 = arith.constant 0 : index
      %c2 = arith.constant 2 : index
      %c0_51 = arith.constant 0 : index
      %c0_52 = arith.constant 0 : index
      %37 = vector.load %arg4[%c0_50, %c2, %c0_51, %c0_52] : memref<3x3x128x128xf32, #tpu.memory_space<vmem>>, vector<1x1x128x128xf32>
      %38 = vector.shape_cast %37 : vector<1x1x128x128xf32> to vector<128x128xf32>
      %cst_53 = arith.constant dense<0.000000e+00> : vector<128x128xf32>
      %39 = tpu.matmul %36, %38, %cst_53 {dimension_numbers = #tpu.dot_dimension_numbers<[1], [0], [0], [1], [0, 0, 1, 1], [], []>} : vector<128x128xf32>, vector<128x128xf32>, vector<128x128xf32> -> vector<128x128xf32>
      %40 = arith.addf %34, %39 : vector<128x128xf32>
      %c1_i32_54 = arith.constant 1 : i32
      %41 = arith.addi %18, %c1_i32_54 : i32
      %42 = arith.index_cast %41 : i32 to index
      %c0_55 = arith.constant 0 : index
      %c0_56 = arith.constant 0 : index
      %43 = vector.load %arg8[%42, %c0_55, %c0_56] : memref<18x18x128xf32, #tpu.memory_space<vmem>>, vector<8x18x128xf32>
      %44 = vector.extract_strided_slice %43 {offsets = [0, 0, 0], sizes = [8, 16, 128], strides = [1, 1, 1]} : vector<8x18x128xf32> to vector<8x16x128xf32>
      %45 = vector.shape_cast %44 : vector<8x16x128xf32> to vector<128x128xf32>
      %c1_57 = arith.constant 1 : index
      %c0_58 = arith.constant 0 : index
      %c0_59 = arith.constant 0 : index
      %c0_60 = arith.constant 0 : index
      %46 = vector.load %arg4[%c1_57, %c0_58, %c0_59, %c0_60] : memref<3x3x128x128xf32, #tpu.memory_space<vmem>>, vector<1x1x128x128xf32>
      %47 = vector.shape_cast %46 : vector<1x1x128x128xf32> to vector<128x128xf32>
      %cst_61 = arith.constant dense<0.000000e+00> : vector<128x128xf32>
      %48 = tpu.matmul %45, %47, %cst_61 {dimension_numbers = #tpu.dot_dimension_numbers<[1], [0], [0], [1], [0, 0, 1, 1], [], []>} : vector<128x128xf32>, vector<128x128xf32>, vector<128x128xf32> -> vector<128x128xf32>
      %49 = arith.addf %40, %48 : vector<128x128xf32>
      %50 = vector.extract_strided_slice %43 {offsets = [0, 1, 0], sizes = [8, 16, 128], strides = [1, 1, 1]} : vector<8x18x128xf32> to vector<8x16x128xf32>
      %51 = vector.shape_cast %50 : vector<8x16x128xf32> to vector<128x128xf32>
      %c1_62 = arith.constant 1 : index
      %c1_63 = arith.constant 1 : index
      %c0_64 = arith.constant 0 : index
      %c0_65 = arith.constant 0 : index
      %52 = vector.load %arg4[%c1_62, %c1_63, %c0_64, %c0_65] : memref<3x3x128x128xf32, #tpu.memory_space<vmem>>, vector<1x1x128x128xf32>
      %53 = vector.shape_cast %52 : vector<1x1x128x128xf32> to vector<128x128xf32>
      %cst_66 = arith.constant dense<0.000000e+00> : vector<128x128xf32>
      %54 = tpu.matmul %51, %53, %cst_66 {dimension_numbers = #tpu.dot_dimension_numbers<[1], [0], [0], [1], [0, 0, 1, 1], [], []>} : vector<128x128xf32>, vector<128x128xf32>, vector<128x128xf32> -> vector<128x128xf32>
      %55 = arith.addf %49, %54 : vector<128x128xf32>
      %56 = vector.extract_strided_slice %43 {offsets = [0, 2, 0], sizes = [8, 16, 128], strides = [1, 1, 1]} : vector<8x18x128xf32> to vector<8x16x128xf32>
      %57 = vector.shape_cast %56 : vector<8x16x128xf32> to vector<128x128xf32>
      %c1_67 = arith.constant 1 : index
      %c2_68 = arith.constant 2 : index
      %c0_69 = arith.constant 0 : index
      %c0_70 = arith.constant 0 : index
      %58 = vector.load %arg4[%c1_67, %c2_68, %c0_69, %c0_70] : memref<3x3x128x128xf32, #tpu.memory_space<vmem>>, vector<1x1x128x128xf32>
      %59 = vector.shape_cast %58 : vector<1x1x128x128xf32> to vector<128x128xf32>
      %cst_71 = arith.constant dense<0.000000e+00> : vector<128x128xf32>
      %60 = tpu.matmul %57, %59, %cst_71 {dimension_numbers = #tpu.dot_dimension_numbers<[1], [0], [0], [1], [0, 0, 1, 1], [], []>} : vector<128x128xf32>, vector<128x128xf32>, vector<128x128xf32> -> vector<128x128xf32>
      %61 = arith.addf %55, %60 : vector<128x128xf32>
      %c2_i32_72 = arith.constant 2 : i32
      %62 = arith.addi %18, %c2_i32_72 : i32
      %63 = arith.index_cast %62 : i32 to index
      %c0_73 = arith.constant 0 : index
      %c0_74 = arith.constant 0 : index
      %64 = vector.load %arg8[%63, %c0_73, %c0_74] : memref<18x18x128xf32, #tpu.memory_space<vmem>>, vector<8x18x128xf32>
      %65 = vector.extract_strided_slice %64 {offsets = [0, 0, 0], sizes = [8, 16, 128], strides = [1, 1, 1]} : vector<8x18x128xf32> to vector<8x16x128xf32>
      %66 = vector.shape_cast %65 : vector<8x16x128xf32> to vector<128x128xf32>
      %c2_75 = arith.constant 2 : index
      %c0_76 = arith.constant 0 : index
      %c0_77 = arith.constant 0 : index
      %c0_78 = arith.constant 0 : index
      %67 = vector.load %arg4[%c2_75, %c0_76, %c0_77, %c0_78] : memref<3x3x128x128xf32, #tpu.memory_space<vmem>>, vector<1x1x128x128xf32>
      %68 = vector.shape_cast %67 : vector<1x1x128x128xf32> to vector<128x128xf32>
      %cst_79 = arith.constant dense<0.000000e+00> : vector<128x128xf32>
      %69 = tpu.matmul %66, %68, %cst_79 {dimension_numbers = #tpu.dot_dimension_numbers<[1], [0], [0], [1], [0, 0, 1, 1], [], []>} : vector<128x128xf32>, vector<128x128xf32>, vector<128x128xf32> -> vector<128x128xf32>
      %70 = arith.addf %61, %69 : vector<128x128xf32>
      %71 = vector.extract_strided_slice %64 {offsets = [0, 1, 0], sizes = [8, 16, 128], strides = [1, 1, 1]} : vector<8x18x128xf32> to vector<8x16x128xf32>
      %72 = vector.shape_cast %71 : vector<8x16x128xf32> to vector<128x128xf32>
      %c2_80 = arith.constant 2 : index
      %c1_81 = arith.constant 1 : index
      %c0_82 = arith.constant 0 : index
      %c0_83 = arith.constant 0 : index
      %73 = vector.load %arg4[%c2_80, %c1_81, %c0_82, %c0_83] : memref<3x3x128x128xf32, #tpu.memory_space<vmem>>, vector<1x1x128x128xf32>
      %74 = vector.shape_cast %73 : vector<1x1x128x128xf32> to vector<128x128xf32>
      %cst_84 = arith.constant dense<0.000000e+00> : vector<128x128xf32>
      %75 = tpu.matmul %72, %74, %cst_84 {dimension_numbers = #tpu.dot_dimension_numbers<[1], [0], [0], [1], [0, 0, 1, 1], [], []>} : vector<128x128xf32>, vector<128x128xf32>, vector<128x128xf32> -> vector<128x128xf32>
      %76 = arith.addf %70, %75 : vector<128x128xf32>
      %77 = vector.extract_strided_slice %64 {offsets = [0, 2, 0], sizes = [8, 16, 128], strides = [1, 1, 1]} : vector<8x18x128xf32> to vector<8x16x128xf32>
      %78 = vector.shape_cast %77 : vector<8x16x128xf32> to vector<128x128xf32>
      %c2_85 = arith.constant 2 : index
      %c2_86 = arith.constant 2 : index
      %c0_87 = arith.constant 0 : index
      %c0_88 = arith.constant 0 : index
      %79 = vector.load %arg4[%c2_85, %c2_86, %c0_87, %c0_88] : memref<3x3x128x128xf32, #tpu.memory_space<vmem>>, vector<1x1x128x128xf32>
      %80 = vector.shape_cast %79 : vector<1x1x128x128xf32> to vector<128x128xf32>
      %cst_89 = arith.constant dense<0.000000e+00> : vector<128x128xf32>
      %81 = tpu.matmul %78, %80, %cst_89 {dimension_numbers = #tpu.dot_dimension_numbers<[1], [0], [0], [1], [0, 0, 1, 1], [], []>} : vector<128x128xf32>, vector<128x128xf32>, vector<128x128xf32> -> vector<128x128xf32>
      %82 = arith.addf %76, %81 : vector<128x128xf32>
      %c0_90 = arith.constant 0 : index
      %c0_91 = arith.constant 0 : index
      %83 = vector.load %arg5[%c0_90, %c0_91] : memref<1x128xf32, #tpu.memory_space<vmem>>, vector<1x128xf32>
      %84 = vector.broadcast %83 : vector<1x128xf32> to vector<128x128xf32>
      %85 = arith.addf %82, %84 : vector<128x128xf32>
      %86 = vector.shape_cast %85 : vector<128x128xf32> to vector<8x16x128xf32>
      %c0_92 = arith.constant 0 : index
      %87 = arith.index_cast %18 : i32 to index
      %c0_93 = arith.constant 0 : index
      %c0_94 = arith.constant 0 : index
      %88 = vector.load %arg1[%c0_92, %87, %c0_93, %c0_94] : memref<1x16x16x128xf32, #tpu.memory_space<vmem>>, vector<1x8x16x128xf32>
      %89 = vector.shape_cast %88 : vector<1x8x16x128xf32> to vector<8x16x128xf32>
      %cst_95 = arith.constant 1.000000e-01 : f32
      %90 = vector.broadcast %cst_95 : f32 to vector<8x16x128xf32>
      %91 = arith.mulf %86, %90 : vector<8x16x128xf32>
      %92 = arith.addf %89, %91 : vector<8x16x128xf32>
      %c0_96 = arith.constant 0 : index
      %93 = arith.index_cast %18 : i32 to index
      %c0_97 = arith.constant 0 : index
      %c0_98 = arith.constant 0 : index
      %94 = vector.load %arg6[%c0_96, %93, %c0_97, %c0_98] : memref<1x16x16x128xf32, #tpu.memory_space<vmem>>, vector<1x8x16x128xf32>
      %95 = vector.shape_cast %94 : vector<1x8x16x128xf32> to vector<8x16x128xf32>
      %96 = vector.shape_cast %92 : vector<8x16x128xf32> to vector<1x8x16x128xf32>
      tpu.vector_store %arg6[%c0_96, %93, %c0_97, %c0_98], %96 {strides = array<i32>} : memref<1x16x16x128xf32, #tpu.memory_space<vmem>>, vector<1x8x16x128xf32>,
    }
    %c2_i32_33 = arith.constant 2 : i32
    return
  }
  func.func @transform_0(%arg0: i32) -> (i32, i32, i32, i32) {
    %c0_i32 = arith.constant 0 : i32
    %c0_i32_0 = arith.constant 0 : i32
    %c0_i32_1 = arith.constant 0 : i32
    %c0_i32_2 = arith.constant 0 : i32
    return %arg0, %c0_i32, %c0_i32_0, %c0_i32_1 : i32, i32, i32, i32
  }
  func.func @transform_1(%arg0: i32) -> (i32, i32, i32, i32) {
    %c0_i32 = arith.constant 0 : i32
    %c0_i32_0 = arith.constant 0 : i32
    %c0_i32_1 = arith.constant 0 : i32
    %c0_i32_2 = arith.constant 0 : i32
    %c0_i32_3 = arith.constant 0 : i32
    return %c0_i32, %c0_i32_0, %c0_i32_1, %c0_i32_2 : i32, i32, i32, i32
  }
  func.func @transform_2(%arg0: i32) -> (i32, i32) {
    %c0_i32 = arith.constant 0 : i32
    %c0_i32_0 = arith.constant 0 : i32
    %c0_i32_1 = arith.constant 0 : i32
    return %c0_i32, %c0_i32_0 : i32, i32
  }
  func.func @transform_3(%arg0: i32) -> (i32, i32, i32, i32) {
    %c0_i32 = arith.constant 0 : i32
    %c0_i32_0 = arith.constant 0 : i32
    %c0_i32_1 = arith.constant 0 : i32
    %c0_i32_2 = arith.constant 0 : i32
    %c0_i32_3 = arith.constant 0 : i32
    return %c0_i32, %c0_i32_0, %c0_i32_1, %c0_i32_2 : i32, i32, i32, i32
  }
  func.func @transform_4(%arg0: i32) -> (i32, i32) {
    %c0_i32 = arith.constant 0 : i32
    %c0_i32_0 = arith.constant 0 : i32
    %c0_i32_1 = arith.constant 0 : i32
    return %c0_i32, %c0_i32_0 : i32, i32
  }
  func.func @transform_5(%arg0: i32) -> (i32, i32, i32, i32) {
    %c0_i32 = arith.constant 0 : i32
    %c0_i32_0 = arith.constant 0 : i32
    %c0_i32_1 = arith.constant 0 : i32
    %c0_i32_2 = arith.constant 0 : i32
    return %arg0, %c0_i32, %c0_i32_0, %c0_i32_1 : i32, i32, i32, i32
  }
}

</mosaic_0001>

<llo_original>
// kernel: tpu_custom_call.1
$region0: #{tpu_custom_call.1}
  #allocation0 [shape = 'u32[]', space=smem, size = 0x4, offset = 0x4, fixed_abs, tag = 'smem constant byte address 0x4 - core index']
  #allocation1 [shape = 'u32[144,128]{1,0:T(1,128)}', space=vmem, size = 0x12000, scoped, tag = 'internal scratch']
  #allocation2 [shape = 'f32[18,18,128]{2,1,0:T(8,128)}', space=vmem, size = 0x36000, scoped, tag = 'scratch operand']
  #allocation3 [shape = 'f32[18,18,128]{2,1,0:T(8,128)}', space=vmem, size = 0x36000, scoped, tag = 'scratch operand']
  %s0 = inlined_call_operand.hbm [shape: f32[2,16,16,128], index: 0, kind: input, shape index: {}]
  %s1 = inlined_call_operand.hbm [shape: f32[3,3,128,128], index: 1, kind: input, shape index: {}]
  %s2 = inlined_call_operand.vmem [shape: f32[1,128], index: 2, kind: input, shape index: {}]
  %s3 = inlined_call_operand.hbm [shape: f32[3,3,128,128], index: 3, kind: input, shape index: {}]
  %s4 = inlined_call_operand.vmem [shape: f32[1,128], index: 4, kind: input, shape index: {}]
  %s5 = inlined_call_operand.hbm [shape: f32[2,16,16,128], index: 5, kind: output, shape index: {}]
  %s6 = sld [smem:[#allocation0]]
  $region79: #{tpu_custom_call.1} parent=0
    _
  %s8 = ssub.s32 1, %s6
  %s9 = scalar_select 0, %s8, %s6
  $region1: #{tpu_custom_call.1} parent=0
    #allocation4 [shape = 'u8[262144]{0}', space=vmem, size = 0x40000, scoped, tag = 'input window, operand 0']
    #allocation5 [shape = 's32[2]{0}', space=sflag, size = 0x8, scoped, tag = 'scoped memory for tpu_custom_call.1']
    #allocation6 [shape = 's32[2]{0}', space=sflag, size = 0x8, scoped, tag = 'scoped memory for tpu_custom_call.1']
    #allocation7 [shape = 'u8[589824]{0}', space=vmem, size = 0x90000, scoped, tag = 'input window, operand 1, single buffered']
    #allocation8 [shape = 's32[1]{0}', space=sflag, size = 0x4, scoped, tag = 'scoped memory for tpu_custom_call.1']
    #allocation9 [shape = 'u8[589824]{0}', space=vmem, size = 0x90000, scoped, tag = 'input window, operand 3, single buffered']
    #allocation10 [shape = 'u8[262144]{0}', space=vmem, size = 0x40000, scoped, tag = 'output window, operand 0']
    %10 = vsyncpa [#allocation5], 0
    %s11 = scalar_lea.sflag [#allocation5], 1
    %12 = vsyncpa %s11, 0
    %13 = vsyncpa [#allocation8], 0
    %14 = vsyncpa [#allocation6], 0
    %s15 = scalar_lea.sflag [#allocation6], 1
    %16 = vsyncpa %s15, 0
    loop: start=0, step=1, limit=4
    $region2: #{tpu_custom_call.1} parent=1 // loop_pre_header
      _
    $region3: #{tpu_custom_call.1} parent=1 // loop_header
      %s18 = sphi 0, %s22
      %p19 = scmp.ge.s32.totalorder %s18, 4
      %s28 = sphi 0, %s30
      %s31 = sphi 0, %s28
      %s32 = sphi 0, %s31
      %s48 = sphi 0, %s32
      %s52 = sphi 0, %s52
      %s54 = sphi 0, %s52
      %s55 = sphi 0, %s54
      %s69 = sphi 0, %s55
      %s73 = sphi 0, %s73
      %s75 = sphi 0, %s73
      %s76 = sphi 0, %s75
      %s90 = sphi 0, %s76
      %s94 = sphi 0, %s94
      %s96 = sphi 0, %s94
      %s97 = sphi 0, %s96
      %s111 = sphi 0, %s97
      %s115 = sphi 0, %s115
      %s117 = sphi 0, %s115
      %s118 = sphi 0, %s117
      %s132 = sphi 0, %s118
      %s138 = sphi 0, %s140
      %s141 = sphi 0, %s138
      %s142 = sphi 0, %s141
      %s158 = sphi 0, %s142
    $region4: #{tpu_custom_call.1} parent=1 // loop_header_branch
      %21 = sbr.rel (%p19) target = $region8
    $region5: #{tpu_custom_call.1} parent=1 // loop_body
      %s23 = ssub.s32 %s18, 1
      %s24 = ssub.s32 %s18, 2
      %s25 = sadd.s32 %s18, 1
      %s26 = ssub.s32 %s18, %s25
      %p27 = scmp.eq.s32.totalorder %s26, 0
      %s29 = sadd.s32 %s28, 1
      %s30 = scalar_select %p27, %s28, %s29
      %p33 = pneg %p27
      %p34 = scmp.eq.s32.totalorder %s18, 1
      %p35 = por %p33, %p34
      %p36 = scmp.ne.s32.totalorder %s28, %s31
      %p37 = scmp.eq.s32.totalorder %s18, 0
      %p38 = por %p36, %p37
      %p39 = scmp.ne.s32.totalorder %s28, %s31
      %p40 = scmp.eq.s32.totalorder %s23, 1
      %p41 = por %p39, %p40
      %p42 = scmp.ne.s32.totalorder %s31, %s32
      %p43 = scmp.eq.s32.totalorder %s23, 0
      %p44 = por %p42, %p43
      %p45 = scmp.ne.s32.totalorder %s31, %s32
      %p46 = scmp.eq.s32.totalorder %s24, 1
      %p47 = por %p45, %p46
      %p49 = scmp.ne.s32.totalorder %s32, %s48
      %p50 = scmp.eq.s32.totalorder %s24, 0
      %p51 = por %p49, %p50
      %s53 = sadd.s32 %s52, 1
      %p56 = scmp.eq.s32.totalorder %s18, 1
      %p57 = scmp.ne.s32.totalorder %s52, %s54
      %p58 = scmp.eq.s32.totalorder %s18, 0
      %p59 = por %p57, %p58
      %p60 = scmp.ne.s32.totalorder %s52, %s54
      %p61 = scmp.eq.s32.totalorder %s23, 1
      %p62 = por %p60, %p61
      %p63 = scmp.ne.s32.totalorder %s54, %s55
      %p64 = scmp.eq.s32.totalorder %s23, 0
      %p65 = por %p63, %p64
      %p66 = scmp.ne.s32.totalorder %s54, %s55
      %p67 = scmp.eq.s32.totalorder %s24, 1
      %p68 = por %p66, %p67
      %p70 = scmp.ne.s32.totalorder %s55, %s69
      %p71 = scmp.eq.s32.totalorder %s24, 0
      %p72 = por %p70, %p71
      %s74 = sadd.s32 %s73, 1
      %p77 = scmp.eq.s32.totalorder %s18, 1
      %p78 = scmp.ne.s32.totalorder %s73, %s75
      %p79 = scmp.eq.s32.totalorder %s18, 0
      %p80 = por %p78, %p79
      %p81 = scmp.ne.s32.totalorder %s73, %s75
      %p82 = scmp.eq.s32.totalorder %s23, 1
      %p83 = por %p81, %p82
      %p84 = scmp.ne.s32.totalorder %s75, %s76
      %p85 = scmp.eq.s32.totalorder %s23, 0
      %p86 = por %p84, %p85
      %p87 = scmp.ne.s32.totalorder %s75, %s76
      %p88 = scmp.eq.s32.totalorder %s24, 1
      %p89 = por %p87, %p88
      %p91 = scmp.ne.s32.totalorder %s76, %s90
      %p92 = scmp.eq.s32.totalorder %s24, 0
      %p93 = por %p91, %p92
      %s95 = sadd.s32 %s94, 1
      %p98 = scmp.eq.s32.totalorder %s18, 1
      %p99 = scmp.ne.s32.totalorder %s94, %s96
      %p100 = scmp.eq.s32.totalorder %s18, 0
      %p101 = por %p99, %p100
      %p102 = scmp.ne.s32.totalorder %s94, %s96
      %p103 = scmp.eq.s32.totalorder %s23, 1
      %p104 = por %p102, %p103
      %p105 = scmp.ne.s32.totalorder %s96, %s97
      %p106 = scmp.eq.s32.totalorder %s23, 0
      %p107 = por %p105, %p106
      %p108 = scmp.ne.s32.totalorder %s96, %s97
      %p109 = scmp.eq.s32.totalorder %s24, 1
      %p110 = por %p108, %p109
      %p112 = scmp.ne.s32.totalorder %s97, %s111
      %p113 = scmp.eq.s32.totalorder %s24, 0
      %p114 = por %p112, %p113
      %s116 = sadd.s32 %s115, 1
      %p119 = scmp.eq.s32.totalorder %s18, 1
      %p120 = scmp.ne.s32.totalorder %s115, %s117
      %p121 = scmp.eq.s32.totalorder %s18, 0
      %p122 = por %p120, %p121
      %p123 = scmp.ne.s32.totalorder %s115, %s117
      %p124 = scmp.eq.s32.totalorder %s23, 1
      %p125 = por %p123, %p124
      %p126 = scmp.ne.s32.totalorder %s117, %s118
      %p127 = scmp.eq.s32.totalorder %s23, 0
      %p128 = por %p126, %p127
      %p129 = scmp.ne.s32.totalorder %s117, %s118
      %p130 = scmp.eq.s32.totalorder %s24, 1
      %p131 = por %p129, %p130
      %p133 = scmp.ne.s32.totalorder %s118, %s132
      %p134 = scmp.eq.s32.totalorder %s24, 0
      %p135 = por %p133, %p134
      %s136 = ssub.s32 %s18, %s25
      %p137 = scmp.eq.s32.totalorder %s136, 0
      %s139 = sadd.s32 %s138, 1
      %s140 = scalar_select %p137, %s138, %s139
      %p143 = pneg %p137
      %p144 = scmp.eq.s32.totalorder %s18, 1
      %p145 = por %p143, %p144
      %p146 = scmp.ne.s32.totalorder %s138, %s141
      %p147 = scmp.eq.s32.totalorder %s18, 0
      %p148 = por %p146, %p147
      %p149 = scmp.ne.s32.totalorder %s138, %s141
      %p150 = scmp.eq.s32.totalorder %s23, 1
      %p151 = por %p149, %p150
      %p152 = scmp.ne.s32.totalorder %s141, %s142
      %p153 = scmp.eq.s32.totalorder %s23, 0
      %p154 = por %p152, %p153
      %p155 = scmp.ne.s32.totalorder %s141, %s142
      %p156 = scmp.eq.s32.totalorder %s24, 1
      %p157 = por %p155, %p156
      %p159 = scmp.ne.s32.totalorder %s142, %s158
      %p160 = scmp.eq.s32.totalorder %s24, 0
      %p161 = por %p159, %p160
      %p162 = scmp.le.s32.totalorder 1, %s18
      %p163 = scmp.lt.s32.totalorder %s18, 3
      %p164 = pnand %p162, %p163
      %p165 = pneg %p164
      // Predicated region
      $region9: #{tpu_custom_call.1} parent=5 // pred_check
        _
      $region10: #{tpu_custom_call.1} parent=5 // pred_check_branch
        %167 = sbr.rel (%p164) target = $region12
      $region11: #{tpu_custom_call.1} parent=5 // pred_region
        %s168 = ssub.s32 %s18, 1
        // Predicated region
        $region13: #{tpu_custom_call.1} parent=11 // pred_check
          %p169 = pneg %p65
        $region14: #{tpu_custom_call.1} parent=11 // pred_check_branch
          %171 = sbr.rel (%p169) target = $region16
        $region15: #{tpu_custom_call.1} parent=11 // pred_region
          %s173 = ssub.s32 18432, 18432
          %174 = vsyncadd [#allocation8], %s173
          %s175 = sshll.u32 [#allocation7], 4
          %s176 = int_to_ptr.vmem [resolvable:$true] %s175
          %181 = dma.hbm_to_vmem [thread:$0]  %s1, 18432, %s176, [#allocation8], 128, 128, 8
        $region16: #{tpu_custom_call.1} parent=11 // pred_fallthru
          _
        // Predicated region
        $region17: #{tpu_custom_call.1} parent=11 // pred_check
          %p182 = pneg %p86
        $region18: #{tpu_custom_call.1} parent=11 // pred_check_branch
          %184 = sbr.rel (%p182) target = $region20
        $region19: #{tpu_custom_call.1} parent=11 // pred_region
          _
        $region20: #{tpu_custom_call.1} parent=11 // pred_fallthru
          _
        // Predicated region
        $region21: #{tpu_custom_call.1} parent=11 // pred_check
          %p185 = pneg %p107
        $region22: #{tpu_custom_call.1} parent=11 // pred_check_branch
          %187 = sbr.rel (%p185) target = $region24
        $region23: #{tpu_custom_call.1} parent=11 // pred_region
          %s189 = ssub.s32 18432, 18432
          %190 = vsyncadd [#allocation8], %s189
          %s191 = sshll.u32 [#allocation9], 4
          %s192 = int_to_ptr.vmem [resolvable:$true] %s191
          %197 = dma.hbm_to_vmem [thread:$0]  %s3, 18432, %s192, [#allocation8], 128, 128, 8
        $region24: #{tpu_custom_call.1} parent=11 // pred_fallthru
          _
        // Predicated region
        $region25: #{tpu_custom_call.1} parent=11 // pred_check
          %p198 = pneg %p128
        $region26: #{tpu_custom_call.1} parent=11 // pred_check_branch
          %200 = sbr.rel (%p198) target = $region28
        $region27: #{tpu_custom_call.1} parent=11 // pred_region
          _
        $region28: #{tpu_custom_call.1} parent=11 // pred_fallthru
          _
      $region12: #{tpu_custom_call.1} parent=5 // pred_fallthru
        _
      %p201 = scmp.lt.s32.totalorder %s18, 2
      // Predicated region
      $region29: #{tpu_custom_call.1} parent=5 // pred_check
        %p202 = pneg %p201
      $region30: #{tpu_custom_call.1} parent=5 // pred_check_branch
        %204 = sbr.rel (%p202) target = $region32
      $region31: #{tpu_custom_call.1} parent=5 // pred_region
        // Predicated region
        $region33: #{tpu_custom_call.1} parent=31 // pred_check
          %p205 = pneg %p38
        $region34: #{tpu_custom_call.1} parent=31 // pred_check_branch
          %207 = sbr.rel (%p205) target = $region36
        $region35: #{tpu_custom_call.1} parent=31 // pred_region
          %s208 = sand.u32 %s28, 1
          %s209 = scalar_lea.sflag [#allocation5], %s208
          %s210 = sand.u32 %s28, 1
          %s211 = smul.addr %s210, 256
          %s212 = scalar_lea.vmem [#allocation4], %s211
          %s214 = ssub.s32 4096, 4096
          %215 = vsyncadd %s209, %s214
          %s216 = smul.addr %s18, 32
          %s217 = smul.addr %s216, 128
          %s218 = scalar_lea.hbm %s0, %s217
          %s219 = sshll.u32 %s212, 4
          %s220 = int_to_ptr.vmem [resolvable:$true] %s219
          %225 = dma.hbm_to_vmem [thread:$0]  %s218, 4096, %s220, %s209, 128, 128, 8
        $region36: #{tpu_custom_call.1} parent=31 // pred_fallthru
          _
      $region32: #{tpu_custom_call.1} parent=5 // pred_fallthru
        _
      %p226 = scmp.le.s32.totalorder 1, %s18
      %p227 = scmp.lt.s32.totalorder %s18, 3
      %p228 = pnand %p226, %p227
      %p229 = pneg %p228
      // Predicated region
      $region37: #{tpu_custom_call.1} parent=5 // pred_check
        _
      $region38: #{tpu_custom_call.1} parent=5 // pred_check_branch
        %231 = sbr.rel (%p228) target = $region40
      $region39: #{tpu_custom_call.1} parent=5 // pred_region
        %s232 = ssub.s32 %s18, 1
        %s233 = sand.u32 %s31, 1
        %s234 = scalar_lea.sflag [#allocation5], %s233
        %s235 = sand.u32 %s31, 1
        %s236 = smul.addr %s235, 256
        %s237 = scalar_lea.vmem [#allocation4], %s236
        // Predicated region
        $region41: #{tpu_custom_call.1} parent=39 // pred_check
          %p238 = pneg %p44
        $region42: #{tpu_custom_call.1} parent=39 // pred_check_branch
          %240 = sbr.rel (%p238) target = $region44
        $region43: #{tpu_custom_call.1} parent=39 // pred_region
          %241 = dma.done %s234, 4096
        $region44: #{tpu_custom_call.1} parent=39 // pred_fallthru
          _
        // Predicated region
        $region45: #{tpu_custom_call.1} parent=39 // pred_check
          %p242 = pneg %p65
        $region46: #{tpu_custom_call.1} parent=39 // pred_check_branch
          %244 = sbr.rel (%p242) target = $region48
        $region47: #{tpu_custom_call.1} parent=39 // pred_region
          %245 = dma.done [#allocation8], 18432
        $region48: #{tpu_custom_call.1} parent=39 // pred_fallthru
          _
        // Predicated region
        $region49: #{tpu_custom_call.1} parent=39 // pred_check
          %p246 = pneg %p107
        $region50: #{tpu_custom_call.1} parent=39 // pred_check_branch
          %248 = sbr.rel (%p246) target = $region52
        $region51: #{tpu_custom_call.1} parent=39 // pred_region
          %249 = dma.done [#allocation8], 18432
        $region52: #{tpu_custom_call.1} parent=39 // pred_fallthru
          _
        %s250 = sand.u32 %s31, 1
        %s251 = scalar_lea.sflag [#allocation5], %s250
        %s252 = sand.u32 %s31, 1
        %s253 = smul.addr %s252, 256
        %s254 = scalar_lea.vmem [#allocation4], %s253
        %p255 = pneg %p44
        %p256 = pneg %p41
        %p257 = pneg %p65
        %p258 = pneg %p62
        %p259 = pneg %p86
        %p260 = pneg %p83
        %p261 = pneg %p107
        %p262 = pneg %p104
        %p263 = pneg %p128
        %p264 = pneg %p125
        %p265 = pneg %p154
        %p266 = pneg %p151
        %s267 = sand.u32 %s141, 1
        %s268 = scalar_lea.sflag [#allocation6], %s267
        %s269 = sand.u32 %s141, 1
        %s270 = smul.addr %s269, 256
        %s271 = scalar_lea.vmem [#allocation10], %s270
        %272 = vst [vmem:[#allocation2] sm:$0xff] 0.0
        %273 = vst [vmem:[#allocation2 + $0x8] sm:$0xff] 0.0
        %274 = vst [vmem:[#allocation2 + $0x10] sm:$0x3] 0.0
        %s275 = scalar_lea.vmem [#allocation2], 408
        %276 = vst [vmem:[%s275] sm:$0xff] 0.0
        %277 = vst [vmem:[%s275 + $0x8] sm:$0xff] 0.0
        %278 = vst [vmem:[%s275 + $0x10] sm:$0x3] 0.0
        %279 = vst [vmem:[#allocation2] sm:$0x1] 0.0
        %280 = vst [vmem:[#allocation2 + $0x18] sm:$0x1] 0.0
        %281 = vst [vmem:[#allocation2 + $0x30] sm:$0x1] 0.0
        %282 = vst [vmem:[#allocation2 + $0x48] sm:$0x1] 0.0
        %283 = vst [vmem:[#allocation2 + $0x60] sm:$0x1] 0.0
        %284 = vst [vmem:[#allocation2 + $0x78] sm:$0x1] 0.0
        %285 = vst [vmem:[#allocation2 + $0x90] sm:$0x1] 0.0
        %286 = vst [vmem:[#allocation2 + $0xa8] sm:$0x1] 0.0
        %287 = vst [vmem:[#allocation2 + $0xc0] sm:$0x1] 0.0
        %288 = vst [vmem:[#allocation2 + $0xd8] sm:$0x1] 0.0
        %289 = vst [vmem:[#allocation2 + $0xf0] sm:$0x1] 0.0
        %290 = vst [vmem:[#allocation2 + $0x108] sm:$0x1] 0.0
        %291 = vst [vmem:[#allocation2 + $0x120] sm:$0x1] 0.0
        %292 = vst [vmem:[#allocation2 + $0x138] sm:$0x1] 0.0
        %293 = vst [vmem:[#allocation2 + $0x150] sm:$0x1] 0.0
        %294 = vst [vmem:[#allocation2 + $0x168] sm:$0x1] 0.0
        %295 = vst [vmem:[#allocation2 + $0x180] sm:$0x1] 0.0
        %296 = vst [vmem:[#allocation2 + $0x198] sm:$0x1] 0.0
        %297 = vst [vmem:[#allocation2 + $0x11] sm:$0x1] 0.0
        %298 = vst [vmem:[#allocation2 + $0x29] sm:$0x1] 0.0
        %299 = vst [vmem:[#allocation2 + $0x41] sm:$0x1] 0.0
        %300 = vst [vmem:[#allocation2 + $0x59] sm:$0x1] 0.0
        %301 = vst [vmem:[#allocation2 + $0x71] sm:$0x1] 0.0
        %302 = vst [vmem:[#allocation2 + $0x89] sm:$0x1] 0.0
        %303 = vst [vmem:[#allocation2 + $0xa1] sm:$0x1] 0.0
        %304 = vst [vmem:[#allocation2 + $0xb9] sm:$0x1] 0.0
        %305 = vst [vmem:[#allocation2 + $0xd1] sm:$0x1] 0.0
        %306 = vst [vmem:[#allocation2 + $0xe9] sm:$0x1] 0.0
        %307 = vst [vmem:[#allocation2 + $0x101] sm:$0x1] 0.0
        %308 = vst [vmem:[#allocation2 + $0x119] sm:$0x1] 0.0
        %309 = vst [vmem:[#allocation2 + $0x131] sm:$0x1] 0.0
        %310 = vst [vmem:[#allocation2 + $0x149] sm:$0x1] 0.0
        %311 = vst [vmem:[#allocation2 + $0x161] sm:$0x1] 0.0
        %312 = vst [vmem:[#allocation2 + $0x179] sm:$0x1] 0.0
        %313 = vst [vmem:[#allocation2 + $0x191] sm:$0x1] 0.0
        %314 = vst [vmem:[#allocation2 + $0x1a9] sm:$0x1] 0.0
        %315 = vst [vmem:[#allocation3] sm:$0xff] 0.0
        %316 = vst [vmem:[#allocation3 + $0x8] sm:$0xff] 0.0
        %317 = vst [vmem:[#allocation3 + $0x10] sm:$0x3] 0.0
        %s318 = scalar_lea.vmem [#allocation3], 408
        %319 = vst [vmem:[%s318] sm:$0xff] 0.0
        %320 = vst [vmem:[%s318 + $0x8] sm:$0xff] 0.0
        %321 = vst [vmem:[%s318 + $0x10] sm:$0x3] 0.0
        %322 = vst [vmem:[#allocation3] sm:$0x1] 0.0
        %323 = vst [vmem:[#allocation3 + $0x18] sm:$0x1] 0.0
        %324 = vst [vmem:[#allocation3 + $0x30] sm:$0x1] 0.0
        %325 = vst [vmem:[#allocation3 + $0x48] sm:$0x1] 0.0
        %326 = vst [vmem:[#allocation3 + $0x60] sm:$0x1] 0.0
        %327 = vst [vmem:[#allocation3 + $0x78] sm:$0x1] 0.0
        %328 = vst [vmem:[#allocation3 + $0x90] sm:$0x1] 0.0
        %329 = vst [vmem:[#allocation3 + $0xa8] sm:$0x1] 0.0
        %330 = vst [vmem:[#allocation3 + $0xc0] sm:$0x1] 0.0
        %331 = vst [vmem:[#allocation3 + $0xd8] sm:$0x1] 0.0
        %332 = vst [vmem:[#allocation3 + $0xf0] sm:$0x1] 0.0
        %333 = vst [vmem:[#allocation3 + $0x108] sm:$0x1] 0.0
        %334 = vst [vmem:[#allocation3 + $0x120] sm:$0x1] 0.0
        %335 = vst [vmem:[#allocation3 + $0x138] sm:$0x1] 0.0
        %336 = vst [vmem:[#allocation3 + $0x150] sm:$0x1] 0.0
        %337 = vst [vmem:[#allocation3 + $0x168] sm:$0x1] 0.0
        %338 = vst [vmem:[#allocation3 + $0x180] sm:$0x1] 0.0
        %339 = vst [vmem:[#allocation3 + $0x198] sm:$0x1] 0.0
        %340 = vst [vmem:[#allocation3 + $0x11] sm:$0x1] 0.0
        %341 = vst [vmem:[#allocation3 + $0x29] sm:$0x1] 0.0
        %342 = vst [vmem:[#allocation3 + $0x41] sm:$0x1] 0.0
        %343 = vst [vmem:[#allocation3 + $0x59] sm:$0x1] 0.0
        %344 = vst [vmem:[#allocation3 + $0x71] sm:$0x1] 0.0
        %345 = vst [vmem:[#allocation3 + $0x89] sm:$0x1] 0.0
        %346 = vst [vmem:[#allocation3 + $0xa1] sm:$0x1] 0.0
        %347 = vst [vmem:[#allocation3 + $0xb9] sm:$0x1] 0.0
        %348 = vst [vmem:[#allocation3 + $0xd1] sm:$0x1] 0.0
        %349 = vst [vmem:[#allocation3 + $0xe9] sm:$0x1] 0.0
        %350 = vst [vmem:[#allocation3 + $0x101] sm:$0x1] 0.0
        %351 = vst [vmem:[#allocation3 + $0x119] sm:$0x1] 0.0
        %352 = vst [vmem:[#allocation3 + $0x131] sm:$0x1] 0.0
        %353 = vst [vmem:[#allocation3 + $0x149] sm:$0x1] 0.0
        %354 = vst [vmem:[#allocation3 + $0x161] sm:$0x1] 0.0
        %355 = vst [vmem:[#allocation3 + $0x179] sm:$0x1] 0.0
        %356 = vst [vmem:[#allocation3 + $0x191] sm:$0x1] 0.0
        %357 = vst [vmem:[#allocation3 + $0x1a9] sm:$0x1] 0.0
        %v358 = vld [vmem:[%s237] sm:$0xff]
        %v359 = vld [vmem:[%s237 + $0x8] sm:$0xff]
        %v360 = vld [vmem:[%s237 + $0x10] sm:$0xff]
        %v361 = vld [vmem:[%s237 + $0x18] sm:$0xff]
        %v362 = vld [vmem:[%s237 + $0x20] sm:$0xff]
        %v363 = vld [vmem:[%s237 + $0x28] sm:$0xff]
        %v364 = vld [vmem:[%s237 + $0x30] sm:$0xff]
        %v365 = vld [vmem:[%s237 + $0x38] sm:$0xff]
        %v366 = vld [vmem:[%s237 + $0x40] sm:$0xff]
        %v367 = vld [vmem:[%s237 + $0x48] sm:$0xff]
        %v368 = vld [vmem:[%s237 + $0x50] sm:$0xff]
        %v369 = vld [vmem:[%s237 + $0x58] sm:$0xff]
        %v370 = vld [vmem:[%s237 + $0x60] sm:$0xff]
        %v371 = vld [vmem:[%s237 + $0x68] sm:$0xff]
        %v372 = vld [vmem:[%s237 + $0x70] sm:$0xff]
        %v373 = vld [vmem:[%s237 + $0x78] sm:$0xff]
        %v374 = vld [vmem:[%s237 + $0x80] sm:$0xff]
        %v375 = vld [vmem:[%s237 + $0x88] sm:$0xff]
        %v376 = vld [vmem:[%s237 + $0x90] sm:$0xff]
        %v377 = vld [vmem:[%s237 + $0x98] sm:$0xff]
        %v378 = vld [vmem:[%s237 + $0xa0] sm:$0xff]
        %v379 = vld [vmem:[%s237 + $0xa8] sm:$0xff]
        %v380 = vld [vmem:[%s237 + $0xb0] sm:$0xff]
        %v381 = vld [vmem:[%s237 + $0xb8] sm:$0xff]
        %v382 = vld [vmem:[%s237 + $0xc0] sm:$0xff]
        %v383 = vld [vmem:[%s237 + $0xc8] sm:$0xff]
        %v384 = vld [vmem:[%s237 + $0xd0] sm:$0xff]
        %v385 = vld [vmem:[%s237 + $0xd8] sm:$0xff]
        %v386 = vld [vmem:[%s237 + $0xe0] sm:$0xff]
        %v387 = vld [vmem:[%s237 + $0xe8] sm:$0xff]
        %v388 = vld [vmem:[%s237 + $0xf0] sm:$0xff]
        %v389 = vld [vmem:[%s237 + $0xf8] sm:$0xff]
        %s390 = scalar_lea.vmem [#allocation2], 24
        %391 = vst [vmem:[%s390 + $0x1] sm:$0xff] %v358
        %392 = vst [vmem:[%s390 + $0x9] sm:$0xff] %v359
        %393 = vst [vmem:[%s390 + $0x19] sm:$0xff] %v360
        %394 = vst [vmem:[%s390 + $0x21] sm:$0xff] %v361
        %395 = vst [vmem:[%s390 + $0x31] sm:$0xff] %v362
        %396 = vst [vmem:[%s390 + $0x39] sm:$0xff] %v363
        %397 = vst [vmem:[%s390 + $0x49] sm:$0xff] %v364
        %398 = vst [vmem:[%s390 + $0x51] sm:$0xff] %v365
        %399 = vst [vmem:[%s390 + $0x61] sm:$0xff] %v366
        %400 = vst [vmem:[%s390 + $0x69] sm:$0xff] %v367
        %401 = vst [vmem:[%s390 + $0x79] sm:$0xff] %v368
        %402 = vst [vmem:[%s390 + $0x81] sm:$0xff] %v369
        %403 = vst [vmem:[%s390 + $0x91] sm:$0xff] %v370
        %404 = vst [vmem:[%s390 + $0x99] sm:$0xff] %v371
        %405 = vst [vmem:[%s390 + $0xa9] sm:$0xff] %v372
        %406 = vst [vmem:[%s390 + $0xb1] sm:$0xff] %v373
        %407 = vst [vmem:[%s390 + $0xc1] sm:$0xff] %v374
        %408 = vst [vmem:[%s390 + $0xc9] sm:$0xff] %v375
        %409 = vst [vmem:[%s390 + $0xd9] sm:$0xff] %v376
        %410 = vst [vmem:[%s390 + $0xe1] sm:$0xff] %v377
        %411 = vst [vmem:[%s390 + $0xf1] sm:$0xff] %v378
        %412 = vst [vmem:[%s390 + $0xf9] sm:$0xff] %v379
        %413 = vst [vmem:[%s390 + $0x109] sm:$0xff] %v380
        %414 = vst [vmem:[%s390 + $0x111] sm:$0xff] %v381
        %415 = vst [vmem:[%s390 + $0x121] sm:$0xff] %v382
        %416 = vst [vmem:[%s390 + $0x129] sm:$0xff] %v383
        %417 = vst [vmem:[%s390 + $0x139] sm:$0xff] %v384
        %418 = vst [vmem:[%s390 + $0x141] sm:$0xff] %v385
        %419 = vst [vmem:[%s390 + $0x151] sm:$0xff] %v386
        %420 = vst [vmem:[%s390 + $0x159] sm:$0xff] %v387
        %421 = vst [vmem:[%s390 + $0x169] sm:$0xff] %v388
        %422 = vst [vmem:[%s390 + $0x171] sm:$0xff] %v389
        loop: start=0, step=1, limit=2
        $region53: #{tpu_custom_call.1} parent=39 // loop_pre_header
          _
        $region54: #{tpu_custom_call.1} parent=39 // loop_header
          %s424 = sphi 0, %s428
          %p425 = scmp.ge.s32.totalorder %s424, 2
        $region55: #{tpu_custom_call.1} parent=39 // loop_header_branch
          %427 = sbr.rel (%p425) target = $region59
        $region56: #{tpu_custom_call.1} parent=39 // loop_body
          %s429 = smul.u32 %s424, 8
          %s430 = smul.u32 %s429, 24
          %s431 = scalar_lea.vmem [#allocation2], %s430
          %v432 = vld [vmem:[%s431] sm:$0xff]
          %v433 = vld [vmem:[%s431 + $0x8] sm:$0xff]
          %v434 = vld [vmem:[%s431 + $0x10] sm:$0x3]
          %v435 = vld [vmem:[%s431 + $0x18] sm:$0xff]
          %v436 = vld [vmem:[%s431 + $0x20] sm:$0xff]
          %v437 = vld [vmem:[%s431 + $0x28] sm:$0x3]
          %v438 = vld [vmem:[%s431 + $0x30] sm:$0xff]
          %v439 = vld [vmem:[%s431 + $0x38] sm:$0xff]
          %v440 = vld [vmem:[%s431 + $0x40] sm:$0x3]
          %v441 = vld [vmem:[%s431 + $0x48] sm:$0xff]
          %v442 = vld [vmem:[%s431 + $0x50] sm:$0xff]
          %v443 = vld [vmem:[%s431 + $0x58] sm:$0x3]
          %v444 = vld [vmem:[%s431 + $0x60] sm:$0xff]
          %v445 = vld [vmem:[%s431 + $0x68] sm:$0xff]
          %v446 = vld [vmem:[%s431 + $0x70] sm:$0x3]
          %v447 = vld [vmem:[%s431 + $0x78] sm:$0xff]
          %v448 = vld [vmem:[%s431 + $0x80] sm:$0xff]
          %v449 = vld [vmem:[%s431 + $0x88] sm:$0x3]
          %v450 = vld [vmem:[%s431 + $0x90] sm:$0xff]
          %v451 = vld [vmem:[%s431 + $0x98] sm:$0xff]
          %v452 = vld [vmem:[%s431 + $0xa0] sm:$0x3]
          %v453 = vld [vmem:[%s431 + $0xa8] sm:$0xff]
          %v454 = vld [vmem:[%s431 + $0xb0] sm:$0xff]
          %v455 = vld [vmem:[%s431 + $0xb8] sm:$0x3]
          %v456 = vld [vmem:[#allocation7] sm:$0xff]
          %v457 = vld [vmem:[#allocation7 + $0x8] sm:$0xff]
          %v458 = vld [vmem:[#allocation7 + $0x10] sm:$0xff]
          %v459 = vld [vmem:[#allocation7 + $0x18] sm:$0xff]
          %v460 = vld [vmem:[#allocation7 + $0x20] sm:$0xff]
          %v461 = vld [vmem:[#allocation7 + $0x28] sm:$0xff]
          %v462 = vld [vmem:[#allocation7 + $0x30] sm:$0xff]
          %v463 = vld [vmem:[#allocation7 + $0x38] sm:$0xff]
          %v464 = vld [vmem:[#allocation7 + $0x40] sm:$0xff]
          %v465 = vld [vmem:[#allocation7 + $0x48] sm:$0xff]
          %v466 = vld [vmem:[#allocation7 + $0x50] sm:$0xff]
          %v467 = vld [vmem:[#allocation7 + $0x58] sm:$0xff]
          %v468 = vld [vmem:[#allocation7 + $0x60] sm:$0xff]
          %v469 = vld [vmem:[#allocation7 + $0x68] sm:$0xff]
          %v470 = vld [vmem:[#allocation7 + $0x70] sm:$0xff]
          %v471 = vld [vmem:[#allocation7 + $0x78] sm:$0xff]
          %vm496 = vcmask 1046528
          %v497 = vrot.slane %v432, 1
          %v498 = vrot.slane %v433, 1
          %v499 = vsel %vm496, %v497, %v498
          %v500 = vrot.slane %v434, 1
          %v501 = vsel %vm496, %v498, %v500
          %v502 = vrot.slane %v435, 1
          %v503 = vrot.slane %v436, 1
          %v504 = vsel %vm496, %v502, %v503
          %v505 = vrot.slane %v437, 1
          %v506 = vsel %vm496, %v503, %v505
          %v507 = vrot.slane %v438, 1
          %v508 = vrot.slane %v439, 1
          %v509 = vsel %vm496, %v507, %v508
          %v510 = vrot.slane %v440, 1
          %v511 = vsel %vm496, %v508, %v510
          %v512 = vrot.slane %v441, 1
          %v513 = vrot.slane %v442, 1
          %v514 = vsel %vm496, %v512, %v513
          %v515 = vrot.slane %v443, 1
          %v516 = vsel %vm496, %v513, %v515
          %v517 = vrot.slane %v444, 1
          %v518 = vrot.slane %v445, 1
          %v519 = vsel %vm496, %v517, %v518
          %v520 = vrot.slane %v446, 1
          %v521 = vsel %vm496, %v518, %v520
          %v522 = vrot.slane %v447, 1
          %v523 = vrot.slane %v448, 1
          %v524 = vsel %vm496, %v522, %v523
          %v525 = vrot.slane %v449, 1
          %v526 = vsel %vm496, %v523, %v525
          %v527 = vrot.slane %v450, 1
          %v528 = vrot.slane %v451, 1
          %v529 = vsel %vm496, %v527, %v528
          %v530 = vrot.slane %v452, 1
          %v531 = vsel %vm496, %v528, %v530
          %v532 = vrot.slane %v453, 1
          %v533 = vrot.slane %v454, 1
          %v534 = vsel %vm496, %v532, %v533
          %v535 = vrot.slane %v455, 1
          %v536 = vsel %vm496, %v533, %v535
          %s553 = scalar_lea.vmem [#allocation7], 128
          %v554 = vld [vmem:[%s553] sm:$0xff]
          %v555 = vld [vmem:[%s553 + $0x8] sm:$0xff]
          %v556 = vld [vmem:[%s553 + $0x10] sm:$0xff]
          %v557 = vld [vmem:[%s553 + $0x18] sm:$0xff]
          %v558 = vld [vmem:[%s553 + $0x20] sm:$0xff]
          %v559 = vld [vmem:[%s553 + $0x28] sm:$0xff]
          %v560 = vld [vmem:[%s553 + $0x30] sm:$0xff]
          %v561 = vld [vmem:[%s553 + $0x38] sm:$0xff]
          %v562 = vld [vmem:[%s553 + $0x40] sm:$0xff]
          %v563 = vld [vmem:[%s553 + $0x48] sm:$0xff]
          %v564 = vld [vmem:[%s553 + $0x50] sm:$0xff]
          %v565 = vld [vmem:[%s553 + $0x58] sm:$0xff]
          %v566 = vld [vmem:[%s553 + $0x60] sm:$0xff]
          %v567 = vld [vmem:[%s553 + $0x68] sm:$0xff]
          %v568 = vld [vmem:[%s553 + $0x70] sm:$0xff]
          %v569 = vld [vmem:[%s553 + $0x78] sm:$0xff]
          %570 = vmatprep.subr.mxu0 0.0
          %571 = vmatpush1.msra.mxu0 %v569
          %572 = vmatprep.subr.mxu0 0.0
          %573 = vmatpush1.msra.mxu0 %v568
          %574 = vmatprep.subr.mxu0 0.0
          %575 = vmatpush1.msra.mxu0 %v567
          %576 = vmatprep.subr.mxu0 0.0
          %577 = vmatpush1.msra.mxu0 %v566
          %578 = vmatprep.subr.mxu0 0.0
          %579 = vmatpush1.msra.mxu0 %v565
          %580 = vmatprep.subr.mxu0 0.0
          %581 = vmatpush1.msra.mxu0 %v564
          %582 = vmatprep.subr.mxu0 0.0
          %583 = vmatpush1.msra.mxu0 %v563
          %584 = vmatprep.subr.mxu0 0.0
          %585 = vmatpush1.msra.mxu0 %v562
          %586 = vmatprep.subr.mxu0 0.0
          %587 = vmatpush1.msra.mxu0 %v561
          %588 = vmatprep.subr.mxu0 0.0
          %589 = vmatpush1.msra.mxu0 %v560
          %590 = vmatprep.subr.mxu0 0.0
          %591 = vmatpush1.msra.mxu0 %v559
          %592 = vmatprep.subr.mxu0 0.0
          %593 = vmatpush1.msra.mxu0 %v558
          %594 = vmatprep.subr.mxu0 0.0
          %595 = vmatpush1.msra.mxu0 %v557
          %596 = vmatprep.subr.mxu0 0.0
          %597 = vmatpush1.msra.mxu0 %v556
          %598 = vmatprep.subr.mxu0 0.0
          %599 = vmatpush1.msra.mxu0 %v555
          %600 = vmatprep.subr.mxu0 0.0
          %601 = vmatpush1.msra.mxu0 %v554
          %602 = vmatprep.subr.mxu0 0.0
          %603 = vmatpush2.msra.mxu0 0.0
          %604 = vmatprep.subr.mxu0 0.0
          %605 = vmatpush2.msra.mxu0 0.0
          %606 = vmatprep.subr.mxu0 0.0
          %607 = vmatpush2.msra.mxu0 0.0
          %608 = vmatprep.subr.mxu0 0.0
          %609 = vmatpush2.msra.mxu0 0.0
          %610 = vmatprep.subr.mxu0 0.0
          %611 = vmatpush2.msra.mxu0 0.0
          %612 = vmatprep.subr.mxu0 0.0
          %613 = vmatpush2.msra.mxu0 0.0
          %614 = vmatprep.subr.mxu0 0.0
          %615 = vmatpush2.msra.mxu0 0.0
          %616 = vmatprep.subr.mxu0 0.0
          %617 = vmatpush2.msra.mxu0 0.0
          %618 = vmatprep.subr.mxu0 0.0
          %619 = vmatpush2.msra.mxu0 0.0
          %620 = vmatprep.subr.mxu0 0.0
          %621 = vmatpush2.msra.mxu0 0.0
          %622 = vmatprep.subr.mxu0 0.0
          %623 = vmatpush2.msra.mxu0 0.0
          %624 = vmatprep.subr.mxu0 0.0
          %625 = vmatpush2.msra.mxu0 0.0
          %626 = vmatprep.subr.mxu0 0.0
          %627 = vmatpush2.msra.mxu0 0.0
          %628 = vmatprep.subr.mxu0 0.0
          %629 = vmatpush2.msra.mxu0 0.0
          %630 = vmatprep.subr.mxu0 0.0
          %631 = vmatpush2.msra.mxu0 0.0
          %632 = vmatprep.subr.mxu0 0.0
          %633 = vmatpush2.msra.mxu0 0.0
          %634 = vmatprep.mubr.f32.mxu0 0.0
          %635 = vmatmul.mubr.f32.gmra.mxu0 %v499
          %v636 = vpop.f32.mrf.mxu0
          %v637 = vadd.f32 0.0, %v636
          %v638 = vpop.f32.mrf.mxu0
          %639 = vmatprep.mubr.f32.mxu0 0.0
          %640 = vmatmul.mubr.f32.gmra.mxu0 %v501
          %v641 = vpop.f32.mrf.mxu0
          %v642 = vadd.f32 0.0, %v641
          %v643 = vpop.f32.mrf.mxu0
          %644 = vmatprep.mubr.f32.mxu0 0.0
          %645 = vmatmul.mubr.f32.gmra.mxu0 %v504
          %v646 = vpop.f32.mrf.mxu0
          %v647 = vadd.f32 0.0, %v646
          %v648 = vpop.f32.mrf.mxu0
          %649 = vmatprep.mubr.f32.mxu0 0.0
          %650 = vmatmul.mubr.f32.gmra.mxu0 %v506
          %v651 = vpop.f32.mrf.mxu0
          %v652 = vadd.f32 0.0, %v651
          %v653 = vpop.f32.mrf.mxu0
          %654 = vmatprep.mubr.f32.mxu0 0.0
          %655 = vmatmul.mubr.f32.gmra.mxu0 %v509
          %v656 = vpop.f32.mrf.mxu0
          %v657 = vadd.f32 0.0, %v656
          %v658 = vpop.f32.mrf.mxu0
          %659 = vmatprep.mubr.f32.mxu0 0.0
          %660 = vmatmul.mubr.f32.gmra.mxu0 %v511
          %v661 = vpop.f32.mrf.mxu0
          %v662 = vadd.f32 0.0, %v661
          %v663 = vpop.f32.mrf.mxu0
          %664 = vmatprep.mubr.f32.mxu0 0.0
          %665 = vmatmul.mubr.f32.gmra.mxu0 %v514
          %v666 = vpop.f32.mrf.mxu0
          %v667 = vadd.f32 0.0, %v666
          %v668 = vpop.f32.mrf.mxu0
          %669 = vmatprep.mubr.f32.mxu0 0.0
          %670 = vmatmul.mubr.f32.gmra.mxu0 %v516
          %v671 = vpop.f32.mrf.mxu0
          %v672 = vadd.f32 0.0, %v671
          %v673 = vpop.f32.mrf.mxu0
          %674 = vmatprep.mubr.f32.mxu0 0.0
          %675 = vmatmul.mubr.f32.gmra.mxu0 %v519
          %v676 = vpop.f32.mrf.mxu0
          %v677 = vadd.f32 0.0, %v676
          %v678 = vpop.f32.mrf.mxu0
          %679 = vmatprep.mubr.f32.mxu0 0.0
          %680 = vmatmul.mubr.f32.gmra.mxu0 %v521
          %v681 = vpop.f32.mrf.mxu0
          %v682 = vadd.f32 0.0, %v681
          %v683 = vpop.f32.mrf.mxu0
          %684 = vmatprep.mubr.f32.mxu0 0.0
          %685 = vmatmul.mubr.f32.gmra.mxu0 %v524
          %v686 = vpop.f32.mrf.mxu0
          %v687 = vadd.f32 0.0, %v686
          %v688 = vpop.f32.mrf.mxu0
          %689 = vmatprep.mubr.f32.mxu0 0.0
          %690 = vmatmul.mubr.f32.gmra.mxu0 %v526
          %v691 = vpop.f32.mrf.mxu0
          %v692 = vadd.f32 0.0, %v691
          %v693 = vpop.f32.mrf.mxu0
          %694 = vmatprep.mubr.f32.mxu0 0.0
          %695 = vmatmul.mubr.f32.gmra.mxu0 %v529
          %v696 = vpop.f32.mrf.mxu0
          %v697 = vadd.f32 0.0, %v696
          %v698 = vpop.f32.mrf.mxu0
          %699 = vmatprep.mubr.f32.mxu0 0.0
          %700 = vmatmul.mubr.f32.gmra.mxu0 %v531
          %v701 = vpop.f32.mrf.mxu0
          %v702 = vadd.f32 0.0, %v701
          %v703 = vpop.f32.mrf.mxu0
          %704 = vmatprep.mubr.f32.mxu0 0.0
          %705 = vmatmul.mubr.f32.gmra.mxu0 %v534
          %v706 = vpop.f32.mrf.mxu0
          %v707 = vadd.f32 0.0, %v706
          %v708 = vpop.f32.mrf.mxu0
          %709 = vmatprep.mubr.f32.mxu0 0.0
          %710 = vmatmul.mubr.f32.gmra.mxu0 %v536
          %v711 = vpop.f32.mrf.mxu0
          %v712 = vadd.f32 0.0, %v711
          %v713 = vpop.f32.mrf.mxu0
          %714 = vdwg.mxu0
          %715 = vmatprep.subr.mxu0 0.0
          %716 = vmatpush1.msra.mxu0 %v471
          %717 = vmatprep.subr.mxu0 0.0
          %718 = vmatpush1.msra.mxu0 %v470
          %719 = vmatprep.subr.mxu0 0.0
          %720 = vmatpush1.msra.mxu0 %v469
          %721 = vmatprep.subr.mxu0 0.0
          %722 = vmatpush1.msra.mxu0 %v468
          %723 = vmatprep.subr.mxu0 0.0
          %724 = vmatpush1.msra.mxu0 %v467
          %725 = vmatprep.subr.mxu0 0.0
          %726 = vmatpush1.msra.mxu0 %v466
          %727 = vmatprep.subr.mxu0 0.0
          %728 = vmatpush1.msra.mxu0 %v465
          %729 = vmatprep.subr.mxu0 0.0
          %730 = vmatpush1.msra.mxu0 %v464
          %731 = vmatprep.subr.mxu0 0.0
          %732 = vmatpush1.msra.mxu0 %v463
          %733 = vmatprep.subr.mxu0 0.0
          %734 = vmatpush1.msra.mxu0 %v462
          %735 = vmatprep.subr.mxu0 0.0
          %736 = vmatpush1.msra.mxu0 %v461
          %737 = vmatprep.subr.mxu0 0.0
          %738 = vmatpush1.msra.mxu0 %v460
          %739 = vmatprep.subr.mxu0 0.0
          %740 = vmatpush1.msra.mxu0 %v459
          %741 = vmatprep.subr.mxu0 0.0
          %742 = vmatpush1.msra.mxu0 %v458
          %743 = vmatprep.subr.mxu0 0.0
          %744 = vmatpush1.msra.mxu0 %v457
          %745 = vmatprep.subr.mxu0 0.0
          %746 = vmatpush1.msra.mxu0 %v456
          %747 = vmatprep.subr.mxu0 0.0
          %748 = vmatpush2.msra.mxu0 0.0
          %749 = vmatprep.subr.mxu0 0.0
          %750 = vmatpush2.msra.mxu0 0.0
          %751 = vmatprep.subr.mxu0 0.0
          %752 = vmatpush2.msra.mxu0 0.0
          %753 = vmatprep.subr.mxu0 0.0
          %754 = vmatpush2.msra.mxu0 0.0
          %755 = vmatprep.subr.mxu0 0.0
          %756 = vmatpush2.msra.mxu0 0.0
          %757 = vmatprep.subr.mxu0 0.0
          %758 = vmatpush2.msra.mxu0 0.0
          %759 = vmatprep.subr.mxu0 0.0
          %760 = vmatpush2.msra.mxu0 0.0
          %761 = vmatprep.subr.mxu0 0.0
          %762 = vmatpush2.msra.mxu0 0.0
          %763 = vmatprep.subr.mxu0 0.0
          %764 = vmatpush2.msra.mxu0 0.0
          %765 = vmatprep.subr.mxu0 0.0
          %766 = vmatpush2.msra.mxu0 0.0
          %767 = vmatprep.subr.mxu0 0.0
          %768 = vmatpush2.msra.mxu0 0.0
          %769 = vmatprep.subr.mxu0 0.0
          %770 = vmatpush2.msra.mxu0 0.0
          %771 = vmatprep.subr.mxu0 0.0
          %772 = vmatpush2.msra.mxu0 0.0
          %773 = vmatprep.subr.mxu0 0.0
          %774 = vmatpush2.msra.mxu0 0.0
          %775 = vmatprep.subr.mxu0 0.0
          %776 = vmatpush2.msra.mxu0 0.0
          %777 = vmatprep.subr.mxu0 0.0
          %778 = vmatpush2.msra.mxu0 0.0
          %779 = vmatprep.mubr.f32.mxu0 0.0
          %780 = vmatmul.mubr.f32.gmra.mxu0 %v432
          %v781 = vpop.f32.mrf.mxu0
          %v782 = vadd.f32 %v637, %v781
          %v783 = vpop.f32.mrf.mxu0
          %784 = vmatprep.mubr.f32.mxu0 0.0
          %785 = vmatmul.mubr.f32.gmra.mxu0 %v433
          %v786 = vpop.f32.mrf.mxu0
          %v787 = vadd.f32 %v642, %v786
          %v788 = vpop.f32.mrf.mxu0
          %789 = vmatprep.mubr.f32.mxu0 0.0
          %790 = vmatmul.mubr.f32.gmra.mxu0 %v435
          %v791 = vpop.f32.mrf.mxu0
          %v792 = vadd.f32 %v647, %v791
          %v793 = vpop.f32.mrf.mxu0
          %794 = vmatprep.mubr.f32.mxu0 0.0
          %795 = vmatmul.mubr.f32.gmra.mxu0 %v436
          %v796 = vpop.f32.mrf.mxu0
          %v797 = vadd.f32 %v652, %v796
          %v798 = vpop.f32.mrf.mxu0
          %799 = vmatprep.mubr.f32.mxu0 0.0
          %800 = vmatmul.mubr.f32.gmra.mxu0 %v438
          %v801 = vpop.f32.mrf.mxu0
          %v802 = vadd.f32 %v657, %v801
          %v803 = vpop.f32.mrf.mxu0
          %804 = vmatprep.mubr.f32.mxu0 0.0
          %805 = vmatmul.mubr.f32.gmra.mxu0 %v439
          %v806 = vpop.f32.mrf.mxu0
          %v807 = vadd.f32 %v662, %v806
          %v808 = vpop.f32.mrf.mxu0
          %809 = vmatprep.mubr.f32.mxu0 0.0
          %810 = vmatmul.mubr.f32.gmra.mxu0 %v441
          %v811 = vpop.f32.mrf.mxu0
          %v812 = vadd.f32 %v667, %v811
          %v813 = vpop.f32.mrf.mxu0
          %814 = vmatprep.mubr.f32.mxu0 0.0
          %815 = vmatmul.mubr.f32.gmra.mxu0 %v442
          %v816 = vpop.f32.mrf.mxu0
          %v817 = vadd.f32 %v672, %v816
          %v818 = vpop.f32.mrf.mxu0
          %819 = vmatprep.mubr.f32.mxu0 0.0
          %820 = vmatmul.mubr.f32.gmra.mxu0 %v444
          %v821 = vpop.f32.mrf.mxu0
          %v822 = vadd.f32 %v677, %v821
          %v823 = vpop.f32.mrf.mxu0
          %824 = vmatprep.mubr.f32.mxu0 0.0
          %825 = vmatmul.mubr.f32.gmra.mxu0 %v445
          %v826 = vpop.f32.mrf.mxu0
          %v827 = vadd.f32 %v682, %v826
          %v828 = vpop.f32.mrf.mxu0
          %829 = vmatprep.mubr.f32.mxu0 0.0
          %830 = vmatmul.mubr.f32.gmra.mxu0 %v447
          %v831 = vpop.f32.mrf.mxu0
          %v832 = vadd.f32 %v687, %v831
          %v833 = vpop.f32.mrf.mxu0
          %834 = vmatprep.mubr.f32.mxu0 0.0
          %835 = vmatmul.mubr.f32.gmra.mxu0 %v448
          %v836 = vpop.f32.mrf.mxu0
          %v837 = vadd.f32 %v692, %v836
          %v838 = vpop.f32.mrf.mxu0
          %839 = vmatprep.mubr.f32.mxu0 0.0
          %840 = vmatmul.mubr.f32.gmra.mxu0 %v450
          %v841 = vpop.f32.mrf.mxu0
          %v842 = vadd.f32 %v697, %v841
          %v843 = vpop.f32.mrf.mxu0
          %844 = vmatprep.mubr.f32.mxu0 0.0
          %845 = vmatmul.mubr.f32.gmra.mxu0 %v451
          %v846 = vpop.f32.mrf.mxu0
          %v847 = vadd.f32 %v702, %v846
          %v848 = vpop.f32.mrf.mxu0
          %849 = vmatprep.mubr.f32.mxu0 0.0
          %850 = vmatmul.mubr.f32.gmra.mxu0 %v453
          %v851 = vpop.f32.mrf.mxu0
          %v852 = vadd.f32 %v707, %v851
          %v853 = vpop.f32.mrf.mxu0
          %854 = vmatprep.mubr.f32.mxu0 0.0
          %855 = vmatmul.mubr.f32.gmra.mxu0 %v454
          %v856 = vpop.f32.mrf.mxu0
          %v857 = vadd.f32 %v712, %v856
          %v858 = vpop.f32.mrf.mxu0
          %859 = vdwg.mxu0
          %vm860 = vcmask 1045504
          %v861 = vrot.slane %v432, 2
          %v862 = vrot.slane %v433, 2
          %v863 = vsel %vm860, %v861, %v862
          %v864 = vrot.slane %v434, 2
          %v865 = vsel %vm860, %v862, %v864
          %v866 = vrot.slane %v435, 2
          %v867 = vrot.slane %v436, 2
          %v868 = vsel %vm860, %v866, %v867
          %v869 = vrot.slane %v437, 2
          %v870 = vsel %vm860, %v867, %v869
          %v871 = vrot.slane %v438, 2
          %v872 = vrot.slane %v439, 2
          %v873 = vsel %vm860, %v871, %v872
          %v874 = vrot.slane %v440, 2
          %v875 = vsel %vm860, %v872, %v874
          %v876 = vrot.slane %v441, 2
          %v877 = vrot.slane %v442, 2
          %v878 = vsel %vm860, %v876, %v877
          %v879 = vrot.slane %v443, 2
          %v880 = vsel %vm860, %v877, %v879
          %v881 = vrot.slane %v444, 2
          %v882 = vrot.slane %v445, 2
          %v883 = vsel %vm860, %v881, %v882
          %v884 = vrot.slane %v446, 2
          %v885 = vsel %vm860, %v882, %v884
          %v886 = vrot.slane %v447, 2
          %v887 = vrot.slane %v448, 2
          %v888 = vsel %vm860, %v886, %v887
          %v889 = vrot.slane %v449, 2
          %v890 = vsel %vm860, %v887, %v889
          %v891 = vrot.slane %v450, 2
          %v892 = vrot.slane %v451, 2
          %v893 = vsel %vm860, %v891, %v892
          %v894 = vrot.slane %v452, 2
          %v895 = vsel %vm860, %v892, %v894
          %v896 = vrot.slane %v453, 2
          %v897 = vrot.slane %v454, 2
          %v898 = vsel %vm860, %v896, %v897
          %v899 = vrot.slane %v455, 2
          %v900 = vsel %vm860, %v897, %v899
          %s917 = scalar_lea.vmem [#allocation7], 256
          %v918 = vld [vmem:[%s917] sm:$0xff]
          %v919 = vld [vmem:[%s917 + $0x8] sm:$0xff]
          %v920 = vld [vmem:[%s917 + $0x10] sm:$0xff]
          %v921 = vld [vmem:[%s917 + $0x18] sm:$0xff]
          %v922 = vld [vmem:[%s917 + $0x20] sm:$0xff]
          %v923 = vld [vmem:[%s917 + $0x28] sm:$0xff]
          %v924 = vld [vmem:[%s917 + $0x30] sm:$0xff]
          %v925 = vld [vmem:[%s917 + $0x38] sm:$0xff]
          %v926 = vld [vmem:[%s917 + $0x40] sm:$0xff]
          %v927 = vld [vmem:[%s917 + $0x48] sm:$0xff]
          %v928 = vld [vmem:[%s917 + $0x50] sm:$0xff]
          %v929 = vld [vmem:[%s917 + $0x58] sm:$0xff]
          %v930 = vld [vmem:[%s917 + $0x60] sm:$0xff]
          %v931 = vld [vmem:[%s917 + $0x68] sm:$0xff]
          %v932 = vld [vmem:[%s917 + $0x70] sm:$0xff]
          %v933 = vld [vmem:[%s917 + $0x78] sm:$0xff]
          %934 = vmatprep.subr.mxu0 0.0
          %935 = vmatpush1.msra.mxu0 %v933
          %936 = vmatprep.subr.mxu0 0.0
          %937 = vmatpush1.msra.mxu0 %v932
          %938 = vmatprep.subr.mxu0 0.0
          %939 = vmatpush1.msra.mxu0 %v931
          %940 = vmatprep.subr.mxu0 0.0
          %941 = vmatpush1.msra.mxu0 %v930
          %942 = vmatprep.subr.mxu0 0.0
          %943 = vmatpush1.msra.mxu0 %v929
          %944 = vmatprep.subr.mxu0 0.0
          %945 = vmatpush1.msra.mxu0 %v928
          %946 = vmatprep.subr.mxu0 0.0
          %947 = vmatpush1.msra.mxu0 %v927
          %948 = vmatprep.subr.mxu0 0.0
          %949 = vmatpush1.msra.mxu0 %v926
          %950 = vmatprep.subr.mxu0 0.0
          %951 = vmatpush1.msra.mxu0 %v925
          %952 = vmatprep.subr.mxu0 0.0
          %953 = vmatpush1.msra.mxu0 %v924
          %954 = vmatprep.subr.mxu0 0.0
          %955 = vmatpush1.msra.mxu0 %v923
          %956 = vmatprep.subr.mxu0 0.0
          %957 = vmatpush1.msra.mxu0 %v922
          %958 = vmatprep.subr.mxu0 0.0
          %959 = vmatpush1.msra.mxu0 %v921
          %960 = vmatprep.subr.mxu0 0.0
          %961 = vmatpush1.msra.mxu0 %v920
          %962 = vmatprep.subr.mxu0 0.0
          %963 = vmatpush1.msra.mxu0 %v919
          %964 = vmatprep.subr.mxu0 0.0
          %965 = vmatpush1.msra.mxu0 %v918
          %966 = vmatprep.subr.mxu0 0.0
          %967 = vmatpush2.msra.mxu0 0.0
          %968 = vmatprep.subr.mxu0 0.0
          %969 = vmatpush2.msra.mxu0 0.0
          %970 = vmatprep.subr.mxu0 0.0
          %971 = vmatpush2.msra.mxu0 0.0
          %972 = vmatprep.subr.mxu0 0.0
          %973 = vmatpush2.msra.mxu0 0.0
          %974 = vmatprep.subr.mxu0 0.0
          %975 = vmatpush2.msra.mxu0 0.0
          %976 = vmatprep.subr.mxu0 0.0
          %977 = vmatpush2.msra.mxu0 0.0
          %978 = vmatprep.subr.mxu0 0.0
          %979 = vmatpush2.msra.mxu0 0.0
          %980 = vmatprep.subr.mxu0 0.0
          %981 = vmatpush2.msra.mxu0 0.0
          %982 = vmatprep.subr.mxu0 0.0
          %983 = vmatpush2.msra.mxu0 0.0
          %984 = vmatprep.subr.mxu0 0.0
          %985 = vmatpush2.msra.mxu0 0.0
          %986 = vmatprep.subr.mxu0 0.0
          %987 = vmatpush2.msra.mxu0 0.0
          %988 = vmatprep.subr.mxu0 0.0
          %989 = vmatpush2.msra.mxu0 0.0
          %990 = vmatprep.subr.mxu0 0.0
          %991 = vmatpush2.msra.mxu0 0.0
          %992 = vmatprep.subr.mxu0 0.0
          %993 = vmatpush2.msra.mxu0 0.0
          %994 = vmatprep.subr.mxu0 0.0
          %995 = vmatpush2.msra.mxu0 0.0
          %996 = vmatprep.subr.mxu0 0.0
          %997 = vmatpush2.msra.mxu0 0.0
          %998 = vmatprep.mubr.f32.mxu0 0.0
          %999 = vmatmul.mubr.f32.gmra.mxu0 %v863
          %v1000 = vpop.f32.mrf.mxu0
          %v1001 = vadd.f32 0.0, %v1000
          %v1002 = vpop.f32.mrf.mxu0
          %1003 = vmatprep.mubr.f32.mxu0 0.0
          %1004 = vmatmul.mubr.f32.gmra.mxu0 %v865
          %v1005 = vpop.f32.mrf.mxu0
          %v1006 = vadd.f32 0.0, %v1005
          %v1007 = vpop.f32.mrf.mxu0
          %1008 = vmatprep.mubr.f32.mxu0 0.0
          %1009 = vmatmul.mubr.f32.gmra.mxu0 %v868
          %v1010 = vpop.f32.mrf.mxu0
          %v1011 = vadd.f32 0.0, %v1010
          %v1012 = vpop.f32.mrf.mxu0
          %1013 = vmatprep.mubr.f32.mxu0 0.0
          %1014 = vmatmul.mubr.f32.gmra.mxu0 %v870
          %v1015 = vpop.f32.mrf.mxu0
          %v1016 = vadd.f32 0.0, %v1015
          %v1017 = vpop.f32.mrf.mxu0
          %1018 = vmatprep.mubr.f32.mxu0 0.0
          %1019 = vmatmul.mubr.f32.gmra.mxu0 %v873
          %v1020 = vpop.f32.mrf.mxu0
          %v1021 = vadd.f32 0.0, %v1020
          %v1022 = vpop.f32.mrf.mxu0
          %1023 = vmatprep.mubr.f32.mxu0 0.0
          %1024 = vmatmul.mubr.f32.gmra.mxu0 %v875
          %v1025 = vpop.f32.mrf.mxu0
          %v1026 = vadd.f32 0.0, %v1025
          %v1027 = vpop.f32.mrf.mxu0
          %1028 = vmatprep.mubr.f32.mxu0 0.0
          %1029 = vmatmul.mubr.f32.gmra.mxu0 %v878
          %v1030 = vpop.f32.mrf.mxu0
          %v1031 = vadd.f32 0.0, %v1030
          %v1032 = vpop.f32.mrf.mxu0
          %1033 = vmatprep.mubr.f32.mxu0 0.0
          %1034 = vmatmul.mubr.f32.gmra.mxu0 %v880
          %v1035 = vpop.f32.mrf.mxu0
          %v1036 = vadd.f32 0.0, %v1035
          %v1037 = vpop.f32.mrf.mxu0
          %1038 = vmatprep.mubr.f32.mxu0 0.0
          %1039 = vmatmul.mubr.f32.gmra.mxu0 %v883
          %v1040 = vpop.f32.mrf.mxu0
          %v1041 = vadd.f32 0.0, %v1040
          %v1042 = vpop.f32.mrf.mxu0
          %1043 = vmatprep.mubr.f32.mxu0 0.0
          %1044 = vmatmul.mubr.f32.gmra.mxu0 %v885
          %v1045 = vpop.f32.mrf.mxu0
          %v1046 = vadd.f32 0.0, %v1045
          %v1047 = vpop.f32.mrf.mxu0
          %1048 = vmatprep.mubr.f32.mxu0 0.0
          %1049 = vmatmul.mubr.f32.gmra.mxu0 %v888
          %v1050 = vpop.f32.mrf.mxu0
          %v1051 = vadd.f32 0.0, %v1050
          %v1052 = vpop.f32.mrf.mxu0
          %1053 = vmatprep.mubr.f32.mxu0 0.0
          %1054 = vmatmul.mubr.f32.gmra.mxu0 %v890
          %v1055 = vpop.f32.mrf.mxu0
          %v1056 = vadd.f32 0.0, %v1055
          %v1057 = vpop.f32.mrf.mxu0
          %1058 = vmatprep.mubr.f32.mxu0 0.0
          %1059 = vmatmul.mubr.f32.gmra.mxu0 %v893
          %v1060 = vpop.f32.mrf.mxu0
          %v1061 = vadd.f32 0.0, %v1060
          %v1062 = vpop.f32.mrf.mxu0
          %1063 = vmatprep.mubr.f32.mxu0 0.0
          %1064 = vmatmul.mubr.f32.gmra.mxu0 %v895
          %v1065 = vpop.f32.mrf.mxu0
          %v1066 = vadd.f32 0.0, %v1065
          %v1067 = vpop.f32.mrf.mxu0
          %1068 = vmatprep.mubr.f32.mxu0 0.0
          %1069 = vmatmul.mubr.f32.gmra.mxu0 %v898
          %v1070 = vpop.f32.mrf.mxu0
          %v1071 = vadd.f32 0.0, %v1070
          %v1072 = vpop.f32.mrf.mxu0
          %1073 = vmatprep.mubr.f32.mxu0 0.0
          %1074 = vmatmul.mubr.f32.gmra.mxu0 %v900
          %v1075 = vpop.f32.mrf.mxu0
          %v1076 = vadd.f32 0.0, %v1075
          %v1077 = vpop.f32.mrf.mxu0
          %1078 = vdwg.mxu0
          %v1079 = vadd.f32 %v782, %v1001
          %v1080 = vadd.f32 %v787, %v1006
          %v1081 = vadd.f32 %v792, %v1011
          %v1082 = vadd.f32 %v797, %v1016
          %v1083 = vadd.f32 %v802, %v1021
          %v1084 = vadd.f32 %v807, %v1026
          %v1085 = vadd.f32 %v812, %v1031
          %v1086 = vadd.f32 %v817, %v1036
          %v1087 = vadd.f32 %v822, %v1041
          %v1088 = vadd.f32 %v827, %v1046
          %v1089 = vadd.f32 %v832, %v1051
          %v1090 = vadd.f32 %v837, %v1056
          %v1091 = vadd.f32 %v842, %v1061
          %v1092 = vadd.f32 %v847, %v1066
          %v1093 = vadd.f32 %v852, %v1071
          %v1094 = vadd.f32 %v857, %v1076
          %s1095 = sadd.s32 %s429, 1
          %s1096 = smul.u32 %s1095, 24
          %s1097 = scalar_lea.vmem [#allocation2], %s1096
          %v1098 = vld [vmem:[%s1097] sm:$0xff]
          %v1099 = vld [vmem:[%s1097 + $0x8] sm:$0xff]
          %v1100 = vld [vmem:[%s1097 + $0x10] sm:$0x3]
          %v1101 = vld [vmem:[%s1097 + $0x18] sm:$0xff]
          %v1102 = vld [vmem:[%s1097 + $0x20] sm:$0xff]
          %v1103 = vld [vmem:[%s1097 + $0x28] sm:$0x3]
          %v1104 = vld [vmem:[%s1097 + $0x30] sm:$0xff]
          %v1105 = vld [vmem:[%s1097 + $0x38] sm:$0xff]
          %v1106 = vld [vmem:[%s1097 + $0x40] sm:$0x3]
          %v1107 = vld [vmem:[%s1097 + $0x48] sm:$0xff]
          %v1108 = vld [vmem:[%s1097 + $0x50] sm:$0xff]
          %v1109 = vld [vmem:[%s1097 + $0x58] sm:$0x3]
          %v1110 = vld [vmem:[%s1097 + $0x60] sm:$0xff]
          %v1111 = vld [vmem:[%s1097 + $0x68] sm:$0xff]
          %v1112 = vld [vmem:[%s1097 + $0x70] sm:$0x3]
          %v1113 = vld [vmem:[%s1097 + $0x78] sm:$0xff]
          %v1114 = vld [vmem:[%s1097 + $0x80] sm:$0xff]
          %v1115 = vld [vmem:[%s1097 + $0x88] sm:$0x3]
          %v1116 = vld [vmem:[%s1097 + $0x90] sm:$0xff]
          %v1117 = vld [vmem:[%s1097 + $0x98] sm:$0xff]
          %v1118 = vld [vmem:[%s1097 + $0xa0] sm:$0x3]
          %v1119 = vld [vmem:[%s1097 + $0xa8] sm:$0xff]
          %v1120 = vld [vmem:[%s1097 + $0xb0] sm:$0xff]
          %v1121 = vld [vmem:[%s1097 + $0xb8] sm:$0x3]
          %s1122 = scalar_lea.vmem [#allocation7], 384
          %v1123 = vld [vmem:[%s1122] sm:$0xff]
          %v1124 = vld [vmem:[%s1122 + $0x8] sm:$0xff]
          %v1125 = vld [vmem:[%s1122 + $0x10] sm:$0xff]
          %v1126 = vld [vmem:[%s1122 + $0x18] sm:$0xff]
          %v1127 = vld [vmem:[%s1122 + $0x20] sm:$0xff]
          %v1128 = vld [vmem:[%s1122 + $0x28] sm:$0xff]
          %v1129 = vld [vmem:[%s1122 + $0x30] sm:$0xff]
          %v1130 = vld [vmem:[%s1122 + $0x38] sm:$0xff]
          %v1131 = vld [vmem:[%s1122 + $0x40] sm:$0xff]
          %v1132 = vld [vmem:[%s1122 + $0x48] sm:$0xff]
          %v1133 = vld [vmem:[%s1122 + $0x50] sm:$0xff]
          %v1134 = vld [vmem:[%s1122 + $0x58] sm:$0xff]
          %v1135 = vld [vmem:[%s1122 + $0x60] sm:$0xff]
          %v1136 = vld [vmem:[%s1122 + $0x68] sm:$0xff]
          %v1137 = vld [vmem:[%s1122 + $0x70] sm:$0xff]
          %v1138 = vld [vmem:[%s1122 + $0x78] sm:$0xff]
          %1139 = vmatprep.subr.mxu0 0.0
          %1140 = vmatpush1.msra.mxu0 %v1138
          %1141 = vmatprep.subr.mxu0 0.0
          %1142 = vmatpush1.msra.mxu0 %v1137
          %1143 = vmatprep.subr.mxu0 0.0
          %1144 = vmatpush1.msra.mxu0 %v1136
          %1145 = vmatprep.subr.mxu0 0.0
          %1146 = vmatpush1.msra.mxu0 %v1135
          %1147 = vmatprep.subr.mxu0 0.0
          %1148 = vmatpush1.msra.mxu0 %v1134
          %1149 = vmatprep.subr.mxu0 0.0
          %1150 = vmatpush1.msra.mxu0 %v1133
          %1151 = vmatprep.subr.mxu0 0.0
          %1152 = vmatpush1.msra.mxu0 %v1132
          %1153 = vmatprep.subr.mxu0 0.0
          %1154 = vmatpush1.msra.mxu0 %v1131
          %1155 = vmatprep.subr.mxu0 0.0
          %1156 = vmatpush1.msra.mxu0 %v1130
          %1157 = vmatprep.subr.mxu0 0.0
          %1158 = vmatpush1.msra.mxu0 %v1129
          %1159 = vmatprep.subr.mxu0 0.0
          %1160 = vmatpush1.msra.mxu0 %v1128
          %1161 = vmatprep.subr.mxu0 0.0
          %1162 = vmatpush1.msra.mxu0 %v1127
          %1163 = vmatprep.subr.mxu0 0.0
          %1164 = vmatpush1.msra.mxu0 %v1126
          %1165 = vmatprep.subr.mxu0 0.0
          %1166 = vmatpush1.msra.mxu0 %v1125
          %1167 = vmatprep.subr.mxu0 0.0
          %1168 = vmatpush1.msra.mxu0 %v1124
          %1169 = vmatprep.subr.mxu0 0.0
          %1170 = vmatpush1.msra.mxu0 %v1123
          %1171 = vmatprep.subr.mxu0 0.0
          %1172 = vmatpush2.msra.mxu0 0.0
          %1173 = vmatprep.subr.mxu0 0.0
          %1174 = vmatpush2.msra.mxu0 0.0
          %1175 = vmatprep.subr.mxu0 0.0
          %1176 = vmatpush2.msra.mxu0 0.0
          %1177 = vmatprep.subr.mxu0 0.0
          %1178 = vmatpush2.msra.mxu0 0.0
          %1179 = vmatprep.subr.mxu0 0.0
          %1180 = vmatpush2.msra.mxu0 0.0
          %1181 = vmatprep.subr.mxu0 0.0
          %1182 = vmatpush2.msra.mxu0 0.0
          %1183 = vmatprep.subr.mxu0 0.0
          %1184 = vmatpush2.msra.mxu0 0.0
          %1185 = vmatprep.subr.mxu0 0.0
          %1186 = vmatpush2.msra.mxu0 0.0
          %1187 = vmatprep.subr.mxu0 0.0
          %1188 = vmatpush2.msra.mxu0 0.0
          %1189 = vmatprep.subr.mxu0 0.0
          %1190 = vmatpush2.msra.mxu0 0.0
          %1191 = vmatprep.subr.mxu0 0.0
          %1192 = vmatpush2.msra.mxu0 0.0
          %1193 = vmatprep.subr.mxu0 0.0
          %1194 = vmatpush2.msra.mxu0 0.0
          %1195 = vmatprep.subr.mxu0 0.0
          %1196 = vmatpush2.msra.mxu0 0.0
          %1197 = vmatprep.subr.mxu0 0.0
          %1198 = vmatpush2.msra.mxu0 0.0
          %1199 = vmatprep.subr.mxu0 0.0
          %1200 = vmatpush2.msra.mxu0 0.0
          %1201 = vmatprep.subr.mxu0 0.0
          %1202 = vmatpush2.msra.mxu0 0.0
          %1203 = vmatprep.mubr.f32.mxu0 0.0
          %1204 = vmatmul.mubr.f32.gmra.mxu0 %v1098
          %v1205 = vpop.f32.mrf.mxu0
          %v1206 = vadd.f32 0.0, %v1205
          %v1207 = vpop.f32.mrf.mxu0
          %1208 = vmatprep.mubr.f32.mxu0 0.0
          %1209 = vmatmul.mubr.f32.gmra.mxu0 %v1099
          %v1210 = vpop.f32.mrf.mxu0
          %v1211 = vadd.f32 0.0, %v1210
          %v1212 = vpop.f32.mrf.mxu0
          %1213 = vmatprep.mubr.f32.mxu0 0.0
          %1214 = vmatmul.mubr.f32.gmra.mxu0 %v1101
          %v1215 = vpop.f32.mrf.mxu0
          %v1216 = vadd.f32 0.0, %v1215
          %v1217 = vpop.f32.mrf.mxu0
          %1218 = vmatprep.mubr.f32.mxu0 0.0
          %1219 = vmatmul.mubr.f32.gmra.mxu0 %v1102
          %v1220 = vpop.f32.mrf.mxu0
          %v1221 = vadd.f32 0.0, %v1220
          %v1222 = vpop.f32.mrf.mxu0
          %1223 = vmatprep.mubr.f32.mxu0 0.0
          %1224 = vmatmul.mubr.f32.gmra.mxu0 %v1104
          %v1225 = vpop.f32.mrf.mxu0
          %v1226 = vadd.f32 0.0, %v1225
          %v1227 = vpop.f32.mrf.mxu0
          %1228 = vmatprep.mubr.f32.mxu0 0.0
          %1229 = vmatmul.mubr.f32.gmra.mxu0 %v1105
          %v1230 = vpop.f32.mrf.mxu0
          %v1231 = vadd.f32 0.0, %v1230
          %v1232 = vpop.f32.mrf.mxu0
          %1233 = vmatprep.mubr.f32.mxu0 0.0
          %1234 = vmatmul.mubr.f32.gmra.mxu0 %v1107
          %v1235 = vpop.f32.mrf.mxu0
          %v1236 = vadd.f32 0.0, %v1235
          %v1237 = vpop.f32.mrf.mxu0
          %1238 = vmatprep.mubr.f32.mxu0 0.0
          %1239 = vmatmul.mubr.f32.gmra.mxu0 %v1108
          %v1240 = vpop.f32.mrf.mxu0
          %v1241 = vadd.f32 0.0, %v1240
          %v1242 = vpop.f32.mrf.mxu0
          %1243 = vmatprep.mubr.f32.mxu0 0.0
          %1244 = vmatmul.mubr.f32.gmra.mxu0 %v1110
          %v1245 = vpop.f32.mrf.mxu0
          %v1246 = vadd.f32 0.0, %v1245
          %v1247 = vpop.f32.mrf.mxu0
          %1248 = vmatprep.mubr.f32.mxu0 0.0
          %1249 = vmatmul.mubr.f32.gmra.mxu0 %v1111
          %v1250 = vpop.f32.mrf.mxu0
          %v1251 = vadd.f32 0.0, %v1250
          %v1252 = vpop.f32.mrf.mxu0
          %1253 = vmatprep.mubr.f32.mxu0 0.0
          %1254 = vmatmul.mubr.f32.gmra.mxu0 %v1113
          %v1255 = vpop.f32.mrf.mxu0
          %v1256 = vadd.f32 0.0, %v1255
          %v1257 = vpop.f32.mrf.mxu0
          %1258 = vmatprep.mubr.f32.mxu0 0.0
          %1259 = vmatmul.mubr.f32.gmra.mxu0 %v1114
          %v1260 = vpop.f32.mrf.mxu0
          %v1261 = vadd.f32 0.0, %v1260
          %v1262 = vpop.f32.mrf.mxu0
          %1263 = vmatprep.mubr.f32.mxu0 0.0
          %1264 = vmatmul.mubr.f32.gmra.mxu0 %v1116
          %v1265 = vpop.f32.mrf.mxu0
          %v1266 = vadd.f32 0.0, %v1265
          %v1267 = vpop.f32.mrf.mxu0
          %1268 = vmatprep.mubr.f32.mxu0 0.0
          %1269 = vmatmul.mubr.f32.gmra.mxu0 %v1117
          %v1270 = vpop.f32.mrf.mxu0
          %v1271 = vadd.f32 0.0, %v1270
          %v1272 = vpop.f32.mrf.mxu0
          %1273 = vmatprep.mubr.f32.mxu0 0.0
          %1274 = vmatmul.mubr.f32.gmra.mxu0 %v1119
          %v1275 = vpop.f32.mrf.mxu0
          %v1276 = vadd.f32 0.0, %v1275
          %v1277 = vpop.f32.mrf.mxu0
          %1278 = vmatprep.mubr.f32.mxu0 0.0
          %1279 = vmatmul.mubr.f32.gmra.mxu0 %v1120
          %v1280 = vpop.f32.mrf.mxu0
          %v1281 = vadd.f32 0.0, %v1280
          %v1282 = vpop.f32.mrf.mxu0
          %1283 = vdwg.mxu0
          %v1284 = vadd.f32 %v1079, %v1206
          %v1285 = vadd.f32 %v1080, %v1211
          %v1286 = vadd.f32 %v1081, %v1216
          %v1287 = vadd.f32 %v1082, %v1221
          %v1288 = vadd.f32 %v1083, %v1226
          %v1289 = vadd.f32 %v1084, %v1231
          %v1290 = vadd.f32 %v1085, %v1236
          %v1291 = vadd.f32 %v1086, %v1241
          %v1292 = vadd.f32 %v1087, %v1246
          %v1293 = vadd.f32 %v1088, %v1251
          %v1294 = vadd.f32 %v1089, %v1256
          %v1295 = vadd.f32 %v1090, %v1261
          %v1296 = vadd.f32 %v1091, %v1266
          %v1297 = vadd.f32 %v1092, %v1271
          %v1298 = vadd.f32 %v1093, %v1276
          %v1299 = vadd.f32 %v1094, %v1281
          %v1324 = vrot.slane %v1098, 1
          %v1325 = vrot.slane %v1099, 1
          %v1326 = vsel %vm496, %v1324, %v1325
          %v1327 = vrot.slane %v1100, 1
          %v1328 = vsel %vm496, %v1325, %v1327
          %v1329 = vrot.slane %v1101, 1
          %v1330 = vrot.slane %v1102, 1
          %v1331 = vsel %vm496, %v1329, %v1330
          %v1332 = vrot.slane %v1103, 1
          %v1333 = vsel %vm496, %v1330, %v1332
          %v1334 = vrot.slane %v1104, 1
          %v1335 = vrot.slane %v1105, 1
          %v1336 = vsel %vm496, %v1334, %v1335
          %v1337 = vrot.slane %v1106, 1
          %v1338 = vsel %vm496, %v1335, %v1337
          %v1339 = vrot.slane %v1107, 1
          %v1340 = vrot.slane %v1108, 1
          %v1341 = vsel %vm496, %v1339, %v1340
          %v1342 = vrot.slane %v1109, 1
          %v1343 = vsel %vm496, %v1340, %v1342
          %v1344 = vrot.slane %v1110, 1
          %v1345 = vrot.slane %v1111, 1
          %v1346 = vsel %vm496, %v1344, %v1345
          %v1347 = vrot.slane %v1112, 1
          %v1348 = vsel %vm496, %v1345, %v1347
          %v1349 = vrot.slane %v1113, 1
          %v1350 = vrot.slane %v1114, 1
          %v1351 = vsel %vm496, %v1349, %v1350
          %v1352 = vrot.slane %v1115, 1
          %v1353 = vsel %vm496, %v1350, %v1352
          %v1354 = vrot.slane %v1116, 1
          %v1355 = vrot.slane %v1117, 1
          %v1356 = vsel %vm496, %v1354, %v1355
          %v1357 = vrot.slane %v1118, 1
          %v1358 = vsel %vm496, %v1355, %v1357
          %v1359 = vrot.slane %v1119, 1
          %v1360 = vrot.slane %v1120, 1
          %v1361 = vsel %vm496, %v1359, %v1360
          %v1362 = vrot.slane %v1121, 1
          %v1363 = vsel %vm496, %v1360, %v1362
          %s1380 = scalar_lea.vmem [#allocation7], 512
          %v1381 = vld [vmem:[%s1380] sm:$0xff]
          %v1382 = vld [vmem:[%s1380 + $0x8] sm:$0xff]
          %v1383 = vld [vmem:[%s1380 + $0x10] sm:$0xff]
          %v1384 = vld [vmem:[%s1380 + $0x18] sm:$0xff]
          %v1385 = vld [vmem:[%s1380 + $0x20] sm:$0xff]
          %v1386 = vld [vmem:[%s1380 + $0x28] sm:$0xff]
          %v1387 = vld [vmem:[%s1380 + $0x30] sm:$0xff]
          %v1388 = vld [vmem:[%s1380 + $0x38] sm:$0xff]
          %v1389 = vld [vmem:[%s1380 + $0x40] sm:$0xff]
          %v1390 = vld [vmem:[%s1380 + $0x48] sm:$0xff]
          %v1391 = vld [vmem:[%s1380 + $0x50] sm:$0xff]
          %v1392 = vld [vmem:[%s1380 + $0x58] sm:$0xff]
          %v1393 = vld [vmem:[%s1380 + $0x60] sm:$0xff]
          %v1394 = vld [vmem:[%s1380 + $0x68] sm:$0xff]
          %v1395 = vld [vmem:[%s1380 + $0x70] sm:$0xff]
          %v1396 = vld [vmem:[%s1380 + $0x78] sm:$0xff]
          %1397 = vmatprep.subr.mxu0 0.0
          %1398 = vmatpush1.msra.mxu0 %v1396
          %1399 = vmatprep.subr.mxu0 0.0
          %1400 = vmatpush1.msra.mxu0 %v1395
          %1401 = vmatprep.subr.mxu0 0.0
          %1402 = vmatpush1.msra.mxu0 %v1394
          %1403 = vmatprep.subr.mxu0 0.0
          %1404 = vmatpush1.msra.mxu0 %v1393
          %1405 = vmatprep.subr.mxu0 0.0
          %1406 = vmatpush1.msra.mxu0 %v1392
          %1407 = vmatprep.subr.mxu0 0.0
          %1408 = vmatpush1.msra.mxu0 %v1391
          %1409 = vmatprep.subr.mxu0 0.0
          %1410 = vmatpush1.msra.mxu0 %v1390
          %1411 = vmatprep.subr.mxu0 0.0
          %1412 = vmatpush1.msra.mxu0 %v1389
          %1413 = vmatprep.subr.mxu0 0.0
          %1414 = vmatpush1.msra.mxu0 %v1388
          %1415 = vmatprep.subr.mxu0 0.0
          %1416 = vmatpush1.msra.mxu0 %v1387
          %1417 = vmatprep.subr.mxu0 0.0
          %1418 = vmatpush1.msra.mxu0 %v1386
          %1419 = vmatprep.subr.mxu0 0.0
          %1420 = vmatpush1.msra.mxu0 %v1385
          %1421 = vmatprep.subr.mxu0 0.0
          %1422 = vmatpush1.msra.mxu0 %v1384
          %1423 = vmatprep.subr.mxu0 0.0
          %1424 = vmatpush1.msra.mxu0 %v1383
          %1425 = vmatprep.subr.mxu0 0.0
          %1426 = vmatpush1.msra.mxu0 %v1382
          %1427 = vmatprep.subr.mxu0 0.0
          %1428 = vmatpush1.msra.mxu0 %v1381
          %1429 = vmatprep.subr.mxu0 0.0
          %1430 = vmatpush2.msra.mxu0 0.0
          %1431 = vmatprep.subr.mxu0 0.0
          %1432 = vmatpush2.msra.mxu0 0.0
          %1433 = vmatprep.subr.mxu0 0.0
          %1434 = vmatpush2.msra.mxu0 0.0
          %1435 = vmatprep.subr.mxu0 0.0
          %1436 = vmatpush2.msra.mxu0 0.0
          %1437 = vmatprep.subr.mxu0 0.0
          %1438 = vmatpush2.msra.mxu0 0.0
          %1439 = vmatprep.subr.mxu0 0.0
          %1440 = vmatpush2.msra.mxu0 0.0
          %1441 = vmatprep.subr.mxu0 0.0
          %1442 = vmatpush2.msra.mxu0 0.0
          %1443 = vmatprep.subr.mxu0 0.0
          %1444 = vmatpush2.msra.mxu0 0.0
          %1445 = vmatprep.subr.mxu0 0.0
          %1446 = vmatpush2.msra.mxu0 0.0
          %1447 = vmatprep.subr.mxu0 0.0
          %1448 = vmatpush2.msra.mxu0 0.0
          %1449 = vmatprep.subr.mxu0 0.0
          %1450 = vmatpush2.msra.mxu0 0.0
          %1451 = vmatprep.subr.mxu0 0.0
          %1452 = vmatpush2.msra.mxu0 0.0
          %1453 = vmatprep.subr.mxu0 0.0
          %1454 = vmatpush2.msra.mxu0 0.0
          %1455 = vmatprep.subr.mxu0 0.0
          %1456 = vmatpush2.msra.mxu0 0.0
          %1457 = vmatprep.subr.mxu0 0.0
          %1458 = vmatpush2.msra.mxu0 0.0
          %1459 = vmatprep.subr.mxu0 0.0
          %1460 = vmatpush2.msra.mxu0 0.0
          %1461 = vmatprep.mubr.f32.mxu0 0.0
          %1462 = vmatmul.mubr.f32.gmra.mxu0 %v1326
          %v1463 = vpop.f32.mrf.mxu0
          %v1464 = vadd.f32 0.0, %v1463
          %v1465 = vpop.f32.mrf.mxu0
          %1466 = vmatprep.mubr.f32.mxu0 0.0
          %1467 = vmatmul.mubr.f32.gmra.mxu0 %v1328
          %v1468 = vpop.f32.mrf.mxu0
          %v1469 = vadd.f32 0.0, %v1468
          %v1470 = vpop.f32.mrf.mxu0
          %1471 = vmatprep.mubr.f32.mxu0 0.0
          %1472 = vmatmul.mubr.f32.gmra.mxu0 %v1331
          %v1473 = vpop.f32.mrf.mxu0
          %v1474 = vadd.f32 0.0, %v1473
          %v1475 = vpop.f32.mrf.mxu0
          %1476 = vmatprep.mubr.f32.mxu0 0.0
          %1477 = vmatmul.mubr.f32.gmra.mxu0 %v1333
          %v1478 = vpop.f32.mrf.mxu0
          %v1479 = vadd.f32 0.0, %v1478
          %v1480 = vpop.f32.mrf.mxu0
          %1481 = vmatprep.mubr.f32.mxu0 0.0
          %1482 = vmatmul.mubr.f32.gmra.mxu0 %v1336
          %v1483 = vpop.f32.mrf.mxu0
          %v1484 = vadd.f32 0.0, %v1483
          %v1485 = vpop.f32.mrf.mxu0
          %1486 = vmatprep.mubr.f32.mxu0 0.0
          %1487 = vmatmul.mubr.f32.gmra.mxu0 %v1338
          %v1488 = vpop.f32.mrf.mxu0
          %v1489 = vadd.f32 0.0, %v1488
          %v1490 = vpop.f32.mrf.mxu0
          %1491 = vmatprep.mubr.f32.mxu0 0.0
          %1492 = vmatmul.mubr.f32.gmra.mxu0 %v1341
          %v1493 = vpop.f32.mrf.mxu0
          %v1494 = vadd.f32 0.0, %v1493
          %v1495 = vpop.f32.mrf.mxu0
          %1496 = vmatprep.mubr.f32.mxu0 0.0
          %1497 = vmatmul.mubr.f32.gmra.mxu0 %v1343
          %v1498 = vpop.f32.mrf.mxu0
          %v1499 = vadd.f32 0.0, %v1498
          %v1500 = vpop.f32.mrf.mxu0
          %1501 = vmatprep.mubr.f32.mxu0 0.0
          %1502 = vmatmul.mubr.f32.gmra.mxu0 %v1346
          %v1503 = vpop.f32.mrf.mxu0
          %v1504 = vadd.f32 0.0, %v1503
          %v1505 = vpop.f32.mrf.mxu0
          %1506 = vmatprep.mubr.f32.mxu0 0.0
          %1507 = vmatmul.mubr.f32.gmra.mxu0 %v1348
          %v1508 = vpop.f32.mrf.mxu0
          %v1509 = vadd.f32 0.0, %v1508
          %v1510 = vpop.f32.mrf.mxu0
          %1511 = vmatprep.mubr.f32.mxu0 0.0
          %1512 = vmatmul.mubr.f32.gmra.mxu0 %v1351
          %v1513 = vpop.f32.mrf.mxu0
          %v1514 = vadd.f32 0.0, %v1513
          %v1515 = vpop.f32.mrf.mxu0
          %1516 = vmatprep.mubr.f32.mxu0 0.0
          %1517 = vmatmul.mubr.f32.gmra.mxu0 %v1353
          %v1518 = vpop.f32.mrf.mxu0
          %v1519 = vadd.f32 0.0, %v1518
          %v1520 = vpop.f32.mrf.mxu0
          %1521 = vmatprep.mubr.f32.mxu0 0.0
          %1522 = vmatmul.mubr.f32.gmra.mxu0 %v1356
          %v1523 = vpop.f32.mrf.mxu0
          %v1524 = vadd.f32 0.0, %v1523
          %v1525 = vpop.f32.mrf.mxu0
          %1526 = vmatprep.mubr.f32.mxu0 0.0
          %1527 = vmatmul.mubr.f32.gmra.mxu0 %v1358
          %v1528 = vpop.f32.mrf.mxu0
          %v1529 = vadd.f32 0.0, %v1528
          %v1530 = vpop.f32.mrf.mxu0
          %1531 = vmatprep.mubr.f32.mxu0 0.0
          %1532 = vmatmul.mubr.f32.gmra.mxu0 %v1361
          %v1533 = vpop.f32.mrf.mxu0
          %v1534 = vadd.f32 0.0, %v1533
          %v1535 = vpop.f32.mrf.mxu0
          %1536 = vmatprep.mubr.f32.mxu0 0.0
          %1537 = vmatmul.mubr.f32.gmra.mxu0 %v1363
          %v1538 = vpop.f32.mrf.mxu0
          %v1539 = vadd.f32 0.0, %v1538
          %v1540 = vpop.f32.mrf.mxu0
          %1541 = vdwg.mxu0
          %v1542 = vadd.f32 %v1284, %v1464
          %v1543 = vadd.f32 %v1285, %v1469
          %v1544 = vadd.f32 %v1286, %v1474
          %v1545 = vadd.f32 %v1287, %v1479
          %v1546 = vadd.f32 %v1288, %v1484
          %v1547 = vadd.f32 %v1289, %v1489
          %v1548 = vadd.f32 %v1290, %v1494
          %v1549 = vadd.f32 %v1291, %v1499
          %v1550 = vadd.f32 %v1292, %v1504
          %v1551 = vadd.f32 %v1293, %v1509
          %v1552 = vadd.f32 %v1294, %v1514
          %v1553 = vadd.f32 %v1295, %v1519
          %v1554 = vadd.f32 %v1296, %v1524
          %v1555 = vadd.f32 %v1297, %v1529
          %v1556 = vadd.f32 %v1298, %v1534
          %v1557 = vadd.f32 %v1299, %v1539
          %v1558 = vrot.slane %v1098, 2
          %v1559 = vrot.slane %v1099, 2
          %v1560 = vsel %vm860, %v1558, %v1559
          %v1561 = vrot.slane %v1100, 2
          %v1562 = vsel %vm860, %v1559, %v1561
          %v1563 = vrot.slane %v1101, 2
          %v1564 = vrot.slane %v1102, 2
          %v1565 = vsel %vm860, %v1563, %v1564
          %v1566 = vrot.slane %v1103, 2
          %v1567 = vsel %vm860, %v1564, %v1566
          %v1568 = vrot.slane %v1104, 2
          %v1569 = vrot.slane %v1105, 2
          %v1570 = vsel %vm860, %v1568, %v1569
          %v1571 = vrot.slane %v1106, 2
          %v1572 = vsel %vm860, %v1569, %v1571
          %v1573 = vrot.slane %v1107, 2
          %v1574 = vrot.slane %v1108, 2
          %v1575 = vsel %vm860, %v1573, %v1574
          %v1576 = vrot.slane %v1109, 2
          %v1577 = vsel %vm860, %v1574, %v1576
          %v1578 = vrot.slane %v1110, 2
          %v1579 = vrot.slane %v1111, 2
          %v1580 = vsel %vm860, %v1578, %v1579
          %v1581 = vrot.slane %v1112, 2
          %v1582 = vsel %vm860, %v1579, %v1581
          %v1583 = vrot.slane %v1113, 2
          %v1584 = vrot.slane %v1114, 2
          %v1585 = vsel %vm860, %v1583, %v1584
          %v1586 = vrot.slane %v1115, 2
          %v1587 = vsel %vm860, %v1584, %v1586
          %v1588 = vrot.slane %v1116, 2
          %v1589 = vrot.slane %v1117, 2
          %v1590 = vsel %vm860, %v1588, %v1589
          %v1591 = vrot.slane %v1118, 2
          %v1592 = vsel %vm860, %v1589, %v1591
          %v1593 = vrot.slane %v1119, 2
          %v1594 = vrot.slane %v1120, 2
          %v1595 = vsel %vm860, %v1593, %v1594
          %v1596 = vrot.slane %v1121, 2
          %v1597 = vsel %vm860, %v1594, %v1596
          %s1614 = scalar_lea.vmem [#allocation7], 640
          %v1615 = vld [vmem:[%s1614] sm:$0xff]
          %v1616 = vld [vmem:[%s1614 + $0x8] sm:$0xff]
          %v1617 = vld [vmem:[%s1614 + $0x10] sm:$0xff]
          %v1618 = vld [vmem:[%s1614 + $0x18] sm:$0xff]
          %v1619 = vld [vmem:[%s1614 + $0x20] sm:$0xff]
          %v1620 = vld [vmem:[%s1614 + $0x28] sm:$0xff]
          %v1621 = vld [vmem:[%s1614 + $0x30] sm:$0xff]
          %v1622 = vld [vmem:[%s1614 + $0x38] sm:$0xff]
          %v1623 = vld [vmem:[%s1614 + $0x40] sm:$0xff]
          %v1624 = vld [vmem:[%s1614 + $0x48] sm:$0xff]
          %v1625 = vld [vmem:[%s1614 + $0x50] sm:$0xff]
          %v1626 = vld [vmem:[%s1614 + $0x58] sm:$0xff]
          %v1627 = vld [vmem:[%s1614 + $0x60] sm:$0xff]
          %v1628 = vld [vmem:[%s1614 + $0x68] sm:$0xff]
          %v1629 = vld [vmem:[%s1614 + $0x70] sm:$0xff]
          %v1630 = vld [vmem:[%s1614 + $0x78] sm:$0xff]
          %1631 = vmatprep.subr.mxu0 0.0
          %1632 = vmatpush1.msra.mxu0 %v1630
          %1633 = vmatprep.subr.mxu0 0.0
          %1634 = vmatpush1.msra.mxu0 %v1629
          %1635 = vmatprep.subr.mxu0 0.0
          %1636 = vmatpush1.msra.mxu0 %v1628
          %1637 = vmatprep.subr.mxu0 0.0
          %1638 = vmatpush1.msra.mxu0 %v1627
          %1639 = vmatprep.subr.mxu0 0.0
          %1640 = vmatpush1.msra.mxu0 %v1626
          %1641 = vmatprep.subr.mxu0 0.0
          %1642 = vmatpush1.msra.mxu0 %v1625
          %1643 = vmatprep.subr.mxu0 0.0
          %1644 = vmatpush1.msra.mxu0 %v1624
          %1645 = vmatprep.subr.mxu0 0.0
          %1646 = vmatpush1.msra.mxu0 %v1623
          %1647 = vmatprep.subr.mxu0 0.0
          %1648 = vmatpush1.msra.mxu0 %v1622
          %1649 = vmatprep.subr.mxu0 0.0
          %1650 = vmatpush1.msra.mxu0 %v1621
          %1651 = vmatprep.subr.mxu0 0.0
          %1652 = vmatpush1.msra.mxu0 %v1620
          %1653 = vmatprep.subr.mxu0 0.0
          %1654 = vmatpush1.msra.mxu0 %v1619
          %1655 = vmatprep.subr.mxu0 0.0
          %1656 = vmatpush1.msra.mxu0 %v1618
          %1657 = vmatprep.subr.mxu0 0.0
          %1658 = vmatpush1.msra.mxu0 %v1617
          %1659 = vmatprep.subr.mxu0 0.0
          %1660 = vmatpush1.msra.mxu0 %v1616
          %1661 = vmatprep.subr.mxu0 0.0
          %1662 = vmatpush1.msra.mxu0 %v1615
          %1663 = vmatprep.subr.mxu0 0.0
          %1664 = vmatpush2.msra.mxu0 0.0
          %1665 = vmatprep.subr.mxu0 0.0
          %1666 = vmatpush2.msra.mxu0 0.0
          %1667 = vmatprep.subr.mxu0 0.0
          %1668 = vmatpush2.msra.mxu0 0.0
          %1669 = vmatprep.subr.mxu0 0.0
          %1670 = vmatpush2.msra.mxu0 0.0
          %1671 = vmatprep.subr.mxu0 0.0
          %1672 = vmatpush2.msra.mxu0 0.0
          %1673 = vmatprep.subr.mxu0 0.0
          %1674 = vmatpush2.msra.mxu0 0.0
          %1675 = vmatprep.subr.mxu0 0.0
          %1676 = vmatpush2.msra.mxu0 0.0
          %1677 = vmatprep.subr.mxu0 0.0
          %1678 = vmatpush2.msra.mxu0 0.0
          %1679 = vmatprep.subr.mxu0 0.0
          %1680 = vmatpush2.msra.mxu0 0.0
          %1681 = vmatprep.subr.mxu0 0.0
          %1682 = vmatpush2.msra.mxu0 0.0
          %1683 = vmatprep.subr.mxu0 0.0
          %1684 = vmatpush2.msra.mxu0 0.0
          %1685 = vmatprep.subr.mxu0 0.0
          %1686 = vmatpush2.msra.mxu0 0.0
          %1687 = vmatprep.subr.mxu0 0.0
          %1688 = vmatpush2.msra.mxu0 0.0
          %1689 = vmatprep.subr.mxu0 0.0
          %1690 = vmatpush2.msra.mxu0 0.0
          %1691 = vmatprep.subr.mxu0 0.0
          %1692 = vmatpush2.msra.mxu0 0.0
          %1693 = vmatprep.subr.mxu0 0.0
          %1694 = vmatpush2.msra.mxu0 0.0
          %1695 = vmatprep.mubr.f32.mxu0 0.0
          %1696 = vmatmul.mubr.f32.gmra.mxu0 %v1560
          %v1697 = vpop.f32.mrf.mxu0
          %v1698 = vadd.f32 0.0, %v1697
          %v1699 = vpop.f32.mrf.mxu0
          %1700 = vmatprep.mubr.f32.mxu0 0.0
          %1701 = vmatmul.mubr.f32.gmra.mxu0 %v1562
          %v1702 = vpop.f32.mrf.mxu0
          %v1703 = vadd.f32 0.0, %v1702
          %v1704 = vpop.f32.mrf.mxu0
          %1705 = vmatprep.mubr.f32.mxu0 0.0
          %1706 = vmatmul.mubr.f32.gmra.mxu0 %v1565
          %v1707 = vpop.f32.mrf.mxu0
          %v1708 = vadd.f32 0.0, %v1707
          %v1709 = vpop.f32.mrf.mxu0
          %1710 = vmatprep.mubr.f32.mxu0 0.0
          %1711 = vmatmul.mubr.f32.gmra.mxu0 %v1567
          %v1712 = vpop.f32.mrf.mxu0
          %v1713 = vadd.f32 0.0, %v1712
          %v1714 = vpop.f32.mrf.mxu0
          %1715 = vmatprep.mubr.f32.mxu0 0.0
          %1716 = vmatmul.mubr.f32.gmra.mxu0 %v1570
          %v1717 = vpop.f32.mrf.mxu0
          %v1718 = vadd.f32 0.0, %v1717
          %v1719 = vpop.f32.mrf.mxu0
          %1720 = vmatprep.mubr.f32.mxu0 0.0
          %1721 = vmatmul.mubr.f32.gmra.mxu0 %v1572
          %v1722 = vpop.f32.mrf.mxu0
          %v1723 = vadd.f32 0.0, %v1722
          %v1724 = vpop.f32.mrf.mxu0
          %1725 = vmatprep.mubr.f32.mxu0 0.0
          %1726 = vmatmul.mubr.f32.gmra.mxu0 %v1575
          %v1727 = vpop.f32.mrf.mxu0
          %v1728 = vadd.f32 0.0, %v1727
          %v1729 = vpop.f32.mrf.mxu0
          %1730 = vmatprep.mubr.f32.mxu0 0.0
          %1731 = vmatmul.mubr.f32.gmra.mxu0 %v1577
          %v1732 = vpop.f32.mrf.mxu0
          %v1733 = vadd.f32 0.0, %v1732
          %v1734 = vpop.f32.mrf.mxu0
          %1735 = vmatprep.mubr.f32.mxu0 0.0
          %1736 = vmatmul.mubr.f32.gmra.mxu0 %v1580
          %v1737 = vpop.f32.mrf.mxu0
          %v1738 = vadd.f32 0.0, %v1737
          %v1739 = vpop.f32.mrf.mxu0
          %1740 = vmatprep.mubr.f32.mxu0 0.0
          %1741 = vmatmul.mubr.f32.gmra.mxu0 %v1582
          %v1742 = vpop.f32.mrf.mxu0
          %v1743 = vadd.f32 0.0, %v1742
          %v1744 = vpop.f32.mrf.mxu0
          %1745 = vmatprep.mubr.f32.mxu0 0.0
          %1746 = vmatmul.mubr.f32.gmra.mxu0 %v1585
          %v1747 = vpop.f32.mrf.mxu0
          %v1748 = vadd.f32 0.0, %v1747
          %v1749 = vpop.f32.mrf.mxu0
          %1750 = vmatprep.mubr.f32.mxu0 0.0
          %1751 = vmatmul.mubr.f32.gmra.mxu0 %v1587
          %v1752 = vpop.f32.mrf.mxu0
          %v1753 = vadd.f32 0.0, %v1752
          %v1754 = vpop.f32.mrf.mxu0
          %1755 = vmatprep.mubr.f32.mxu0 0.0
          %1756 = vmatmul.mubr.f32.gmra.mxu0 %v1590
          %v1757 = vpop.f32.mrf.mxu0
          %v1758 = vadd.f32 0.0, %v1757
          %v1759 = vpop.f32.mrf.mxu0
          %1760 = vmatprep.mubr.f32.mxu0 0.0
          %1761 = vmatmul.mubr.f32.gmra.mxu0 %v1592
          %v1762 = vpop.f32.mrf.mxu0
          %v1763 = vadd.f32 0.0, %v1762
          %v1764 = vpop.f32.mrf.mxu0
          %1765 = vmatprep.mubr.f32.mxu0 0.0
          %1766 = vmatmul.mubr.f32.gmra.mxu0 %v1595
          %v1767 = vpop.f32.mrf.mxu0
          %v1768 = vadd.f32 0.0, %v1767
          %v1769 = vpop.f32.mrf.mxu0
          %1770 = vmatprep.mubr.f32.mxu0 0.0
          %1771 = vmatmul.mubr.f32.gmra.mxu0 %v1597
          %v1772 = vpop.f32.mrf.mxu0
          %v1773 = vadd.f32 0.0, %v1772
          %v1774 = vpop.f32.mrf.mxu0
          %1775 = vdwg.mxu0
          %v1776 = vadd.f32 %v1542, %v1698
          %v1777 = vadd.f32 %v1543, %v1703
          %v1778 = vadd.f32 %v1544, %v1708
          %v1779 = vadd.f32 %v1545, %v1713
          %v1780 = vadd.f32 %v1546, %v1718
          %v1781 = vadd.f32 %v1547, %v1723
          %v1782 = vadd.f32 %v1548, %v1728
          %v1783 = vadd.f32 %v1549, %v1733
          %v1784 = vadd.f32 %v1550, %v1738
          %v1785 = vadd.f32 %v1551, %v1743
          %v1786 = vadd.f32 %v1552, %v1748
          %v1787 = vadd.f32 %v1553, %v1753
          %v1788 = vadd.f32 %v1554, %v1758
          %v1789 = vadd.f32 %v1555, %v1763
          %v1790 = vadd.f32 %v1556, %v1768
          %v1791 = vadd.f32 %v1557, %v1773
          %s1792 = sadd.s32 %s429, 2
          %s1793 = smul.u32 %s1792, 24
          %s1794 = scalar_lea.vmem [#allocation2], %s1793
          %v1795 = vld [vmem:[%s1794] sm:$0xff]
          %v1796 = vld [vmem:[%s1794 + $0x8] sm:$0xff]
          %v1797 = vld [vmem:[%s1794 + $0x10] sm:$0x3]
          %v1798 = vld [vmem:[%s1794 + $0x18] sm:$0xff]
          %v1799 = vld [vmem:[%s1794 + $0x20] sm:$0xff]
          %v1800 = vld [vmem:[%s1794 + $0x28] sm:$0x3]
          %v1801 = vld [vmem:[%s1794 + $0x30] sm:$0xff]
          %v1802 = vld [vmem:[%s1794 + $0x38] sm:$0xff]
          %v1803 = vld [vmem:[%s1794 + $0x40] sm:$0x3]
          %v1804 = vld [vmem:[%s1794 + $0x48] sm:$0xff]
          %v1805 = vld [vmem:[%s1794 + $0x50] sm:$0xff]
          %v1806 = vld [vmem:[%s1794 + $0x58] sm:$0x3]
          %v1807 = vld [vmem:[%s1794 + $0x60] sm:$0xff]
          %v1808 = vld [vmem:[%s1794 + $0x68] sm:$0xff]
          %v1809 = vld [vmem:[%s1794 + $0x70] sm:$0x3]
          %v1810 = vld [vmem:[%s1794 + $0x78] sm:$0xff]
          %v1811 = vld [vmem:[%s1794 + $0x80] sm:$0xff]
          %v1812 = vld [vmem:[%s1794 + $0x88] sm:$0x3]
          %v1813 = vld [vmem:[%s1794 + $0x90] sm:$0xff]
          %v1814 = vld [vmem:[%s1794 + $0x98] sm:$0xff]
          %v1815 = vld [vmem:[%s1794 + $0xa0] sm:$0x3]
          %v1816 = vld [vmem:[%s1794 + $0xa8] sm:$0xff]
          %v1817 = vld [vmem:[%s1794 + $0xb0] sm:$0xff]
          %v1818 = vld [vmem:[%s1794 + $0xb8] sm:$0x3]
          %s1819 = scalar_lea.vmem [#allocation7], 768
          %v1820 = vld [vmem:[%s1819] sm:$0xff]
          %v1821 = vld [vmem:[%s1819 + $0x8] sm:$0xff]
          %v1822 = vld [vmem:[%s1819 + $0x10] sm:$0xff]
          %v1823 = vld [vmem:[%s1819 + $0x18] sm:$0xff]
          %v1824 = vld [vmem:[%s1819 + $0x20] sm:$0xff]
          %v1825 = vld [vmem:[%s1819 + $0x28] sm:$0xff]
          %v1826 = vld [vmem:[%s1819 + $0x30] sm:$0xff]
          %v1827 = vld [vmem:[%s1819 + $0x38] sm:$0xff]
          %v1828 = vld [vmem:[%s1819 + $0x40] sm:$0xff]
          %v1829 = vld [vmem:[%s1819 + $0x48] sm:$0xff]
          %v1830 = vld [vmem:[%s1819 + $0x50] sm:$0xff]
          %v1831 = vld [vmem:[%s1819 + $0x58] sm:$0xff]
          %v1832 = vld [vmem:[%s1819 + $0x60] sm:$0xff]
          %v1833 = vld [vmem:[%s1819 + $0x68] sm:$0xff]
          %v1834 = vld [vmem:[%s1819 + $0x70] sm:$0xff]
          %v1835 = vld [vmem:[%s1819 + $0x78] sm:$0xff]
          %1836 = vmatprep.subr.mxu0 0.0
          %1837 = vmatpush1.msra.mxu0 %v1835
          %1838 = vmatprep.subr.mxu0 0.0
          %1839 = vmatpush1.msra.mxu0 %v1834
          %1840 = vmatprep.subr.mxu0 0.0
          %1841 = vmatpush1.msra.mxu0 %v1833
          %1842 = vmatprep.subr.mxu0 0.0
          %1843 = vmatpush1.msra.mxu0 %v1832
          %1844 = vmatprep.subr.mxu0 0.0
          %1845 = vmatpush1.msra.mxu0 %v1831
          %1846 = vmatprep.subr.mxu0 0.0
          %1847 = vmatpush1.msra.mxu0 %v1830
          %1848 = vmatprep.subr.mxu0 0.0
          %1849 = vmatpush1.msra.mxu0 %v1829
          %1850 = vmatprep.subr.mxu0 0.0
          %1851 = vmatpush1.msra.mxu0 %v1828
          %1852 = vmatprep.subr.mxu0 0.0
          %1853 = vmatpush1.msra.mxu0 %v1827
          %1854 = vmatprep.subr.mxu0 0.0
          %1855 = vmatpush1.msra.mxu0 %v1826
          %1856 = vmatprep.subr.mxu0 0.0
          %1857 = vmatpush1.msra.mxu0 %v1825
          %1858 = vmatprep.subr.mxu0 0.0
          %1859 = vmatpush1.msra.mxu0 %v1824
          %1860 = vmatprep.subr.mxu0 0.0
          %1861 = vmatpush1.msra.mxu0 %v1823
          %1862 = vmatprep.subr.mxu0 0.0
          %1863 = vmatpush1.msra.mxu0 %v1822
          %1864 = vmatprep.subr.mxu0 0.0
          %1865 = vmatpush1.msra.mxu0 %v1821
          %1866 = vmatprep.subr.mxu0 0.0
          %1867 = vmatpush1.msra.mxu0 %v1820
          %1868 = vmatprep.subr.mxu0 0.0
          %1869 = vmatpush2.msra.mxu0 0.0
          %1870 = vmatprep.subr.mxu0 0.0
          %1871 = vmatpush2.msra.mxu0 0.0
          %1872 = vmatprep.subr.mxu0 0.0
          %1873 = vmatpush2.msra.mxu0 0.0
          %1874 = vmatprep.subr.mxu0 0.0
          %1875 = vmatpush2.msra.mxu0 0.0
          %1876 = vmatprep.subr.mxu0 0.0
          %1877 = vmatpush2.msra.mxu0 0.0
          %1878 = vmatprep.subr.mxu0 0.0
          %1879 = vmatpush2.msra.mxu0 0.0
          %1880 = vmatprep.subr.mxu0 0.0
          %1881 = vmatpush2.msra.mxu0 0.0
          %1882 = vmatprep.subr.mxu0 0.0
          %1883 = vmatpush2.msra.mxu0 0.0
          %1884 = vmatprep.subr.mxu0 0.0
          %1885 = vmatpush2.msra.mxu0 0.0
          %1886 = vmatprep.subr.mxu0 0.0
          %1887 = vmatpush2.msra.mxu0 0.0
          %1888 = vmatprep.subr.mxu0 0.0
          %1889 = vmatpush2.msra.mxu0 0.0
          %1890 = vmatprep.subr.mxu0 0.0
          %1891 = vmatpush2.msra.mxu0 0.0
          %1892 = vmatprep.subr.mxu0 0.0
          %1893 = vmatpush2.msra.mxu0 0.0
          %1894 = vmatprep.subr.mxu0 0.0
          %1895 = vmatpush2.msra.mxu0 0.0
          %1896 = vmatprep.subr.mxu0 0.0
          %1897 = vmatpush2.msra.mxu0 0.0
          %1898 = vmatprep.subr.mxu0 0.0
          %1899 = vmatpush2.msra.mxu0 0.0
          %1900 = vmatprep.mubr.f32.mxu0 0.0
          %1901 = vmatmul.mubr.f32.gmra.mxu0 %v1795
          %v1902 = vpop.f32.mrf.mxu0
          %v1903 = vadd.f32 0.0, %v1902
          %v1904 = vpop.f32.mrf.mxu0
          %1905 = vmatprep.mubr.f32.mxu0 0.0
          %1906 = vmatmul.mubr.f32.gmra.mxu0 %v1796
          %v1907 = vpop.f32.mrf.mxu0
          %v1908 = vadd.f32 0.0, %v1907
          %v1909 = vpop.f32.mrf.mxu0
          %1910 = vmatprep.mubr.f32.mxu0 0.0
          %1911 = vmatmul.mubr.f32.gmra.mxu0 %v1798
          %v1912 = vpop.f32.mrf.mxu0
          %v1913 = vadd.f32 0.0, %v1912
          %v1914 = vpop.f32.mrf.mxu0
          %1915 = vmatprep.mubr.f32.mxu0 0.0
          %1916 = vmatmul.mubr.f32.gmra.mxu0 %v1799
          %v1917 = vpop.f32.mrf.mxu0
          %v1918 = vadd.f32 0.0, %v1917
          %v1919 = vpop.f32.mrf.mxu0
          %1920 = vmatprep.mubr.f32.mxu0 0.0
          %1921 = vmatmul.mubr.f32.gmra.mxu0 %v1801
          %v1922 = vpop.f32.mrf.mxu0
          %v1923 = vadd.f32 0.0, %v1922
          %v1924 = vpop.f32.mrf.mxu0
          %1925 = vmatprep.mubr.f32.mxu0 0.0
          %1926 = vmatmul.mubr.f32.gmra.mxu0 %v1802
          %v1927 = vpop.f32.mrf.mxu0
          %v1928 = vadd.f32 0.0, %v1927
          %v1929 = vpop.f32.mrf.mxu0
          %1930 = vmatprep.mubr.f32.mxu0 0.0
          %1931 = vmatmul.mubr.f32.gmra.mxu0 %v1804
          %v1932 = vpop.f32.mrf.mxu0
          %v1933 = vadd.f32 0.0, %v1932
          %v1934 = vpop.f32.mrf.mxu0
          %1935 = vmatprep.mubr.f32.mxu0 0.0
          %1936 = vmatmul.mubr.f32.gmra.mxu0 %v1805
          %v1937 = vpop.f32.mrf.mxu0
          %v1938 = vadd.f32 0.0, %v1937
          %v1939 = vpop.f32.mrf.mxu0
          %1940 = vmatprep.mubr.f32.mxu0 0.0
          %1941 = vmatmul.mubr.f32.gmra.mxu0 %v1807
          %v1942 = vpop.f32.mrf.mxu0
          %v1943 = vadd.f32 0.0, %v1942
          %v1944 = vpop.f32.mrf.mxu0
          %1945 = vmatprep.mubr.f32.mxu0 0.0
          %1946 = vmatmul.mubr.f32.gmra.mxu0 %v1808
          %v1947 = vpop.f32.mrf.mxu0
          %v1948 = vadd.f32 0.0, %v1947
          %v1949 = vpop.f32.mrf.mxu0
          %1950 = vmatprep.mubr.f32.mxu0 0.0
          %1951 = vmatmul.mubr.f32.gmra.mxu0 %v1810
          %v1952 = vpop.f32.mrf.mxu0
          %v1953 = vadd.f32 0.0, %v1952
          %v1954 = vpop.f32.mrf.mxu0
          %1955 = vmatprep.mubr.f32.mxu0 0.0
          %1956 = vmatmul.mubr.f32.gmra.mxu0 %v1811
          %v1957 = vpop.f32.mrf.mxu0
          %v1958 = vadd.f32 0.0, %v1957
          %v1959 = vpop.f32.mrf.mxu0
          %1960 = vmatprep.mubr.f32.mxu0 0.0
          %1961 = vmatmul.mubr.f32.gmra.mxu0 %v1813
          %v1962 = vpop.f32.mrf.mxu0
          %v1963 = vadd.f32 0.0, %v1962
          %v1964 = vpop.f32.mrf.mxu0
          %1965 = vmatprep.mubr.f32.mxu0 0.0
          %1966 = vmatmul.mubr.f32.gmra.mxu0 %v1814
          %v1967 = vpop.f32.mrf.mxu0
          %v1968 = vadd.f32 0.0, %v1967
          %v1969 = vpop.f32.mrf.mxu0
          %1970 = vmatprep.mubr.f32.mxu0 0.0
          %1971 = vmatmul.mubr.f32.gmra.mxu0 %v1816
          %v1972 = vpop.f32.mrf.mxu0
          %v1973 = vadd.f32 0.0, %v1972
          %v1974 = vpop.f32.mrf.mxu0
          %1975 = vmatprep.mubr.f32.mxu0 0.0
          %1976 = vmatmul.mubr.f32.gmra.mxu0 %v1817
          %v1977 = vpop.f32.mrf.mxu0
          %v1978 = vadd.f32 0.0, %v1977
          %v1979 = vpop.f32.mrf.mxu0
          %1980 = vdwg.mxu0
          %v1981 = vadd.f32 %v1776, %v1903
          %v1982 = vadd.f32 %v1777, %v1908
          %v1983 = vadd.f32 %v1778, %v1913
          %v1984 = vadd.f32 %v1779, %v1918
          %v1985 = vadd.f32 %v1780, %v1923
          %v1986 = vadd.f32 %v1781, %v1928
          %v1987 = vadd.f32 %v1782, %v1933
          %v1988 = vadd.f32 %v1783, %v1938
          %v1989 = vadd.f32 %v1784, %v1943
          %v1990 = vadd.f32 %v1785, %v1948
          %v1991 = vadd.f32 %v1786, %v1953
          %v1992 = vadd.f32 %v1787, %v1958
          %v1993 = vadd.f32 %v1788, %v1963
          %v1994 = vadd.f32 %v1789, %v1968
          %v1995 = vadd.f32 %v1790, %v1973
          %v1996 = vadd.f32 %v1791, %v1978
          %v2021 = vrot.slane %v1795, 1
          %v2022 = vrot.slane %v1796, 1
          %v2023 = vsel %vm496, %v2021, %v2022
          %v2024 = vrot.slane %v1797, 1
          %v2025 = vsel %vm496, %v2022, %v2024
          %v2026 = vrot.slane %v1798, 1
          %v2027 = vrot.slane %v1799, 1
          %v2028 = vsel %vm496, %v2026, %v2027
          %v2029 = vrot.slane %v1800, 1
          %v2030 = vsel %vm496, %v2027, %v2029
          %v2031 = vrot.slane %v1801, 1
          %v2032 = vrot.slane %v1802, 1
          %v2033 = vsel %vm496, %v2031, %v2032
          %v2034 = vrot.slane %v1803, 1
          %v2035 = vsel %vm496, %v2032, %v2034
          %v2036 = vrot.slane %v1804, 1
          %v2037 = vrot.slane %v1805, 1
          %v2038 = vsel %vm496, %v2036, %v2037
          %v2039 = vrot.slane %v1806, 1
          %v2040 = vsel %vm496, %v2037, %v2039
          %v2041 = vrot.slane %v1807, 1
          %v2042 = vrot.slane %v1808, 1
          %v2043 = vsel %vm496, %v2041, %v2042
          %v2044 = vrot.slane %v1809, 1
          %v2045 = vsel %vm496, %v2042, %v2044
          %v2046 = vrot.slane %v1810, 1
          %v2047 = vrot.slane %v1811, 1
          %v2048 = vsel %vm496, %v2046, %v2047
          %v2049 = vrot.slane %v1812, 1
          %v2050 = vsel %vm496, %v2047, %v2049
          %v2051 = vrot.slane %v1813, 1
          %v2052 = vrot.slane %v1814, 1
          %v2053 = vsel %vm496, %v2051, %v2052
          %v2054 = vrot.slane %v1815, 1
          %v2055 = vsel %vm496, %v2052, %v2054
          %v2056 = vrot.slane %v1816, 1
          %v2057 = vrot.slane %v1817, 1
          %v2058 = vsel %vm496, %v2056, %v2057
          %v2059 = vrot.slane %v1818, 1
          %v2060 = vsel %vm496, %v2057, %v2059
          %s2077 = scalar_lea.vmem [#allocation7], 896
          %v2078 = vld [vmem:[%s2077] sm:$0xff]
          %v2079 = vld [vmem:[%s2077 + $0x8] sm:$0xff]
          %v2080 = vld [vmem:[%s2077 + $0x10] sm:$0xff]
          %v2081 = vld [vmem:[%s2077 + $0x18] sm:$0xff]
          %v2082 = vld [vmem:[%s2077 + $0x20] sm:$0xff]
          %v2083 = vld [vmem:[%s2077 + $0x28] sm:$0xff]
          %v2084 = vld [vmem:[%s2077 + $0x30] sm:$0xff]
          %v2085 = vld [vmem:[%s2077 + $0x38] sm:$0xff]
          %v2086 = vld [vmem:[%s2077 + $0x40] sm:$0xff]
          %v2087 = vld [vmem:[%s2077 + $0x48] sm:$0xff]
          %v2088 = vld [vmem:[%s2077 + $0x50] sm:$0xff]
          %v2089 = vld [vmem:[%s2077 + $0x58] sm:$0xff]
          %v2090 = vld [vmem:[%s2077 + $0x60] sm:$0xff]
          %v2091 = vld [vmem:[%s2077 + $0x68] sm:$0xff]
          %v2092 = vld [vmem:[%s2077 + $0x70] sm:$0xff]
          %v2093 = vld [vmem:[%s2077 + $0x78] sm:$0xff]
          %2094 = vmatprep.subr.mxu0 0.0
          %2095 = vmatpush1.msra.mxu0 %v2093
          %2096 = vmatprep.subr.mxu0 0.0
          %2097 = vmatpush1.msra.mxu0 %v2092
          %2098 = vmatprep.subr.mxu0 0.0
          %2099 = vmatpush1.msra.mxu0 %v2091
          %2100 = vmatprep.subr.mxu0 0.0
          %2101 = vmatpush1.msra.mxu0 %v2090
          %2102 = vmatprep.subr.mxu0 0.0
          %2103 = vmatpush1.msra.mxu0 %v2089
          %2104 = vmatprep.subr.mxu0 0.0
          %2105 = vmatpush1.msra.mxu0 %v2088
          %2106 = vmatprep.subr.mxu0 0.0
          %2107 = vmatpush1.msra.mxu0 %v2087
          %2108 = vmatprep.subr.mxu0 0.0
          %2109 = vmatpush1.msra.mxu0 %v2086
          %2110 = vmatprep.subr.mxu0 0.0
          %2111 = vmatpush1.msra.mxu0 %v2085
          %2112 = vmatprep.subr.mxu0 0.0
          %2113 = vmatpush1.msra.mxu0 %v2084
          %2114 = vmatprep.subr.mxu0 0.0
          %2115 = vmatpush1.msra.mxu0 %v2083
          %2116 = vmatprep.subr.mxu0 0.0
          %2117 = vmatpush1.msra.mxu0 %v2082
          %2118 = vmatprep.subr.mxu0 0.0
          %2119 = vmatpush1.msra.mxu0 %v2081
          %2120 = vmatprep.subr.mxu0 0.0
          %2121 = vmatpush1.msra.mxu0 %v2080
          %2122 = vmatprep.subr.mxu0 0.0
          %2123 = vmatpush1.msra.mxu0 %v2079
          %2124 = vmatprep.subr.mxu0 0.0
          %2125 = vmatpush1.msra.mxu0 %v2078
          %2126 = vmatprep.subr.mxu0 0.0
          %2127 = vmatpush2.msra.mxu0 0.0
          %2128 = vmatprep.subr.mxu0 0.0
          %2129 = vmatpush2.msra.mxu0 0.0
          %2130 = vmatprep.subr.mxu0 0.0
          %2131 = vmatpush2.msra.mxu0 0.0
          %2132 = vmatprep.subr.mxu0 0.0
          %2133 = vmatpush2.msra.mxu0 0.0
          %2134 = vmatprep.subr.mxu0 0.0
          %2135 = vmatpush2.msra.mxu0 0.0
          %2136 = vmatprep.subr.mxu0 0.0
          %2137 = vmatpush2.msra.mxu0 0.0
          %2138 = vmatprep.subr.mxu0 0.0
          %2139 = vmatpush2.msra.mxu0 0.0
          %2140 = vmatprep.subr.mxu0 0.0
          %2141 = vmatpush2.msra.mxu0 0.0
          %2142 = vmatprep.subr.mxu0 0.0
          %2143 = vmatpush2.msra.mxu0 0.0
          %2144 = vmatprep.subr.mxu0 0.0
          %2145 = vmatpush2.msra.mxu0 0.0
          %2146 = vmatprep.subr.mxu0 0.0
          %2147 = vmatpush2.msra.mxu0 0.0
          %2148 = vmatprep.subr.mxu0 0.0
          %2149 = vmatpush2.msra.mxu0 0.0
          %2150 = vmatprep.subr.mxu0 0.0
          %2151 = vmatpush2.msra.mxu0 0.0
          %2152 = vmatprep.subr.mxu0 0.0
          %2153 = vmatpush2.msra.mxu0 0.0
          %2154 = vmatprep.subr.mxu0 0.0
          %2155 = vmatpush2.msra.mxu0 0.0
          %2156 = vmatprep.subr.mxu0 0.0
          %2157 = vmatpush2.msra.mxu0 0.0
          %2158 = vmatprep.mubr.f32.mxu0 0.0
          %2159 = vmatmul.mubr.f32.gmra.mxu0 %v2023
          %v2160 = vpop.f32.mrf.mxu0
          %v2161 = vadd.f32 0.0, %v2160
          %v2162 = vpop.f32.mrf.mxu0
          %2163 = vmatprep.mubr.f32.mxu0 0.0
          %2164 = vmatmul.mubr.f32.gmra.mxu0 %v2025
          %v2165 = vpop.f32.mrf.mxu0
          %v2166 = vadd.f32 0.0, %v2165
          %v2167 = vpop.f32.mrf.mxu0
          %2168 = vmatprep.mubr.f32.mxu0 0.0
          %2169 = vmatmul.mubr.f32.gmra.mxu0 %v2028
          %v2170 = vpop.f32.mrf.mxu0
          %v2171 = vadd.f32 0.0, %v2170
          %v2172 = vpop.f32.mrf.mxu0
          %2173 = vmatprep.mubr.f32.mxu0 0.0
          %2174 = vmatmul.mubr.f32.gmra.mxu0 %v2030
          %v2175 = vpop.f32.mrf.mxu0
          %v2176 = vadd.f32 0.0, %v2175
          %v2177 = vpop.f32.mrf.mxu0
          %2178 = vmatprep.mubr.f32.mxu0 0.0
          %2179 = vmatmul.mubr.f32.gmra.mxu0 %v2033
          %v2180 = vpop.f32.mrf.mxu0
          %v2181 = vadd.f32 0.0, %v2180
          %v2182 = vpop.f32.mrf.mxu0
          %2183 = vmatprep.mubr.f32.mxu0 0.0
          %2184 = vmatmul.mubr.f32.gmra.mxu0 %v2035
          %v2185 = vpop.f32.mrf.mxu0
          %v2186 = vadd.f32 0.0, %v2185
          %v2187 = vpop.f32.mrf.mxu0
          %2188 = vmatprep.mubr.f32.mxu0 0.0
          %2189 = vmatmul.mubr.f32.gmra.mxu0 %v2038
          %v2190 = vpop.f32.mrf.mxu0
          %v2191 = vadd.f32 0.0, %v2190
          %v2192 = vpop.f32.mrf.mxu0
          %2193 = vmatprep.mubr.f32.mxu0 0.0
          %2194 = vmatmul.mubr.f32.gmra.mxu0 %v2040
          %v2195 = vpop.f32.mrf.mxu0
          %v2196 = vadd.f32 0.0, %v2195
          %v2197 = vpop.f32.mrf.mxu0
          %2198 = vmatprep.mubr.f32.mxu0 0.0
          %2199 = vmatmul.mubr.f32.gmra.mxu0 %v2043
          %v2200 = vpop.f32.mrf.mxu0
          %v2201 = vadd.f32 0.0, %v2200
          %v2202 = vpop.f32.mrf.mxu0
          %2203 = vmatprep.mubr.f32.mxu0 0.0
          %2204 = vmatmul.mubr.f32.gmra.mxu0 %v2045
          %v2205 = vpop.f32.mrf.mxu0
          %v2206 = vadd.f32 0.0, %v2205
          %v2207 = vpop.f32.mrf.mxu0
          %2208 = vmatprep.mubr.f32.mxu0 0.0
          %2209 = vmatmul.mubr.f32.gmra.mxu0 %v2048
          %v2210 = vpop.f32.mrf.mxu0
          %v2211 = vadd.f32 0.0, %v2210
          %v2212 = vpop.f32.mrf.mxu0
          %2213 = vmatprep.mubr.f32.mxu0 0.0
          %2214 = vmatmul.mubr.f32.gmra.mxu0 %v2050
          %v2215 = vpop.f32.mrf.mxu0
          %v2216 = vadd.f32 0.0, %v2215
          %v2217 = vpop.f32.mrf.mxu0
          %2218 = vmatprep.mubr.f32.mxu0 0.0
          %2219 = vmatmul.mubr.f32.gmra.mxu0 %v2053
          %v2220 = vpop.f32.mrf.mxu0
          %v2221 = vadd.f32 0.0, %v2220
          %v2222 = vpop.f32.mrf.mxu0
          %2223 = vmatprep.mubr.f32.mxu0 0.0
          %2224 = vmatmul.mubr.f32.gmra.mxu0 %v2055
          %v2225 = vpop.f32.mrf.mxu0
          %v2226 = vadd.f32 0.0, %v2225
          %v2227 = vpop.f32.mrf.mxu0
          %2228 = vmatprep.mubr.f32.mxu0 0.0
          %2229 = vmatmul.mubr.f32.gmra.mxu0 %v2058
          %v2230 = vpop.f32.mrf.mxu0
          %v2231 = vadd.f32 0.0, %v2230
          %v2232 = vpop.f32.mrf.mxu0
          %2233 = vmatprep.mubr.f32.mxu0 0.0
          %2234 = vmatmul.mubr.f32.gmra.mxu0 %v2060
          %v2235 = vpop.f32.mrf.mxu0
          %v2236 = vadd.f32 0.0, %v2235
          %v2237 = vpop.f32.mrf.mxu0
          %2238 = vdwg.mxu0
          %v2239 = vadd.f32 %v1981, %v2161
          %v2240 = vadd.f32 %v1982, %v2166
          %v2241 = vadd.f32 %v1983, %v2171
          %v2242 = vadd.f32 %v1984, %v2176
          %v2243 = vadd.f32 %v1985, %v2181
          %v2244 = vadd.f32 %v1986, %v2186
          %v2245 = vadd.f32 %v1987, %v2191
          %v2246 = vadd.f32 %v1988, %v2196
          %v2247 = vadd.f32 %v1989, %v2201
          %v2248 = vadd.f32 %v1990, %v2206
          %v2249 = vadd.f32 %v1991, %v2211
          %v2250 = vadd.f32 %v1992, %v2216
          %v2251 = vadd.f32 %v1993, %v2221
          %v2252 = vadd.f32 %v1994, %v2226
          %v2253 = vadd.f32 %v1995, %v2231
          %v2254 = vadd.f32 %v1996, %v2236
          %v2255 = vrot.slane %v1795, 2
          %v2256 = vrot.slane %v1796, 2
          %v2257 = vsel %vm860, %v2255, %v2256
          %v2258 = vrot.slane %v1797, 2
          %v2259 = vsel %vm860, %v2256, %v2258
          %v2260 = vrot.slane %v1798, 2
          %v2261 = vrot.slane %v1799, 2
          %v2262 = vsel %vm860, %v2260, %v2261
          %v2263 = vrot.slane %v1800, 2
          %v2264 = vsel %vm860, %v2261, %v2263
          %v2265 = vrot.slane %v1801, 2
          %v2266 = vrot.slane %v1802, 2
          %v2267 = vsel %vm860, %v2265, %v2266
          %v2268 = vrot.slane %v1803, 2
          %v2269 = vsel %vm860, %v2266, %v2268
          %v2270 = vrot.slane %v1804, 2
          %v2271 = vrot.slane %v1805, 2
          %v2272 = vsel %vm860, %v2270, %v2271
          %v2273 = vrot.slane %v1806, 2
          %v2274 = vsel %vm860, %v2271, %v2273
          %v2275 = vrot.slane %v1807, 2
          %v2276 = vrot.slane %v1808, 2
          %v2277 = vsel %vm860, %v2275, %v2276
          %v2278 = vrot.slane %v1809, 2
          %v2279 = vsel %vm860, %v2276, %v2278
          %v2280 = vrot.slane %v1810, 2
          %v2281 = vrot.slane %v1811, 2
          %v2282 = vsel %vm860, %v2280, %v2281
          %v2283 = vrot.slane %v1812, 2
          %v2284 = vsel %vm860, %v2281, %v2283
          %v2285 = vrot.slane %v1813, 2
          %v2286 = vrot.slane %v1814, 2
          %v2287 = vsel %vm860, %v2285, %v2286
          %v2288 = vrot.slane %v1815, 2
          %v2289 = vsel %vm860, %v2286, %v2288
          %v2290 = vrot.slane %v1816, 2
          %v2291 = vrot.slane %v1817, 2
          %v2292 = vsel %vm860, %v2290, %v2291
          %v2293 = vrot.slane %v1818, 2
          %v2294 = vsel %vm860, %v2291, %v2293
          %s2311 = scalar_lea.vmem [#allocation7], 1024
          %v2312 = vld [vmem:[%s2311] sm:$0xff]
          %v2313 = vld [vmem:[%s2311 + $0x8] sm:$0xff]
          %v2314 = vld [vmem:[%s2311 + $0x10] sm:$0xff]
          %v2315 = vld [vmem:[%s2311 + $0x18] sm:$0xff]
          %v2316 = vld [vmem:[%s2311 + $0x20] sm:$0xff]
          %v2317 = vld [vmem:[%s2311 + $0x28] sm:$0xff]
          %v2318 = vld [vmem:[%s2311 + $0x30] sm:$0xff]
          %v2319 = vld [vmem:[%s2311 + $0x38] sm:$0xff]
          %v2320 = vld [vmem:[%s2311 + $0x40] sm:$0xff]
          %v2321 = vld [vmem:[%s2311 + $0x48] sm:$0xff]
          %v2322 = vld [vmem:[%s2311 + $0x50] sm:$0xff]
          %v2323 = vld [vmem:[%s2311 + $0x58] sm:$0xff]
          %v2324 = vld [vmem:[%s2311 + $0x60] sm:$0xff]
          %v2325 = vld [vmem:[%s2311 + $0x68] sm:$0xff]
          %v2326 = vld [vmem:[%s2311 + $0x70] sm:$0xff]
          %v2327 = vld [vmem:[%s2311 + $0x78] sm:$0xff]
          %2328 = vmatprep.subr.mxu0 0.0
          %2329 = vmatpush1.msra.mxu0 %v2327
          %2330 = vmatprep.subr.mxu0 0.0
          %2331 = vmatpush1.msra.mxu0 %v2326
          %2332 = vmatprep.subr.mxu0 0.0
          %2333 = vmatpush1.msra.mxu0 %v2325
          %2334 = vmatprep.subr.mxu0 0.0
          %2335 = vmatpush1.msra.mxu0 %v2324
          %2336 = vmatprep.subr.mxu0 0.0
          %2337 = vmatpush1.msra.mxu0 %v2323
          %2338 = vmatprep.subr.mxu0 0.0
          %2339 = vmatpush1.msra.mxu0 %v2322
          %2340 = vmatprep.subr.mxu0 0.0
          %2341 = vmatpush1.msra.mxu0 %v2321
          %2342 = vmatprep.subr.mxu0 0.0
          %2343 = vmatpush1.msra.mxu0 %v2320
          %2344 = vmatprep.subr.mxu0 0.0
          %2345 = vmatpush1.msra.mxu0 %v2319
          %2346 = vmatprep.subr.mxu0 0.0
          %2347 = vmatpush1.msra.mxu0 %v2318
          %2348 = vmatprep.subr.mxu0 0.0
          %2349 = vmatpush1.msra.mxu0 %v2317
          %2350 = vmatprep.subr.mxu0 0.0
          %2351 = vmatpush1.msra.mxu0 %v2316
          %2352 = vmatprep.subr.mxu0 0.0
          %2353 = vmatpush1.msra.mxu0 %v2315
          %2354 = vmatprep.subr.mxu0 0.0
          %2355 = vmatpush1.msra.mxu0 %v2314
          %2356 = vmatprep.subr.mxu0 0.0
          %2357 = vmatpush1.msra.mxu0 %v2313
          %2358 = vmatprep.subr.mxu0 0.0
          %2359 = vmatpush1.msra.mxu0 %v2312
          %2360 = vmatprep.subr.mxu0 0.0
          %2361 = vmatpush2.msra.mxu0 0.0
          %2362 = vmatprep.subr.mxu0 0.0
          %2363 = vmatpush2.msra.mxu0 0.0
          %2364 = vmatprep.subr.mxu0 0.0
          %2365 = vmatpush2.msra.mxu0 0.0
          %2366 = vmatprep.subr.mxu0 0.0
          %2367 = vmatpush2.msra.mxu0 0.0
          %2368 = vmatprep.subr.mxu0 0.0
          %2369 = vmatpush2.msra.mxu0 0.0
          %2370 = vmatprep.subr.mxu0 0.0
          %2371 = vmatpush2.msra.mxu0 0.0
          %2372 = vmatprep.subr.mxu0 0.0
          %2373 = vmatpush2.msra.mxu0 0.0
          %2374 = vmatprep.subr.mxu0 0.0
          %2375 = vmatpush2.msra.mxu0 0.0
          %2376 = vmatprep.subr.mxu0 0.0
          %2377 = vmatpush2.msra.mxu0 0.0
          %2378 = vmatprep.subr.mxu0 0.0
          %2379 = vmatpush2.msra.mxu0 0.0
          %2380 = vmatprep.subr.mxu0 0.0
          %2381 = vmatpush2.msra.mxu0 0.0
          %2382 = vmatprep.subr.mxu0 0.0
          %2383 = vmatpush2.msra.mxu0 0.0
          %2384 = vmatprep.subr.mxu0 0.0
          %2385 = vmatpush2.msra.mxu0 0.0
          %2386 = vmatprep.subr.mxu0 0.0
          %2387 = vmatpush2.msra.mxu0 0.0
          %2388 = vmatprep.subr.mxu0 0.0
          %2389 = vmatpush2.msra.mxu0 0.0
          %2390 = vmatprep.subr.mxu0 0.0
          %2391 = vmatpush2.msra.mxu0 0.0
          %2392 = vmatprep.mubr.f32.mxu0 0.0
          %2393 = vmatmul.mubr.f32.gmra.mxu0 %v2257
          %v2394 = vpop.f32.mrf.mxu0
          %v2395 = vadd.f32 0.0, %v2394
          %v2396 = vpop.f32.mrf.mxu0
          %2397 = vmatprep.mubr.f32.mxu0 0.0
          %2398 = vmatmul.mubr.f32.gmra.mxu0 %v2259
          %v2399 = vpop.f32.mrf.mxu0
          %v2400 = vadd.f32 0.0, %v2399
          %v2401 = vpop.f32.mrf.mxu0
          %2402 = vmatprep.mubr.f32.mxu0 0.0
          %2403 = vmatmul.mubr.f32.gmra.mxu0 %v2262
          %v2404 = vpop.f32.mrf.mxu0
          %v2405 = vadd.f32 0.0, %v2404
          %v2406 = vpop.f32.mrf.mxu0
          %2407 = vmatprep.mubr.f32.mxu0 0.0
          %2408 = vmatmul.mubr.f32.gmra.mxu0 %v2264
          %v2409 = vpop.f32.mrf.mxu0
          %v2410 = vadd.f32 0.0, %v2409
          %v2411 = vpop.f32.mrf.mxu0
          %2412 = vmatprep.mubr.f32.mxu0 0.0
          %2413 = vmatmul.mubr.f32.gmra.mxu0 %v2267
          %v2414 = vpop.f32.mrf.mxu0
          %v2415 = vadd.f32 0.0, %v2414
          %v2416 = vpop.f32.mrf.mxu0
          %2417 = vmatprep.mubr.f32.mxu0 0.0
          %2418 = vmatmul.mubr.f32.gmra.mxu0 %v2269
          %v2419 = vpop.f32.mrf.mxu0
          %v2420 = vadd.f32 0.0, %v2419
          %v2421 = vpop.f32.mrf.mxu0
          %2422 = vmatprep.mubr.f32.mxu0 0.0
          %2423 = vmatmul.mubr.f32.gmra.mxu0 %v2272
          %v2424 = vpop.f32.mrf.mxu0
          %v2425 = vadd.f32 0.0, %v2424
          %v2426 = vpop.f32.mrf.mxu0
          %2427 = vmatprep.mubr.f32.mxu0 0.0
          %2428 = vmatmul.mubr.f32.gmra.mxu0 %v2274
          %v2429 = vpop.f32.mrf.mxu0
          %v2430 = vadd.f32 0.0, %v2429
          %v2431 = vpop.f32.mrf.mxu0
          %2432 = vmatprep.mubr.f32.mxu0 0.0
          %2433 = vmatmul.mubr.f32.gmra.mxu0 %v2277
          %v2434 = vpop.f32.mrf.mxu0
          %v2435 = vadd.f32 0.0, %v2434
          %v2436 = vpop.f32.mrf.mxu0
          %2437 = vmatprep.mubr.f32.mxu0 0.0
          %2438 = vmatmul.mubr.f32.gmra.mxu0 %v2279
          %v2439 = vpop.f32.mrf.mxu0
          %v2440 = vadd.f32 0.0, %v2439
          %v2441 = vpop.f32.mrf.mxu0
          %2442 = vmatprep.mubr.f32.mxu0 0.0
          %2443 = vmatmul.mubr.f32.gmra.mxu0 %v2282
          %v2444 = vpop.f32.mrf.mxu0
          %v2445 = vadd.f32 0.0, %v2444
          %v2446 = vpop.f32.mrf.mxu0
          %2447 = vmatprep.mubr.f32.mxu0 0.0
          %2448 = vmatmul.mubr.f32.gmra.mxu0 %v2284
          %v2449 = vpop.f32.mrf.mxu0
          %v2450 = vadd.f32 0.0, %v2449
          %v2451 = vpop.f32.mrf.mxu0
          %2452 = vmatprep.mubr.f32.mxu0 0.0
          %2453 = vmatmul.mubr.f32.gmra.mxu0 %v2287
          %v2454 = vpop.f32.mrf.mxu0
          %v2455 = vadd.f32 0.0, %v2454
          %v2456 = vpop.f32.mrf.mxu0
          %2457 = vmatprep.mubr.f32.mxu0 0.0
          %2458 = vmatmul.mubr.f32.gmra.mxu0 %v2289
          %v2459 = vpop.f32.mrf.mxu0
          %v2460 = vadd.f32 0.0, %v2459
          %v2461 = vpop.f32.mrf.mxu0
          %2462 = vmatprep.mubr.f32.mxu0 0.0
          %2463 = vmatmul.mubr.f32.gmra.mxu0 %v2292
          %v2464 = vpop.f32.mrf.mxu0
          %v2465 = vadd.f32 0.0, %v2464
          %v2466 = vpop.f32.mrf.mxu0
          %2467 = vmatprep.mubr.f32.mxu0 0.0
          %2468 = vmatmul.mubr.f32.gmra.mxu0 %v2294
          %v2469 = vpop.f32.mrf.mxu0
          %v2470 = vadd.f32 0.0, %v2469
          %v2471 = vpop.f32.mrf.mxu0
          %2472 = vdwg.mxu0
          %v2473 = vadd.f32 %v2239, %v2395
          %v2474 = vadd.f32 %v2240, %v2400
          %v2475 = vadd.f32 %v2241, %v2405
          %v2476 = vadd.f32 %v2242, %v2410
          %v2477 = vadd.f32 %v2243, %v2415
          %v2478 = vadd.f32 %v2244, %v2420
          %v2479 = vadd.f32 %v2245, %v2425
          %v2480 = vadd.f32 %v2246, %v2430
          %v2481 = vadd.f32 %v2247, %v2435
          %v2482 = vadd.f32 %v2248, %v2440
          %v2483 = vadd.f32 %v2249, %v2445
          %v2484 = vadd.f32 %v2250, %v2450
          %v2485 = vadd.f32 %v2251, %v2455
          %v2486 = vadd.f32 %v2252, %v2460
          %v2487 = vadd.f32 %v2253, %v2465
          %v2488 = vadd.f32 %v2254, %v2470
          %v2489 = vld [vmem:[%s2] sm:$0x1]
          %v2491 = vlaneseq
          %v2492 = vshrl.u32 %v2491, 7
          %v2493 = vsub.s32 0, %v2492
          %v2494 = vrot.slane %v2489, %v2493
          %v2496 = vadd.f32 %v2473, %v2494
          %v2497 = vadd.f32 %v2474, %v2494
          %v2498 = vadd.f32 %v2475, %v2494
          %v2499 = vadd.f32 %v2476, %v2494
          %v2500 = vadd.f32 %v2477, %v2494
          %v2501 = vadd.f32 %v2478, %v2494
          %v2502 = vadd.f32 %v2479, %v2494
          %v2503 = vadd.f32 %v2480, %v2494
          %v2504 = vadd.f32 %v2481, %v2494
          %v2505 = vadd.f32 %v2482, %v2494
          %v2506 = vadd.f32 %v2483, %v2494
          %v2507 = vadd.f32 %v2484, %v2494
          %v2508 = vadd.f32 %v2485, %v2494
          %v2509 = vadd.f32 %v2486, %v2494
          %v2510 = vadd.f32 %v2487, %v2494
          %v2511 = vadd.f32 %v2488, %v2494
          %v2512 = vmax.f32 %v2496, 0.0
          %v2513 = vmax.f32 %v2497, 0.0
          %v2514 = vmax.f32 %v2498, 0.0
          %v2515 = vmax.f32 %v2499, 0.0
          %v2516 = vmax.f32 %v2500, 0.0
          %v2517 = vmax.f32 %v2501, 0.0
          %v2518 = vmax.f32 %v2502, 0.0
          %v2519 = vmax.f32 %v2503, 0.0
          %v2520 = vmax.f32 %v2504, 0.0
          %v2521 = vmax.f32 %v2505, 0.0
          %v2522 = vmax.f32 %v2506, 0.0
          %v2523 = vmax.f32 %v2507, 0.0
          %v2524 = vmax.f32 %v2508, 0.0
          %v2525 = vmax.f32 %v2509, 0.0
          %v2526 = vmax.f32 %v2510, 0.0
          %v2527 = vmax.f32 %v2511, 0.0
          %s2528 = scalar_lea.vmem [#allocation3], %s1096
          %2529 = vst [vmem:[%s2528 + $0x1] sm:$0xff] %v2512
          %2530 = vst [vmem:[%s2528 + $0x9] sm:$0xff] %v2513
          %2531 = vst [vmem:[%s2528 + $0x19] sm:$0xff] %v2514
          %2532 = vst [vmem:[%s2528 + $0x21] sm:$0xff] %v2515
          %2533 = vst [vmem:[%s2528 + $0x31] sm:$0xff] %v2516
          %2534 = vst [vmem:[%s2528 + $0x39] sm:$0xff] %v2517
          %2535 = vst [vmem:[%s2528 + $0x49] sm:$0xff] %v2518
          %2536 = vst [vmem:[%s2528 + $0x51] sm:$0xff] %v2519
          %2537 = vst [vmem:[%s2528 + $0x61] sm:$0xff] %v2520
          %2538 = vst [vmem:[%s2528 + $0x69] sm:$0xff] %v2521
          %2539 = vst [vmem:[%s2528 + $0x79] sm:$0xff] %v2522
          %2540 = vst [vmem:[%s2528 + $0x81] sm:$0xff] %v2523
          %2541 = vst [vmem:[%s2528 + $0x91] sm:$0xff] %v2524
          %2542 = vst [vmem:[%s2528 + $0x99] sm:$0xff] %v2525
          %2543 = vst [vmem:[%s2528 + $0xa9] sm:$0xff] %v2526
          %2544 = vst [vmem:[%s2528 + $0xb1] sm:$0xff] %v2527
        $region57: #{tpu_custom_call.1} parent=39 // loop_footer
          %s428 = sadd.s32 1, %s424
        $region58: #{tpu_custom_call.1} parent=39 // loop_footer_branch
          %423 = sbr.rel target = $region54
        $region59: #{tpu_custom_call.1} parent=39 // loop_exit
          _
        loop: start=0, step=1, limit=2
        $region60: #{tpu_custom_call.1} parent=39 // loop_pre_header
          _
        $region61: #{tpu_custom_call.1} parent=39 // loop_header
          %s2546 = sphi 0, %s2550
          %p2547 = scmp.ge.s32.totalorder %s2546, 2
        $region62: #{tpu_custom_call.1} parent=39 // loop_header_branch
          %2549 = sbr.rel (%p2547) target = $region66
        $region63: #{tpu_custom_call.1} parent=39 // loop_body
          %s2551 = smul.u32 %s2546, 8
          %s2552 = smul.u32 %s2551, 24
          %s2553 = scalar_lea.vmem [#allocation3], %s2552
          %v2554 = vld [vmem:[%s2553] sm:$0xff]
          %v2555 = vld [vmem:[%s2553 + $0x8] sm:$0xff]
          %v2556 = vld [vmem:[%s2553 + $0x10] sm:$0x3]
          %v2557 = vld [vmem:[%s2553 + $0x18] sm:$0xff]
          %v2558 = vld [vmem:[%s2553 + $0x20] sm:$0xff]
          %v2559 = vld [vmem:[%s2553 + $0x28] sm:$0x3]
          %v2560 = vld [vmem:[%s2553 + $0x30] sm:$0xff]
          %v2561 = vld [vmem:[%s2553 + $0x38] sm:$0xff]
          %v2562 = vld [vmem:[%s2553 + $0x40] sm:$0x3]
          %v2563 = vld [vmem:[%s2553 + $0x48] sm:$0xff]
          %v2564 = vld [vmem:[%s2553 + $0x50] sm:$0xff]
          %v2565 = vld [vmem:[%s2553 + $0x58] sm:$0x3]
          %v2566 = vld [vmem:[%s2553 + $0x60] sm:$0xff]
          %v2567 = vld [vmem:[%s2553 + $0x68] sm:$0xff]
          %v2568 = vld [vmem:[%s2553 + $0x70] sm:$0x3]
          %v2569 = vld [vmem:[%s2553 + $0x78] sm:$0xff]
          %v2570 = vld [vmem:[%s2553 + $0x80] sm:$0xff]
          %v2571 = vld [vmem:[%s2553 + $0x88] sm:$0x3]
          %v2572 = vld [vmem:[%s2553 + $0x90] sm:$0xff]
          %v2573 = vld [vmem:[%s2553 + $0x98] sm:$0xff]
          %v2574 = vld [vmem:[%s2553 + $0xa0] sm:$0x3]
          %v2575 = vld [vmem:[%s2553 + $0xa8] sm:$0xff]
          %v2576 = vld [vmem:[%s2553 + $0xb0] sm:$0xff]
          %v2577 = vld [vmem:[%s2553 + $0xb8] sm:$0x3]
          %v2578 = vld [vmem:[#allocation9] sm:$0xff]
          %v2579 = vld [vmem:[#allocation9 + $0x8] sm:$0xff]
          %v2580 = vld [vmem:[#allocation9 + $0x10] sm:$0xff]
          %v2581 = vld [vmem:[#allocation9 + $0x18] sm:$0xff]
          %v2582 = vld [vmem:[#allocation9 + $0x20] sm:$0xff]
          %v2583 = vld [vmem:[#allocation9 + $0x28] sm:$0xff]
          %v2584 = vld [vmem:[#allocation9 + $0x30] sm:$0xff]
          %v2585 = vld [vmem:[#allocation9 + $0x38] sm:$0xff]
          %v2586 = vld [vmem:[#allocation9 + $0x40] sm:$0xff]
          %v2587 = vld [vmem:[#allocation9 + $0x48] sm:$0xff]
          %v2588 = vld [vmem:[#allocation9 + $0x50] sm:$0xff]
          %v2589 = vld [vmem:[#allocation9 + $0x58] sm:$0xff]
          %v2590 = vld [vmem:[#allocation9 + $0x60] sm:$0xff]
          %v2591 = vld [vmem:[#allocation9 + $0x68] sm:$0xff]
          %v2592 = vld [vmem:[#allocation9 + $0x70] sm:$0xff]
          %v2593 = vld [vmem:[#allocation9 + $0x78] sm:$0xff]
          %vm2618 = vcmask 1046528
          %v2619 = vrot.slane %v2554, 1
          %v2620 = vrot.slane %v2555, 1
          %v2621 = vsel %vm2618, %v2619, %v2620
          %v2622 = vrot.slane %v2556, 1
          %v2623 = vsel %vm2618, %v2620, %v2622
          %v2624 = vrot.slane %v2557, 1
          %v2625 = vrot.slane %v2558, 1
          %v2626 = vsel %vm2618, %v2624, %v2625
          %v2627 = vrot.slane %v2559, 1
          %v2628 = vsel %vm2618, %v2625, %v2627
          %v2629 = vrot.slane %v2560, 1
          %v2630 = vrot.slane %v2561, 1
          %v2631 = vsel %vm2618, %v2629, %v2630
          %v2632 = vrot.slane %v2562, 1
          %v2633 = vsel %vm2618, %v2630, %v2632
          %v2634 = vrot.slane %v2563, 1
          %v2635 = vrot.slane %v2564, 1
          %v2636 = vsel %vm2618, %v2634, %v2635
          %v2637 = vrot.slane %v2565, 1
          %v2638 = vsel %vm2618, %v2635, %v2637
          %v2639 = vrot.slane %v2566, 1
          %v2640 = vrot.slane %v2567, 1
          %v2641 = vsel %vm2618, %v2639, %v2640
          %v2642 = vrot.slane %v2568, 1
          %v2643 = vsel %vm2618, %v2640, %v2642
          %v2644 = vrot.slane %v2569, 1
          %v2645 = vrot.slane %v2570, 1
          %v2646 = vsel %vm2618, %v2644, %v2645
          %v2647 = vrot.slane %v2571, 1
          %v2648 = vsel %vm2618, %v2645, %v2647
          %v2649 = vrot.slane %v2572, 1
          %v2650 = vrot.slane %v2573, 1
          %v2651 = vsel %vm2618, %v2649, %v2650
          %v2652 = vrot.slane %v2574, 1
          %v2653 = vsel %vm2618, %v2650, %v2652
          %v2654 = vrot.slane %v2575, 1
          %v2655 = vrot.slane %v2576, 1
          %v2656 = vsel %vm2618, %v2654, %v2655
          %v2657 = vrot.slane %v2577, 1
          %v2658 = vsel %vm2618, %v2655, %v2657
          %s2675 = scalar_lea.vmem [#allocation9], 128
          %v2676 = vld [vmem:[%s2675] sm:$0xff]
          %v2677 = vld [vmem:[%s2675 + $0x8] sm:$0xff]
          %v2678 = vld [vmem:[%s2675 + $0x10] sm:$0xff]
          %v2679 = vld [vmem:[%s2675 + $0x18] sm:$0xff]
          %v2680 = vld [vmem:[%s2675 + $0x20] sm:$0xff]
          %v2681 = vld [vmem:[%s2675 + $0x28] sm:$0xff]
          %v2682 = vld [vmem:[%s2675 + $0x30] sm:$0xff]
          %v2683 = vld [vmem:[%s2675 + $0x38] sm:$0xff]
          %v2684 = vld [vmem:[%s2675 + $0x40] sm:$0xff]
          %v2685 = vld [vmem:[%s2675 + $0x48] sm:$0xff]
          %v2686 = vld [vmem:[%s2675 + $0x50] sm:$0xff]
          %v2687 = vld [vmem:[%s2675 + $0x58] sm:$0xff]
          %v2688 = vld [vmem:[%s2675 + $0x60] sm:$0xff]
          %v2689 = vld [vmem:[%s2675 + $0x68] sm:$0xff]
          %v2690 = vld [vmem:[%s2675 + $0x70] sm:$0xff]
          %v2691 = vld [vmem:[%s2675 + $0x78] sm:$0xff]
          %2692 = vmatprep.subr.mxu0 0.0
          %2693 = vmatpush1.msra.mxu0 %v2691
          %2694 = vmatprep.subr.mxu0 0.0
          %2695 = vmatpush1.msra.mxu0 %v2690
          %2696 = vmatprep.subr.mxu0 0.0
          %2697 = vmatpush1.msra.mxu0 %v2689
          %2698 = vmatprep.subr.mxu0 0.0
          %2699 = vmatpush1.msra.mxu0 %v2688
          %2700 = vmatprep.subr.mxu0 0.0
          %2701 = vmatpush1.msra.mxu0 %v2687
          %2702 = vmatprep.subr.mxu0 0.0
          %2703 = vmatpush1.msra.mxu0 %v2686
          %2704 = vmatprep.subr.mxu0 0.0
          %2705 = vmatpush1.msra.mxu0 %v2685
          %2706 = vmatprep.subr.mxu0 0.0
          %2707 = vmatpush1.msra.mxu0 %v2684
          %2708 = vmatprep.subr.mxu0 0.0
          %2709 = vmatpush1.msra.mxu0 %v2683
          %2710 = vmatprep.subr.mxu0 0.0
          %2711 = vmatpush1.msra.mxu0 %v2682
          %2712 = vmatprep.subr.mxu0 0.0
          %2713 = vmatpush1.msra.mxu0 %v2681
          %2714 = vmatprep.subr.mxu0 0.0
          %2715 = vmatpush1.msra.mxu0 %v2680
          %2716 = vmatprep.subr.mxu0 0.0
          %2717 = vmatpush1.msra.mxu0 %v2679
          %2718 = vmatprep.subr.mxu0 0.0
          %2719 = vmatpush1.msra.mxu0 %v2678
          %2720 = vmatprep.subr.mxu0 0.0
          %2721 = vmatpush1.msra.mxu0 %v2677
          %2722 = vmatprep.subr.mxu0 0.0
          %2723 = vmatpush1.msra.mxu0 %v2676
          %2724 = vmatprep.subr.mxu0 0.0
          %2725 = vmatpush2.msra.mxu0 0.0
          %2726 = vmatprep.subr.mxu0 0.0
          %2727 = vmatpush2.msra.mxu0 0.0
          %2728 = vmatprep.subr.mxu0 0.0
          %2729 = vmatpush2.msra.mxu0 0.0
          %2730 = vmatprep.subr.mxu0 0.0
          %2731 = vmatpush2.msra.mxu0 0.0
          %2732 = vmatprep.subr.mxu0 0.0
          %2733 = vmatpush2.msra.mxu0 0.0
          %2734 = vmatprep.subr.mxu0 0.0
          %2735 = vmatpush2.msra.mxu0 0.0
          %2736 = vmatprep.subr.mxu0 0.0
          %2737 = vmatpush2.msra.mxu0 0.0
          %2738 = vmatprep.subr.mxu0 0.0
          %2739 = vmatpush2.msra.mxu0 0.0
          %2740 = vmatprep.subr.mxu0 0.0
          %2741 = vmatpush2.msra.mxu0 0.0
          %2742 = vmatprep.subr.mxu0 0.0
          %2743 = vmatpush2.msra.mxu0 0.0
          %2744 = vmatprep.subr.mxu0 0.0
          %2745 = vmatpush2.msra.mxu0 0.0
          %2746 = vmatprep.subr.mxu0 0.0
          %2747 = vmatpush2.msra.mxu0 0.0
          %2748 = vmatprep.subr.mxu0 0.0
          %2749 = vmatpush2.msra.mxu0 0.0
          %2750 = vmatprep.subr.mxu0 0.0
          %2751 = vmatpush2.msra.mxu0 0.0
          %2752 = vmatprep.subr.mxu0 0.0
          %2753 = vmatpush2.msra.mxu0 0.0
          %2754 = vmatprep.subr.mxu0 0.0
          %2755 = vmatpush2.msra.mxu0 0.0
          %2756 = vmatprep.mubr.f32.mxu0 0.0
          %2757 = vmatmul.mubr.f32.gmra.mxu0 %v2621
          %v2758 = vpop.f32.mrf.mxu0
          %v2759 = vadd.f32 0.0, %v2758
          %v2760 = vpop.f32.mrf.mxu0
          %2761 = vmatprep.mubr.f32.mxu0 0.0
          %2762 = vmatmul.mubr.f32.gmra.mxu0 %v2623
          %v2763 = vpop.f32.mrf.mxu0
          %v2764 = vadd.f32 0.0, %v2763
          %v2765 = vpop.f32.mrf.mxu0
          %2766 = vmatprep.mubr.f32.mxu0 0.0
          %2767 = vmatmul.mubr.f32.gmra.mxu0 %v2626
          %v2768 = vpop.f32.mrf.mxu0
          %v2769 = vadd.f32 0.0, %v2768
          %v2770 = vpop.f32.mrf.mxu0
          %2771 = vmatprep.mubr.f32.mxu0 0.0
          %2772 = vmatmul.mubr.f32.gmra.mxu0 %v2628
          %v2773 = vpop.f32.mrf.mxu0
          %v2774 = vadd.f32 0.0, %v2773
          %v2775 = vpop.f32.mrf.mxu0
          %2776 = vmatprep.mubr.f32.mxu0 0.0
          %2777 = vmatmul.mubr.f32.gmra.mxu0 %v2631
          %v2778 = vpop.f32.mrf.mxu0
          %v2779 = vadd.f32 0.0, %v2778
          %v2780 = vpop.f32.mrf.mxu0
          %2781 = vmatprep.mubr.f32.mxu0 0.0
          %2782 = vmatmul.mubr.f32.gmra.mxu0 %v2633
          %v2783 = vpop.f32.mrf.mxu0
          %v2784 = vadd.f32 0.0, %v2783
          %v2785 = vpop.f32.mrf.mxu0
          %2786 = vmatprep.mubr.f32.mxu0 0.0
          %2787 = vmatmul.mubr.f32.gmra.mxu0 %v2636
          %v2788 = vpop.f32.mrf.mxu0
          %v2789 = vadd.f32 0.0, %v2788
          %v2790 = vpop.f32.mrf.mxu0
          %2791 = vmatprep.mubr.f32.mxu0 0.0
          %2792 = vmatmul.mubr.f32.gmra.mxu0 %v2638
          %v2793 = vpop.f32.mrf.mxu0
          %v2794 = vadd.f32 0.0, %v2793
          %v2795 = vpop.f32.mrf.mxu0
          %2796 = vmatprep.mubr.f32.mxu0 0.0
          %2797 = vmatmul.mubr.f32.gmra.mxu0 %v2641
          %v2798 = vpop.f32.mrf.mxu0
          %v2799 = vadd.f32 0.0, %v2798
          %v2800 = vpop.f32.mrf.mxu0
          %2801 = vmatprep.mubr.f32.mxu0 0.0
          %2802 = vmatmul.mubr.f32.gmra.mxu0 %v2643
          %v2803 = vpop.f32.mrf.mxu0
          %v2804 = vadd.f32 0.0, %v2803
          %v2805 = vpop.f32.mrf.mxu0
          %2806 = vmatprep.mubr.f32.mxu0 0.0
          %2807 = vmatmul.mubr.f32.gmra.mxu0 %v2646
          %v2808 = vpop.f32.mrf.mxu0
          %v2809 = vadd.f32 0.0, %v2808
          %v2810 = vpop.f32.mrf.mxu0
          %2811 = vmatprep.mubr.f32.mxu0 0.0
          %2812 = vmatmul.mubr.f32.gmra.mxu0 %v2648
          %v2813 = vpop.f32.mrf.mxu0
          %v2814 = vadd.f32 0.0, %v2813
          %v2815 = vpop.f32.mrf.mxu0
          %2816 = vmatprep.mubr.f32.mxu0 0.0
          %2817 = vmatmul.mubr.f32.gmra.mxu0 %v2651
          %v2818 = vpop.f32.mrf.mxu0
          %v2819 = vadd.f32 0.0, %v2818
          %v2820 = vpop.f32.mrf.mxu0
          %2821 = vmatprep.mubr.f32.mxu0 0.0
          %2822 = vmatmul.mubr.f32.gmra.mxu0 %v2653
          %v2823 = vpop.f32.mrf.mxu0
          %v2824 = vadd.f32 0.0, %v2823
          %v2825 = vpop.f32.mrf.mxu0
          %2826 = vmatprep.mubr.f32.mxu0 0.0
          %2827 = vmatmul.mubr.f32.gmra.mxu0 %v2656
          %v2828 = vpop.f32.mrf.mxu0
          %v2829 = vadd.f32 0.0, %v2828
          %v2830 = vpop.f32.mrf.mxu0
          %2831 = vmatprep.mubr.f32.mxu0 0.0
          %2832 = vmatmul.mubr.f32.gmra.mxu0 %v2658
          %v2833 = vpop.f32.mrf.mxu0
          %v2834 = vadd.f32 0.0, %v2833
          %v2835 = vpop.f32.mrf.mxu0
          %2836 = vdwg.mxu0
          %2837 = vmatprep.subr.mxu0 0.0
          %2838 = vmatpush1.msra.mxu0 %v2593
          %2839 = vmatprep.subr.mxu0 0.0
          %2840 = vmatpush1.msra.mxu0 %v2592
          %2841 = vmatprep.subr.mxu0 0.0
          %2842 = vmatpush1.msra.mxu0 %v2591
          %2843 = vmatprep.subr.mxu0 0.0
          %2844 = vmatpush1.msra.mxu0 %v2590
          %2845 = vmatprep.subr.mxu0 0.0
          %2846 = vmatpush1.msra.mxu0 %v2589
          %2847 = vmatprep.subr.mxu0 0.0
          %2848 = vmatpush1.msra.mxu0 %v2588
          %2849 = vmatprep.subr.mxu0 0.0
          %2850 = vmatpush1.msra.mxu0 %v2587
          %2851 = vmatprep.subr.mxu0 0.0
          %2852 = vmatpush1.msra.mxu0 %v2586
          %2853 = vmatprep.subr.mxu0 0.0
          %2854 = vmatpush1.msra.mxu0 %v2585
          %2855 = vmatprep.subr.mxu0 0.0
          %2856 = vmatpush1.msra.mxu0 %v2584
          %2857 = vmatprep.subr.mxu0 0.0
          %2858 = vmatpush1.msra.mxu0 %v2583
          %2859 = vmatprep.subr.mxu0 0.0
          %2860 = vmatpush1.msra.mxu0 %v2582
          %2861 = vmatprep.subr.mxu0 0.0
          %2862 = vmatpush1.msra.mxu0 %v2581
          %2863 = vmatprep.subr.mxu0 0.0
          %2864 = vmatpush1.msra.mxu0 %v2580
          %2865 = vmatprep.subr.mxu0 0.0
          %2866 = vmatpush1.msra.mxu0 %v2579
          %2867 = vmatprep.subr.mxu0 0.0
          %2868 = vmatpush1.msra.mxu0 %v2578
          %2869 = vmatprep.subr.mxu0 0.0
          %2870 = vmatpush2.msra.mxu0 0.0
          %2871 = vmatprep.subr.mxu0 0.0
          %2872 = vmatpush2.msra.mxu0 0.0
          %2873 = vmatprep.subr.mxu0 0.0
          %2874 = vmatpush2.msra.mxu0 0.0
          %2875 = vmatprep.subr.mxu0 0.0
          %2876 = vmatpush2.msra.mxu0 0.0
          %2877 = vmatprep.subr.mxu0 0.0
          %2878 = vmatpush2.msra.mxu0 0.0
          %2879 = vmatprep.subr.mxu0 0.0
          %2880 = vmatpush2.msra.mxu0 0.0
          %2881 = vmatprep.subr.mxu0 0.0
          %2882 = vmatpush2.msra.mxu0 0.0
          %2883 = vmatprep.subr.mxu0 0.0
          %2884 = vmatpush2.msra.mxu0 0.0
          %2885 = vmatprep.subr.mxu0 0.0
          %2886 = vmatpush2.msra.mxu0 0.0
          %2887 = vmatprep.subr.mxu0 0.0
          %2888 = vmatpush2.msra.mxu0 0.0
          %2889 = vmatprep.subr.mxu0 0.0
          %2890 = vmatpush2.msra.mxu0 0.0
          %2891 = vmatprep.subr.mxu0 0.0
          %2892 = vmatpush2.msra.mxu0 0.0
          %2893 = vmatprep.subr.mxu0 0.0
          %2894 = vmatpush2.msra.mxu0 0.0
          %2895 = vmatprep.subr.mxu0 0.0
          %2896 = vmatpush2.msra.mxu0 0.0
          %2897 = vmatprep.subr.mxu0 0.0
          %2898 = vmatpush2.msra.mxu0 0.0
          %2899 = vmatprep.subr.mxu0 0.0
          %2900 = vmatpush2.msra.mxu0 0.0
          %2901 = vmatprep.mubr.f32.mxu0 0.0
          %2902 = vmatmul.mubr.f32.gmra.mxu0 %v2554
          %v2903 = vpop.f32.mrf.mxu0
          %v2904 = vadd.f32 %v2759, %v2903
          %v2905 = vpop.f32.mrf.mxu0
          %2906 = vmatprep.mubr.f32.mxu0 0.0
          %2907 = vmatmul.mubr.f32.gmra.mxu0 %v2555
          %v2908 = vpop.f32.mrf.mxu0
          %v2909 = vadd.f32 %v2764, %v2908
          %v2910 = vpop.f32.mrf.mxu0
          %2911 = vmatprep.mubr.f32.mxu0 0.0
          %2912 = vmatmul.mubr.f32.gmra.mxu0 %v2557
          %v2913 = vpop.f32.mrf.mxu0
          %v2914 = vadd.f32 %v2769, %v2913
          %v2915 = vpop.f32.mrf.mxu0
          %2916 = vmatprep.mubr.f32.mxu0 0.0
          %2917 = vmatmul.mubr.f32.gmra.mxu0 %v2558
          %v2918 = vpop.f32.mrf.mxu0
          %v2919 = vadd.f32 %v2774, %v2918
          %v2920 = vpop.f32.mrf.mxu0
          %2921 = vmatprep.mubr.f32.mxu0 0.0
          %2922 = vmatmul.mubr.f32.gmra.mxu0 %v2560
          %v2923 = vpop.f32.mrf.mxu0
          %v2924 = vadd.f32 %v2779, %v2923
          %v2925 = vpop.f32.mrf.mxu0
          %2926 = vmatprep.mubr.f32.mxu0 0.0
          %2927 = vmatmul.mubr.f32.gmra.mxu0 %v2561
          %v2928 = vpop.f32.mrf.mxu0
          %v2929 = vadd.f32 %v2784, %v2928
          %v2930 = vpop.f32.mrf.mxu0
          %2931 = vmatprep.mubr.f32.mxu0 0.0
          %2932 = vmatmul.mubr.f32.gmra.mxu0 %v2563
          %v2933 = vpop.f32.mrf.mxu0
          %v2934 = vadd.f32 %v2789, %v2933
          %v2935 = vpop.f32.mrf.mxu0
          %2936 = vmatprep.mubr.f32.mxu0 0.0
          %2937 = vmatmul.mubr.f32.gmra.mxu0 %v2564
          %v2938 = vpop.f32.mrf.mxu0
          %v2939 = vadd.f32 %v2794, %v2938
          %v2940 = vpop.f32.mrf.mxu0
          %2941 = vmatprep.mubr.f32.mxu0 0.0
          %2942 = vmatmul.mubr.f32.gmra.mxu0 %v2566
          %v2943 = vpop.f32.mrf.mxu0
          %v2944 = vadd.f32 %v2799, %v2943
          %v2945 = vpop.f32.mrf.mxu0
          %2946 = vmatprep.mubr.f32.mxu0 0.0
          %2947 = vmatmul.mubr.f32.gmra.mxu0 %v2567
          %v2948 = vpop.f32.mrf.mxu0
          %v2949 = vadd.f32 %v2804, %v2948
          %v2950 = vpop.f32.mrf.mxu0
          %2951 = vmatprep.mubr.f32.mxu0 0.0
          %2952 = vmatmul.mubr.f32.gmra.mxu0 %v2569
          %v2953 = vpop.f32.mrf.mxu0
          %v2954 = vadd.f32 %v2809, %v2953
          %v2955 = vpop.f32.mrf.mxu0
          %2956 = vmatprep.mubr.f32.mxu0 0.0
          %2957 = vmatmul.mubr.f32.gmra.mxu0 %v2570
          %v2958 = vpop.f32.mrf.mxu0
          %v2959 = vadd.f32 %v2814, %v2958
          %v2960 = vpop.f32.mrf.mxu0
          %2961 = vmatprep.mubr.f32.mxu0 0.0
          %2962 = vmatmul.mubr.f32.gmra.mxu0 %v2572
          %v2963 = vpop.f32.mrf.mxu0
          %v2964 = vadd.f32 %v2819, %v2963
          %v2965 = vpop.f32.mrf.mxu0
          %2966 = vmatprep.mubr.f32.mxu0 0.0
          %2967 = vmatmul.mubr.f32.gmra.mxu0 %v2573
          %v2968 = vpop.f32.mrf.mxu0
          %v2969 = vadd.f32 %v2824, %v2968
          %v2970 = vpop.f32.mrf.mxu0
          %2971 = vmatprep.mubr.f32.mxu0 0.0
          %2972 = vmatmul.mubr.f32.gmra.mxu0 %v2575
          %v2973 = vpop.f32.mrf.mxu0
          %v2974 = vadd.f32 %v2829, %v2973
          %v2975 = vpop.f32.mrf.mxu0
          %2976 = vmatprep.mubr.f32.mxu0 0.0
          %2977 = vmatmul.mubr.f32.gmra.mxu0 %v2576
          %v2978 = vpop.f32.mrf.mxu0
          %v2979 = vadd.f32 %v2834, %v2978
          %v2980 = vpop.f32.mrf.mxu0
          %2981 = vdwg.mxu0
          %vm2982 = vcmask 1045504
          %v2983 = vrot.slane %v2554, 2
          %v2984 = vrot.slane %v2555, 2
          %v2985 = vsel %vm2982, %v2983, %v2984
          %v2986 = vrot.slane %v2556, 2
          %v2987 = vsel %vm2982, %v2984, %v2986
          %v2988 = vrot.slane %v2557, 2
          %v2989 = vrot.slane %v2558, 2
          %v2990 = vsel %vm2982, %v2988, %v2989
          %v2991 = vrot.slane %v2559, 2
          %v2992 = vsel %vm2982, %v2989, %v2991
          %v2993 = vrot.slane %v2560, 2
          %v2994 = vrot.slane %v2561, 2
          %v2995 = vsel %vm2982, %v2993, %v2994
          %v2996 = vrot.slane %v2562, 2
          %v2997 = vsel %vm2982, %v2994, %v2996
          %v2998 = vrot.slane %v2563, 2
          %v2999 = vrot.slane %v2564, 2
          %v3000 = vsel %vm2982, %v2998, %v2999
          %v3001 = vrot.slane %v2565, 2
          %v3002 = vsel %vm2982, %v2999, %v3001
          %v3003 = vrot.slane %v2566, 2
          %v3004 = vrot.slane %v2567, 2
          %v3005 = vsel %vm2982, %v3003, %v3004
          %v3006 = vrot.slane %v2568, 2
          %v3007 = vsel %vm2982, %v3004, %v3006
          %v3008 = vrot.slane %v2569, 2
          %v3009 = vrot.slane %v2570, 2
          %v3010 = vsel %vm2982, %v3008, %v3009
          %v3011 = vrot.slane %v2571, 2
          %v3012 = vsel %vm2982, %v3009, %v3011
          %v3013 = vrot.slane %v2572, 2
          %v3014 = vrot.slane %v2573, 2
          %v3015 = vsel %vm2982, %v3013, %v3014
          %v3016 = vrot.slane %v2574, 2
          %v3017 = vsel %vm2982, %v3014, %v3016
          %v3018 = vrot.slane %v2575, 2
          %v3019 = vrot.slane %v2576, 2
          %v3020 = vsel %vm2982, %v3018, %v3019
          %v3021 = vrot.slane %v2577, 2
          %v3022 = vsel %vm2982, %v3019, %v3021
          %s3039 = scalar_lea.vmem [#allocation9], 256
          %v3040 = vld [vmem:[%s3039] sm:$0xff]
          %v3041 = vld [vmem:[%s3039 + $0x8] sm:$0xff]
          %v3042 = vld [vmem:[%s3039 + $0x10] sm:$0xff]
          %v3043 = vld [vmem:[%s3039 + $0x18] sm:$0xff]
          %v3044 = vld [vmem:[%s3039 + $0x20] sm:$0xff]
          %v3045 = vld [vmem:[%s3039 + $0x28] sm:$0xff]
          %v3046 = vld [vmem:[%s3039 + $0x30] sm:$0xff]
          %v3047 = vld [vmem:[%s3039 + $0x38] sm:$0xff]
          %v3048 = vld [vmem:[%s3039 + $0x40] sm:$0xff]
          %v3049 = vld [vmem:[%s3039 + $0x48] sm:$0xff]
          %v3050 = vld [vmem:[%s3039 + $0x50] sm:$0xff]
          %v3051 = vld [vmem:[%s3039 + $0x58] sm:$0xff]
          %v3052 = vld [vmem:[%s3039 + $0x60] sm:$0xff]
          %v3053 = vld [vmem:[%s3039 + $0x68] sm:$0xff]
          %v3054 = vld [vmem:[%s3039 + $0x70] sm:$0xff]
          %v3055 = vld [vmem:[%s3039 + $0x78] sm:$0xff]
          %3056 = vmatprep.subr.mxu0 0.0
          %3057 = vmatpush1.msra.mxu0 %v3055
          %3058 = vmatprep.subr.mxu0 0.0
          %3059 = vmatpush1.msra.mxu0 %v3054
          %3060 = vmatprep.subr.mxu0 0.0
          %3061 = vmatpush1.msra.mxu0 %v3053
          %3062 = vmatprep.subr.mxu0 0.0
          %3063 = vmatpush1.msra.mxu0 %v3052
          %3064 = vmatprep.subr.mxu0 0.0
          %3065 = vmatpush1.msra.mxu0 %v3051
          %3066 = vmatprep.subr.mxu0 0.0
          %3067 = vmatpush1.msra.mxu0 %v3050
          %3068 = vmatprep.subr.mxu0 0.0
          %3069 = vmatpush1.msra.mxu0 %v3049
          %3070 = vmatprep.subr.mxu0 0.0
          %3071 = vmatpush1.msra.mxu0 %v3048
          %3072 = vmatprep.subr.mxu0 0.0
          %3073 = vmatpush1.msra.mxu0 %v3047
          %3074 = vmatprep.subr.mxu0 0.0
          %3075 = vmatpush1.msra.mxu0 %v3046
          %3076 = vmatprep.subr.mxu0 0.0
          %3077 = vmatpush1.msra.mxu0 %v3045
          %3078 = vmatprep.subr.mxu0 0.0
          %3079 = vmatpush1.msra.mxu0 %v3044
          %3080 = vmatprep.subr.mxu0 0.0
          %3081 = vmatpush1.msra.mxu0 %v3043
          %3082 = vmatprep.subr.mxu0 0.0
          %3083 = vmatpush1.msra.mxu0 %v3042
          %3084 = vmatprep.subr.mxu0 0.0
          %3085 = vmatpush1.msra.mxu0 %v3041
          %3086 = vmatprep.subr.mxu0 0.0
          %3087 = vmatpush1.msra.mxu0 %v3040
          %3088 = vmatprep.subr.mxu0 0.0
          %3089 = vmatpush2.msra.mxu0 0.0
          %3090 = vmatprep.subr.mxu0 0.0
          %3091 = vmatpush2.msra.mxu0 0.0
          %3092 = vmatprep.subr.mxu0 0.0
          %3093 = vmatpush2.msra.mxu0 0.0
          %3094 = vmatprep.subr.mxu0 0.0
          %3095 = vmatpush2.msra.mxu0 0.0
          %3096 = vmatprep.subr.mxu0 0.0
          %3097 = vmatpush2.msra.mxu0 0.0
          %3098 = vmatprep.subr.mxu0 0.0
          %3099 = vmatpush2.msra.mxu0 0.0
          %3100 = vmatprep.subr.mxu0 0.0
          %3101 = vmatpush2.msra.mxu0 0.0
          %3102 = vmatprep.subr.mxu0 0.0
          %3103 = vmatpush2.msra.mxu0 0.0
          %3104 = vmatprep.subr.mxu0 0.0
          %3105 = vmatpush2.msra.mxu0 0.0
          %3106 = vmatprep.subr.mxu0 0.0
          %3107 = vmatpush2.msra.mxu0 0.0
          %3108 = vmatprep.subr.mxu0 0.0
          %3109 = vmatpush2.msra.mxu0 0.0
          %3110 = vmatprep.subr.mxu0 0.0
          %3111 = vmatpush2.msra.mxu0 0.0
          %3112 = vmatprep.subr.mxu0 0.0
          %3113 = vmatpush2.msra.mxu0 0.0
          %3114 = vmatprep.subr.mxu0 0.0
          %3115 = vmatpush2.msra.mxu0 0.0
          %3116 = vmatprep.subr.mxu0 0.0
          %3117 = vmatpush2.msra.mxu0 0.0
          %3118 = vmatprep.subr.mxu0 0.0
          %3119 = vmatpush2.msra.mxu0 0.0
          %3120 = vmatprep.mubr.f32.mxu0 0.0
          %3121 = vmatmul.mubr.f32.gmra.mxu0 %v2985
          %v3122 = vpop.f32.mrf.mxu0
          %v3123 = vadd.f32 0.0, %v3122
          %v3124 = vpop.f32.mrf.mxu0
          %3125 = vmatprep.mubr.f32.mxu0 0.0
          %3126 = vmatmul.mubr.f32.gmra.mxu0 %v2987
          %v3127 = vpop.f32.mrf.mxu0
          %v3128 = vadd.f32 0.0, %v3127
          %v3129 = vpop.f32.mrf.mxu0
          %3130 = vmatprep.mubr.f32.mxu0 0.0
          %3131 = vmatmul.mubr.f32.gmra.mxu0 %v2990
          %v3132 = vpop.f32.mrf.mxu0
          %v3133 = vadd.f32 0.0, %v3132
          %v3134 = vpop.f32.mrf.mxu0
          %3135 = vmatprep.mubr.f32.mxu0 0.0
          %3136 = vmatmul.mubr.f32.gmra.mxu0 %v2992
          %v3137 = vpop.f32.mrf.mxu0
          %v3138 = vadd.f32 0.0, %v3137
          %v3139 = vpop.f32.mrf.mxu0
          %3140 = vmatprep.mubr.f32.mxu0 0.0
          %3141 = vmatmul.mubr.f32.gmra.mxu0 %v2995
          %v3142 = vpop.f32.mrf.mxu0
          %v3143 = vadd.f32 0.0, %v3142
          %v3144 = vpop.f32.mrf.mxu0
          %3145 = vmatprep.mubr.f32.mxu0 0.0
          %3146 = vmatmul.mubr.f32.gmra.mxu0 %v2997
          %v3147 = vpop.f32.mrf.mxu0
          %v3148 = vadd.f32 0.0, %v3147
          %v3149 = vpop.f32.mrf.mxu0
          %3150 = vmatprep.mubr.f32.mxu0 0.0
          %3151 = vmatmul.mubr.f32.gmra.mxu0 %v3000
          %v3152 = vpop.f32.mrf.mxu0
          %v3153 = vadd.f32 0.0, %v3152
          %v3154 = vpop.f32.mrf.mxu0
          %3155 = vmatprep.mubr.f32.mxu0 0.0
          %3156 = vmatmul.mubr.f32.gmra.mxu0 %v3002
          %v3157 = vpop.f32.mrf.mxu0
          %v3158 = vadd.f32 0.0, %v3157
          %v3159 = vpop.f32.mrf.mxu0
          %3160 = vmatprep.mubr.f32.mxu0 0.0
          %3161 = vmatmul.mubr.f32.gmra.mxu0 %v3005
          %v3162 = vpop.f32.mrf.mxu0
          %v3163 = vadd.f32 0.0, %v3162
          %v3164 = vpop.f32.mrf.mxu0
          %3165 = vmatprep.mubr.f32.mxu0 0.0
          %3166 = vmatmul.mubr.f32.gmra.mxu0 %v3007
          %v3167 = vpop.f32.mrf.mxu0
          %v3168 = vadd.f32 0.0, %v3167
          %v3169 = vpop.f32.mrf.mxu0
          %3170 = vmatprep.mubr.f32.mxu0 0.0
          %3171 = vmatmul.mubr.f32.gmra.mxu0 %v3010
          %v3172 = vpop.f32.mrf.mxu0
          %v3173 = vadd.f32 0.0, %v3172
          %v3174 = vpop.f32.mrf.mxu0
          %3175 = vmatprep.mubr.f32.mxu0 0.0
          %3176 = vmatmul.mubr.f32.gmra.mxu0 %v3012
          %v3177 = vpop.f32.mrf.mxu0
          %v3178 = vadd.f32 0.0, %v3177
          %v3179 = vpop.f32.mrf.mxu0
          %3180 = vmatprep.mubr.f32.mxu0 0.0
          %3181 = vmatmul.mubr.f32.gmra.mxu0 %v3015
          %v3182 = vpop.f32.mrf.mxu0
          %v3183 = vadd.f32 0.0, %v3182
          %v3184 = vpop.f32.mrf.mxu0
          %3185 = vmatprep.mubr.f32.mxu0 0.0
          %3186 = vmatmul.mubr.f32.gmra.mxu0 %v3017
          %v3187 = vpop.f32.mrf.mxu0
          %v3188 = vadd.f32 0.0, %v3187
          %v3189 = vpop.f32.mrf.mxu0
          %3190 = vmatprep.mubr.f32.mxu0 0.0
          %3191 = vmatmul.mubr.f32.gmra.mxu0 %v3020
          %v3192 = vpop.f32.mrf.mxu0
          %v3193 = vadd.f32 0.0, %v3192
          %v3194 = vpop.f32.mrf.mxu0
          %3195 = vmatprep.mubr.f32.mxu0 0.0
          %3196 = vmatmul.mubr.f32.gmra.mxu0 %v3022
          %v3197 = vpop.f32.mrf.mxu0
          %v3198 = vadd.f32 0.0, %v3197
          %v3199 = vpop.f32.mrf.mxu0
          %3200 = vdwg.mxu0
          %v3201 = vadd.f32 %v2904, %v3123
          %v3202 = vadd.f32 %v2909, %v3128
          %v3203 = vadd.f32 %v2914, %v3133
          %v3204 = vadd.f32 %v2919, %v3138
          %v3205 = vadd.f32 %v2924, %v3143
          %v3206 = vadd.f32 %v2929, %v3148
          %v3207 = vadd.f32 %v2934, %v3153
          %v3208 = vadd.f32 %v2939, %v3158
          %v3209 = vadd.f32 %v2944, %v3163
          %v3210 = vadd.f32 %v2949, %v3168
          %v3211 = vadd.f32 %v2954, %v3173
          %v3212 = vadd.f32 %v2959, %v3178
          %v3213 = vadd.f32 %v2964, %v3183
          %v3214 = vadd.f32 %v2969, %v3188
          %v3215 = vadd.f32 %v2974, %v3193
          %v3216 = vadd.f32 %v2979, %v3198
          %s3217 = sadd.s32 %s2551, 1
          %s3218 = smul.u32 %s3217, 24
          %s3219 = scalar_lea.vmem [#allocation3], %s3218
          %v3220 = vld [vmem:[%s3219] sm:$0xff]
          %v3221 = vld [vmem:[%s3219 + $0x8] sm:$0xff]
          %v3222 = vld [vmem:[%s3219 + $0x10] sm:$0x3]
          %v3223 = vld [vmem:[%s3219 + $0x18] sm:$0xff]
          %v3224 = vld [vmem:[%s3219 + $0x20] sm:$0xff]
          %v3225 = vld [vmem:[%s3219 + $0x28] sm:$0x3]
          %v3226 = vld [vmem:[%s3219 + $0x30] sm:$0xff]
          %v3227 = vld [vmem:[%s3219 + $0x38] sm:$0xff]
          %v3228 = vld [vmem:[%s3219 + $0x40] sm:$0x3]
          %v3229 = vld [vmem:[%s3219 + $0x48] sm:$0xff]
          %v3230 = vld [vmem:[%s3219 + $0x50] sm:$0xff]
          %v3231 = vld [vmem:[%s3219 + $0x58] sm:$0x3]
          %v3232 = vld [vmem:[%s3219 + $0x60] sm:$0xff]
          %v3233 = vld [vmem:[%s3219 + $0x68] sm:$0xff]
          %v3234 = vld [vmem:[%s3219 + $0x70] sm:$0x3]
          %v3235 = vld [vmem:[%s3219 + $0x78] sm:$0xff]
          %v3236 = vld [vmem:[%s3219 + $0x80] sm:$0xff]
          %v3237 = vld [vmem:[%s3219 + $0x88] sm:$0x3]
          %v3238 = vld [vmem:[%s3219 + $0x90] sm:$0xff]
          %v3239 = vld [vmem:[%s3219 + $0x98] sm:$0xff]
          %v3240 = vld [vmem:[%s3219 + $0xa0] sm:$0x3]
          %v3241 = vld [vmem:[%s3219 + $0xa8] sm:$0xff]
          %v3242 = vld [vmem:[%s3219 + $0xb0] sm:$0xff]
          %v3243 = vld [vmem:[%s3219 + $0xb8] sm:$0x3]
          %s3244 = scalar_lea.vmem [#allocation9], 384
          %v3245 = vld [vmem:[%s3244] sm:$0xff]
          %v3246 = vld [vmem:[%s3244 + $0x8] sm:$0xff]
          %v3247 = vld [vmem:[%s3244 + $0x10] sm:$0xff]
          %v3248 = vld [vmem:[%s3244 + $0x18] sm:$0xff]
          %v3249 = vld [vmem:[%s3244 + $0x20] sm:$0xff]
          %v3250 = vld [vmem:[%s3244 + $0x28] sm:$0xff]
          %v3251 = vld [vmem:[%s3244 + $0x30] sm:$0xff]
          %v3252 = vld [vmem:[%s3244 + $0x38] sm:$0xff]
          %v3253 = vld [vmem:[%s3244 + $0x40] sm:$0xff]
          %v3254 = vld [vmem:[%s3244 + $0x48] sm:$0xff]
          %v3255 = vld [vmem:[%s3244 + $0x50] sm:$0xff]
          %v3256 = vld [vmem:[%s3244 + $0x58] sm:$0xff]
          %v3257 = vld [vmem:[%s3244 + $0x60] sm:$0xff]
          %v3258 = vld [vmem:[%s3244 + $0x68] sm:$0xff]
          %v3259 = vld [vmem:[%s3244 + $0x70] sm:$0xff]
          %v3260 = vld [vmem:[%s3244 + $0x78] sm:$0xff]
          %3261 = vmatprep.subr.mxu0 0.0
          %3262 = vmatpush1.msra.mxu0 %v3260
          %3263 = vmatprep.subr.mxu0 0.0
          %3264 = vmatpush1.msra.mxu0 %v3259
          %3265 = vmatprep.subr.mxu0 0.0
          %3266 = vmatpush1.msra.mxu0 %v3258
          %3267 = vmatprep.subr.mxu0 0.0
          %3268 = vmatpush1.msra.mxu0 %v3257
          %3269 = vmatprep.subr.mxu0 0.0
          %3270 = vmatpush1.msra.mxu0 %v3256
          %3271 = vmatprep.subr.mxu0 0.0
          %3272 = vmatpush1.msra.mxu0 %v3255
          %3273 = vmatprep.subr.mxu0 0.0
          %3274 = vmatpush1.msra.mxu0 %v3254
          %3275 = vmatprep.subr.mxu0 0.0
          %3276 = vmatpush1.msra.mxu0 %v3253
          %3277 = vmatprep.subr.mxu0 0.0
          %3278 = vmatpush1.msra.mxu0 %v3252
          %3279 = vmatprep.subr.mxu0 0.0
          %3280 = vmatpush1.msra.mxu0 %v3251
          %3281 = vmatprep.subr.mxu0 0.0
          %3282 = vmatpush1.msra.mxu0 %v3250
          %3283 = vmatprep.subr.mxu0 0.0
          %3284 = vmatpush1.msra.mxu0 %v3249
          %3285 = vmatprep.subr.mxu0 0.0
          %3286 = vmatpush1.msra.mxu0 %v3248
          %3287 = vmatprep.subr.mxu0 0.0
          %3288 = vmatpush1.msra.mxu0 %v3247
          %3289 = vmatprep.subr.mxu0 0.0
          %3290 = vmatpush1.msra.mxu0 %v3246
          %3291 = vmatprep.subr.mxu0 0.0
          %3292 = vmatpush1.msra.mxu0 %v3245
          %3293 = vmatprep.subr.mxu0 0.0
          %3294 = vmatpush2.msra.mxu0 0.0
          %3295 = vmatprep.subr.mxu0 0.0
          %3296 = vmatpush2.msra.mxu0 0.0
          %3297 = vmatprep.subr.mxu0 0.0
          %3298 = vmatpush2.msra.mxu0 0.0
          %3299 = vmatprep.subr.mxu0 0.0
          %3300 = vmatpush2.msra.mxu0 0.0
          %3301 = vmatprep.subr.mxu0 0.0
          %3302 = vmatpush2.msra.mxu0 0.0
          %3303 = vmatprep.subr.mxu0 0.0
          %3304 = vmatpush2.msra.mxu0 0.0
          %3305 = vmatprep.subr.mxu0 0.0
          %3306 = vmatpush2.msra.mxu0 0.0
          %3307 = vmatprep.subr.mxu0 0.0
          %3308 = vmatpush2.msra.mxu0 0.0
          %3309 = vmatprep.subr.mxu0 0.0
          %3310 = vmatpush2.msra.mxu0 0.0
          %3311 = vmatprep.subr.mxu0 0.0
          %3312 = vmatpush2.msra.mxu0 0.0
          %3313 = vmatprep.subr.mxu0 0.0
          %3314 = vmatpush2.msra.mxu0 0.0
          %3315 = vmatprep.subr.mxu0 0.0
          %3316 = vmatpush2.msra.mxu0 0.0
          %3317 = vmatprep.subr.mxu0 0.0
          %3318 = vmatpush2.msra.mxu0 0.0
          %3319 = vmatprep.subr.mxu0 0.0
          %3320 = vmatpush2.msra.mxu0 0.0
          %3321 = vmatprep.subr.mxu0 0.0
          %3322 = vmatpush2.msra.mxu0 0.0
          %3323 = vmatprep.subr.mxu0 0.0
          %3324 = vmatpush2.msra.mxu0 0.0
          %3325 = vmatprep.mubr.f32.mxu0 0.0
          %3326 = vmatmul.mubr.f32.gmra.mxu0 %v3220
          %v3327 = vpop.f32.mrf.mxu0
          %v3328 = vadd.f32 0.0, %v3327
          %v3329 = vpop.f32.mrf.mxu0
          %3330 = vmatprep.mubr.f32.mxu0 0.0
          %3331 = vmatmul.mubr.f32.gmra.mxu0 %v3221
          %v3332 = vpop.f32.mrf.mxu0
          %v3333 = vadd.f32 0.0, %v3332
          %v3334 = vpop.f32.mrf.mxu0
          %3335 = vmatprep.mubr.f32.mxu0 0.0
          %3336 = vmatmul.mubr.f32.gmra.mxu0 %v3223
          %v3337 = vpop.f32.mrf.mxu0
          %v3338 = vadd.f32 0.0, %v3337
          %v3339 = vpop.f32.mrf.mxu0
          %3340 = vmatprep.mubr.f32.mxu0 0.0
          %3341 = vmatmul.mubr.f32.gmra.mxu0 %v3224
          %v3342 = vpop.f32.mrf.mxu0
          %v3343 = vadd.f32 0.0, %v3342
          %v3344 = vpop.f32.mrf.mxu0
          %3345 = vmatprep.mubr.f32.mxu0 0.0
          %3346 = vmatmul.mubr.f32.gmra.mxu0 %v3226
          %v3347 = vpop.f32.mrf.mxu0
          %v3348 = vadd.f32 0.0, %v3347
          %v3349 = vpop.f32.mrf.mxu0
          %3350 = vmatprep.mubr.f32.mxu0 0.0
          %3351 = vmatmul.mubr.f32.gmra.mxu0 %v3227
          %v3352 = vpop.f32.mrf.mxu0
          %v3353 = vadd.f32 0.0, %v3352
          %v3354 = vpop.f32.mrf.mxu0
          %3355 = vmatprep.mubr.f32.mxu0 0.0
          %3356 = vmatmul.mubr.f32.gmra.mxu0 %v3229
          %v3357 = vpop.f32.mrf.mxu0
          %v3358 = vadd.f32 0.0, %v3357
          %v3359 = vpop.f32.mrf.mxu0
          %3360 = vmatprep.mubr.f32.mxu0 0.0
          %3361 = vmatmul.mubr.f32.gmra.mxu0 %v3230
          %v3362 = vpop.f32.mrf.mxu0
          %v3363 = vadd.f32 0.0, %v3362
          %v3364 = vpop.f32.mrf.mxu0
          %3365 = vmatprep.mubr.f32.mxu0 0.0
          %3366 = vmatmul.mubr.f32.gmra.mxu0 %v3232
          %v3367 = vpop.f32.mrf.mxu0
          %v3368 = vadd.f32 0.0, %v3367
          %v3369 = vpop.f32.mrf.mxu0
          %3370 = vmatprep.mubr.f32.mxu0 0.0
          %3371 = vmatmul.mubr.f32.gmra.mxu0 %v3233
          %v3372 = vpop.f32.mrf.mxu0
          %v3373 = vadd.f32 0.0, %v3372
          %v3374 = vpop.f32.mrf.mxu0
          %3375 = vmatprep.mubr.f32.mxu0 0.0
          %3376 = vmatmul.mubr.f32.gmra.mxu0 %v3235
          %v3377 = vpop.f32.mrf.mxu0
          %v3378 = vadd.f32 0.0, %v3377
          %v3379 = vpop.f32.mrf.mxu0
          %3380 = vmatprep.mubr.f32.mxu0 0.0
          %3381 = vmatmul.mubr.f32.gmra.mxu0 %v3236
          %v3382 = vpop.f32.mrf.mxu0
          %v3383 = vadd.f32 0.0, %v3382
          %v3384 = vpop.f32.mrf.mxu0
          %3385 = vmatprep.mubr.f32.mxu0 0.0
          %3386 = vmatmul.mubr.f32.gmra.mxu0 %v3238
          %v3387 = vpop.f32.mrf.mxu0
          %v3388 = vadd.f32 0.0, %v3387
          %v3389 = vpop.f32.mrf.mxu0
          %3390 = vmatprep.mubr.f32.mxu0 0.0
          %3391 = vmatmul.mubr.f32.gmra.mxu0 %v3239
          %v3392 = vpop.f32.mrf.mxu0
          %v3393 = vadd.f32 0.0, %v3392
          %v3394 = vpop.f32.mrf.mxu0
          %3395 = vmatprep.mubr.f32.mxu0 0.0
          %3396 = vmatmul.mubr.f32.gmra.mxu0 %v3241
          %v3397 = vpop.f32.mrf.mxu0
          %v3398 = vadd.f32 0.0, %v3397
          %v3399 = vpop.f32.mrf.mxu0
          %3400 = vmatprep.mubr.f32.mxu0 0.0
          %3401 = vmatmul.mubr.f32.gmra.mxu0 %v3242
          %v3402 = vpop.f32.mrf.mxu0
          %v3403 = vadd.f32 0.0, %v3402
          %v3404 = vpop.f32.mrf.mxu0
          %3405 = vdwg.mxu0
          %v3406 = vadd.f32 %v3201, %v3328
          %v3407 = vadd.f32 %v3202, %v3333
          %v3408 = vadd.f32 %v3203, %v3338
          %v3409 = vadd.f32 %v3204, %v3343
          %v3410 = vadd.f32 %v3205, %v3348
          %v3411 = vadd.f32 %v3206, %v3353
          %v3412 = vadd.f32 %v3207, %v3358
          %v3413 = vadd.f32 %v3208, %v3363
          %v3414 = vadd.f32 %v3209, %v3368
          %v3415 = vadd.f32 %v3210, %v3373
          %v3416 = vadd.f32 %v3211, %v3378
          %v3417 = vadd.f32 %v3212, %v3383
          %v3418 = vadd.f32 %v3213, %v3388
          %v3419 = vadd.f32 %v3214, %v3393
          %v3420 = vadd.f32 %v3215, %v3398
          %v3421 = vadd.f32 %v3216, %v3403
          %v3446 = vrot.slane %v3220, 1
          %v3447 = vrot.slane %v3221, 1
          %v3448 = vsel %vm2618, %v3446, %v3447
          %v3449 = vrot.slane %v3222, 1
          %v3450 = vsel %vm2618, %v3447, %v3449
          %v3451 = vrot.slane %v3223, 1
          %v3452 = vrot.slane %v3224, 1
          %v3453 = vsel %vm2618, %v3451, %v3452
          %v3454 = vrot.slane %v3225, 1
          %v3455 = vsel %vm2618, %v3452, %v3454
          %v3456 = vrot.slane %v3226, 1
          %v3457 = vrot.slane %v3227, 1
          %v3458 = vsel %vm2618, %v3456, %v3457
          %v3459 = vrot.slane %v3228, 1
          %v3460 = vsel %vm2618, %v3457, %v3459
          %v3461 = vrot.slane %v3229, 1
          %v3462 = vrot.slane %v3230, 1
          %v3463 = vsel %vm2618, %v3461, %v3462
          %v3464 = vrot.slane %v3231, 1
          %v3465 = vsel %vm2618, %v3462, %v3464
          %v3466 = vrot.slane %v3232, 1
          %v3467 = vrot.slane %v3233, 1
          %v3468 = vsel %vm2618, %v3466, %v3467
          %v3469 = vrot.slane %v3234, 1
          %v3470 = vsel %vm2618, %v3467, %v3469
          %v3471 = vrot.slane %v3235, 1
          %v3472 = vrot.slane %v3236, 1
          %v3473 = vsel %vm2618, %v3471, %v3472
          %v3474 = vrot.slane %v3237, 1
          %v3475 = vsel %vm2618, %v3472, %v3474
          %v3476 = vrot.slane %v3238, 1
          %v3477 = vrot.slane %v3239, 1
          %v3478 = vsel %vm2618, %v3476, %v3477
          %v3479 = vrot.slane %v3240, 1
          %v3480 = vsel %vm2618, %v3477, %v3479
          %v3481 = vrot.slane %v3241, 1
          %v3482 = vrot.slane %v3242, 1
          %v3483 = vsel %vm2618, %v3481, %v3482
          %v3484 = vrot.slane %v3243, 1
          %v3485 = vsel %vm2618, %v3482, %v3484
          %s3502 = scalar_lea.vmem [#allocation9], 512
          %v3503 = vld [vmem:[%s3502] sm:$0xff]
          %v3504 = vld [vmem:[%s3502 + $0x8] sm:$0xff]
          %v3505 = vld [vmem:[%s3502 + $0x10] sm:$0xff]
          %v3506 = vld [vmem:[%s3502 + $0x18] sm:$0xff]
          %v3507 = vld [vmem:[%s3502 + $0x20] sm:$0xff]
          %v3508 = vld [vmem:[%s3502 + $0x28] sm:$0xff]
          %v3509 = vld [vmem:[%s3502 + $0x30] sm:$0xff]
          %v3510 = vld [vmem:[%s3502 + $0x38] sm:$0xff]
          %v3511 = vld [vmem:[%s3502 + $0x40] sm:$0xff]
          %v3512 = vld [vmem:[%s3502 + $0x48] sm:$0xff]
          %v3513 = vld [vmem:[%s3502 + $0x50] sm:$0xff]
          %v3514 = vld [vmem:[%s3502 + $0x58] sm:$0xff]
          %v3515 = vld [vmem:[%s3502 + $0x60] sm:$0xff]
          %v3516 = vld [vmem:[%s3502 + $0x68] sm:$0xff]
          %v3517 = vld [vmem:[%s3502 + $0x70] sm:$0xff]
          %v3518 = vld [vmem:[%s3502 + $0x78] sm:$0xff]
          %3519 = vmatprep.subr.mxu0 0.0
          %3520 = vmatpush1.msra.mxu0 %v3518
          %3521 = vmatprep.subr.mxu0 0.0
          %3522 = vmatpush1.msra.mxu0 %v3517
          %3523 = vmatprep.subr.mxu0 0.0
          %3524 = vmatpush1.msra.mxu0 %v3516
          %3525 = vmatprep.subr.mxu0 0.0
          %3526 = vmatpush1.msra.mxu0 %v3515
          %3527 = vmatprep.subr.mxu0 0.0
          %3528 = vmatpush1.msra.mxu0 %v3514
          %3529 = vmatprep.subr.mxu0 0.0
          %3530 = vmatpush1.msra.mxu0 %v3513
          %3531 = vmatprep.subr.mxu0 0.0
          %3532 = vmatpush1.msra.mxu0 %v3512
          %3533 = vmatprep.subr.mxu0 0.0
          %3534 = vmatpush1.msra.mxu0 %v3511
          %3535 = vmatprep.subr.mxu0 0.0
          %3536 = vmatpush1.msra.mxu0 %v3510
          %3537 = vmatprep.subr.mxu0 0.0
          %3538 = vmatpush1.msra.mxu0 %v3509
          %3539 = vmatprep.subr.mxu0 0.0
          %3540 = vmatpush1.msra.mxu0 %v3508
          %3541 = vmatprep.subr.mxu0 0.0
          %3542 = vmatpush1.msra.mxu0 %v3507
          %3543 = vmatprep.subr.mxu0 0.0
          %3544 = vmatpush1.msra.mxu0 %v3506
          %3545 = vmatprep.subr.mxu0 0.0
          %3546 = vmatpush1.msra.mxu0 %v3505
          %3547 = vmatprep.subr.mxu0 0.0
          %3548 = vmatpush1.msra.mxu0 %v3504
          %3549 = vmatprep.subr.mxu0 0.0
          %3550 = vmatpush1.msra.mxu0 %v3503
          %3551 = vmatprep.subr.mxu0 0.0
          %3552 = vmatpush2.msra.mxu0 0.0
          %3553 = vmatprep.subr.mxu0 0.0
          %3554 = vmatpush2.msra.mxu0 0.0
          %3555 = vmatprep.subr.mxu0 0.0
          %3556 = vmatpush2.msra.mxu0 0.0
          %3557 = vmatprep.subr.mxu0 0.0
          %3558 = vmatpush2.msra.mxu0 0.0
          %3559 = vmatprep.subr.mxu0 0.0
          %3560 = vmatpush2.msra.mxu0 0.0
          %3561 = vmatprep.subr.mxu0 0.0
          %3562 = vmatpush2.msra.mxu0 0.0
          %3563 = vmatprep.subr.mxu0 0.0
          %3564 = vmatpush2.msra.mxu0 0.0
          %3565 = vmatprep.subr.mxu0 0.0
          %3566 = vmatpush2.msra.mxu0 0.0
          %3567 = vmatprep.subr.mxu0 0.0
          %3568 = vmatpush2.msra.mxu0 0.0
          %3569 = vmatprep.subr.mxu0 0.0
          %3570 = vmatpush2.msra.mxu0 0.0
          %3571 = vmatprep.subr.mxu0 0.0
          %3572 = vmatpush2.msra.mxu0 0.0
          %3573 = vmatprep.subr.mxu0 0.0
          %3574 = vmatpush2.msra.mxu0 0.0
          %3575 = vmatprep.subr.mxu0 0.0
          %3576 = vmatpush2.msra.mxu0 0.0
          %3577 = vmatprep.subr.mxu0 0.0
          %3578 = vmatpush2.msra.mxu0 0.0
          %3579 = vmatprep.subr.mxu0 0.0
          %3580 = vmatpush2.msra.mxu0 0.0
          %3581 = vmatprep.subr.mxu0 0.0
          %3582 = vmatpush2.msra.mxu0 0.0
          %3583 = vmatprep.mubr.f32.mxu0 0.0
          %3584 = vmatmul.mubr.f32.gmra.mxu0 %v3448
          %v3585 = vpop.f32.mrf.mxu0
          %v3586 = vadd.f32 0.0, %v3585
          %v3587 = vpop.f32.mrf.mxu0
          %3588 = vmatprep.mubr.f32.mxu0 0.0
          %3589 = vmatmul.mubr.f32.gmra.mxu0 %v3450
          %v3590 = vpop.f32.mrf.mxu0
          %v3591 = vadd.f32 0.0, %v3590
          %v3592 = vpop.f32.mrf.mxu0
          %3593 = vmatprep.mubr.f32.mxu0 0.0
          %3594 = vmatmul.mubr.f32.gmra.mxu0 %v3453
          %v3595 = vpop.f32.mrf.mxu0
          %v3596 = vadd.f32 0.0, %v3595
          %v3597 = vpop.f32.mrf.mxu0
          %3598 = vmatprep.mubr.f32.mxu0 0.0
          %3599 = vmatmul.mubr.f32.gmra.mxu0 %v3455
          %v3600 = vpop.f32.mrf.mxu0
          %v3601 = vadd.f32 0.0, %v3600
          %v3602 = vpop.f32.mrf.mxu0
          %3603 = vmatprep.mubr.f32.mxu0 0.0
          %3604 = vmatmul.mubr.f32.gmra.mxu0 %v3458
          %v3605 = vpop.f32.mrf.mxu0
          %v3606 = vadd.f32 0.0, %v3605
          %v3607 = vpop.f32.mrf.mxu0
          %3608 = vmatprep.mubr.f32.mxu0 0.0
          %3609 = vmatmul.mubr.f32.gmra.mxu0 %v3460
          %v3610 = vpop.f32.mrf.mxu0
          %v3611 = vadd.f32 0.0, %v3610
          %v3612 = vpop.f32.mrf.mxu0
          %3613 = vmatprep.mubr.f32.mxu0 0.0
          %3614 = vmatmul.mubr.f32.gmra.mxu0 %v3463
          %v3615 = vpop.f32.mrf.mxu0
          %v3616 = vadd.f32 0.0, %v3615
          %v3617 = vpop.f32.mrf.mxu0
          %3618 = vmatprep.mubr.f32.mxu0 0.0
          %3619 = vmatmul.mubr.f32.gmra.mxu0 %v3465
          %v3620 = vpop.f32.mrf.mxu0
          %v3621 = vadd.f32 0.0, %v3620
          %v3622 = vpop.f32.mrf.mxu0
          %3623 = vmatprep.mubr.f32.mxu0 0.0
          %3624 = vmatmul.mubr.f32.gmra.mxu0 %v3468
          %v3625 = vpop.f32.mrf.mxu0
          %v3626 = vadd.f32 0.0, %v3625
          %v3627 = vpop.f32.mrf.mxu0
          %3628 = vmatprep.mubr.f32.mxu0 0.0
          %3629 = vmatmul.mubr.f32.gmra.mxu0 %v3470
          %v3630 = vpop.f32.mrf.mxu0
          %v3631 = vadd.f32 0.0, %v3630
          %v3632 = vpop.f32.mrf.mxu0
          %3633 = vmatprep.mubr.f32.mxu0 0.0
          %3634 = vmatmul.mubr.f32.gmra.mxu0 %v3473
          %v3635 = vpop.f32.mrf.mxu0
          %v3636 = vadd.f32 0.0, %v3635
          %v3637 = vpop.f32.mrf.mxu0
          %3638 = vmatprep.mubr.f32.mxu0 0.0
          %3639 = vmatmul.mubr.f32.gmra.mxu0 %v3475
          %v3640 = vpop.f32.mrf.mxu0
          %v3641 = vadd.f32 0.0, %v3640
          %v3642 = vpop.f32.mrf.mxu0
          %3643 = vmatprep.mubr.f32.mxu0 0.0
          %3644 = vmatmul.mubr.f32.gmra.mxu0 %v3478
          %v3645 = vpop.f32.mrf.mxu0
          %v3646 = vadd.f32 0.0, %v3645
          %v3647 = vpop.f32.mrf.mxu0
          %3648 = vmatprep.mubr.f32.mxu0 0.0
          %3649 = vmatmul.mubr.f32.gmra.mxu0 %v3480
          %v3650 = vpop.f32.mrf.mxu0
          %v3651 = vadd.f32 0.0, %v3650
          %v3652 = vpop.f32.mrf.mxu0
          %3653 = vmatprep.mubr.f32.mxu0 0.0
          %3654 = vmatmul.mubr.f32.gmra.mxu0 %v3483
          %v3655 = vpop.f32.mrf.mxu0
          %v3656 = vadd.f32 0.0, %v3655
          %v3657 = vpop.f32.mrf.mxu0
          %3658 = vmatprep.mubr.f32.mxu0 0.0
          %3659 = vmatmul.mubr.f32.gmra.mxu0 %v3485
          %v3660 = vpop.f32.mrf.mxu0
          %v3661 = vadd.f32 0.0, %v3660
          %v3662 = vpop.f32.mrf.mxu0
          %3663 = vdwg.mxu0
          %v3664 = vadd.f32 %v3406, %v3586
          %v3665 = vadd.f32 %v3407, %v3591
          %v3666 = vadd.f32 %v3408, %v3596
          %v3667 = vadd.f32 %v3409, %v3601
          %v3668 = vadd.f32 %v3410, %v3606
          %v3669 = vadd.f32 %v3411, %v3611
          %v3670 = vadd.f32 %v3412, %v3616
          %v3671 = vadd.f32 %v3413, %v3621
          %v3672 = vadd.f32 %v3414, %v3626
          %v3673 = vadd.f32 %v3415, %v3631
          %v3674 = vadd.f32 %v3416, %v3636
          %v3675 = vadd.f32 %v3417, %v3641
          %v3676 = vadd.f32 %v3418, %v3646
          %v3677 = vadd.f32 %v3419, %v3651
          %v3678 = vadd.f32 %v3420, %v3656
          %v3679 = vadd.f32 %v3421, %v3661
          %v3680 = vrot.slane %v3220, 2
          %v3681 = vrot.slane %v3221, 2
          %v3682 = vsel %vm2982, %v3680, %v3681
          %v3683 = vrot.slane %v3222, 2
          %v3684 = vsel %vm2982, %v3681, %v3683
          %v3685 = vrot.slane %v3223, 2
          %v3686 = vrot.slane %v3224, 2
          %v3687 = vsel %vm2982, %v3685, %v3686
          %v3688 = vrot.slane %v3225, 2
          %v3689 = vsel %vm2982, %v3686, %v3688
          %v3690 = vrot.slane %v3226, 2
          %v3691 = vrot.slane %v3227, 2
          %v3692 = vsel %vm2982, %v3690, %v3691
          %v3693 = vrot.slane %v3228, 2
          %v3694 = vsel %vm2982, %v3691, %v3693
          %v3695 = vrot.slane %v3229, 2
          %v3696 = vrot.slane %v3230, 2
          %v3697 = vsel %vm2982, %v3695, %v3696
          %v3698 = vrot.slane %v3231, 2
          %v3699 = vsel %vm2982, %v3696, %v3698
          %v3700 = vrot.slane %v3232, 2
          %v3701 = vrot.slane %v3233, 2
          %v3702 = vsel %vm2982, %v3700, %v3701
          %v3703 = vrot.slane %v3234, 2
          %v3704 = vsel %vm2982, %v3701, %v3703
          %v3705 = vrot.slane %v3235, 2
          %v3706 = vrot.slane %v3236, 2
          %v3707 = vsel %vm2982, %v3705, %v3706
          %v3708 = vrot.slane %v3237, 2
          %v3709 = vsel %vm2982, %v3706, %v3708
          %v3710 = vrot.slane %v3238, 2
          %v3711 = vrot.slane %v3239, 2
          %v3712 = vsel %vm2982, %v3710, %v3711
          %v3713 = vrot.slane %v3240, 2
          %v3714 = vsel %vm2982, %v3711, %v3713
          %v3715 = vrot.slane %v3241, 2
          %v3716 = vrot.slane %v3242, 2
          %v3717 = vsel %vm2982, %v3715, %v3716
          %v3718 = vrot.slane %v3243, 2
          %v3719 = vsel %vm2982, %v3716, %v3718
          %s3736 = scalar_lea.vmem [#allocation9], 640
          %v3737 = vld [vmem:[%s3736] sm:$0xff]
          %v3738 = vld [vmem:[%s3736 + $0x8] sm:$0xff]
          %v3739 = vld [vmem:[%s3736 + $0x10] sm:$0xff]
          %v3740 = vld [vmem:[%s3736 + $0x18] sm:$0xff]
          %v3741 = vld [vmem:[%s3736 + $0x20] sm:$0xff]
          %v3742 = vld [vmem:[%s3736 + $0x28] sm:$0xff]
          %v3743 = vld [vmem:[%s3736 + $0x30] sm:$0xff]
          %v3744 = vld [vmem:[%s3736 + $0x38] sm:$0xff]
          %v3745 = vld [vmem:[%s3736 + $0x40] sm:$0xff]
          %v3746 = vld [vmem:[%s3736 + $0x48] sm:$0xff]
          %v3747 = vld [vmem:[%s3736 + $0x50] sm:$0xff]
          %v3748 = vld [vmem:[%s3736 + $0x58] sm:$0xff]
          %v3749 = vld [vmem:[%s3736 + $0x60] sm:$0xff]
          %v3750 = vld [vmem:[%s3736 + $0x68] sm:$0xff]
          %v3751 = vld [vmem:[%s3736 + $0x70] sm:$0xff]
          %v3752 = vld [vmem:[%s3736 + $0x78] sm:$0xff]
          %3753 = vmatprep.subr.mxu0 0.0
          %3754 = vmatpush1.msra.mxu0 %v3752
          %3755 = vmatprep.subr.mxu0 0.0
          %3756 = vmatpush1.msra.mxu0 %v3751
          %3757 = vmatprep.subr.mxu0 0.0
          %3758 = vmatpush1.msra.mxu0 %v3750
          %3759 = vmatprep.subr.mxu0 0.0
          %3760 = vmatpush1.msra.mxu0 %v3749
          %3761 = vmatprep.subr.mxu0 0.0
          %3762 = vmatpush1.msra.mxu0 %v3748
          %3763 = vmatprep.subr.mxu0 0.0
          %3764 = vmatpush1.msra.mxu0 %v3747
          %3765 = vmatprep.subr.mxu0 0.0
          %3766 = vmatpush1.msra.mxu0 %v3746
          %3767 = vmatprep.subr.mxu0 0.0
          %3768 = vmatpush1.msra.mxu0 %v3745
          %3769 = vmatprep.subr.mxu0 0.0
          %3770 = vmatpush1.msra.mxu0 %v3744
          %3771 = vmatprep.subr.mxu0 0.0
          %3772 = vmatpush1.msra.mxu0 %v3743
          %3773 = vmatprep.subr.mxu0 0.0
          %3774 = vmatpush1.msra.mxu0 %v3742
          %3775 = vmatprep.subr.mxu0 0.0
          %3776 = vmatpush1.msra.mxu0 %v3741
          %3777 = vmatprep.subr.mxu0 0.0
          %3778 = vmatpush1.msra.mxu0 %v3740
          %3779 = vmatprep.subr.mxu0 0.0
          %3780 = vmatpush1.msra.mxu0 %v3739
          %3781 = vmatprep.subr.mxu0 0.0
          %3782 = vmatpush1.msra.mxu0 %v3738
          %3783 = vmatprep.subr.mxu0 0.0
          %3784 = vmatpush1.msra.mxu0 %v3737
          %3785 = vmatprep.subr.mxu0 0.0
          %3786 = vmatpush2.msra.mxu0 0.0
          %3787 = vmatprep.subr.mxu0 0.0
          %3788 = vmatpush2.msra.mxu0 0.0
          %3789 = vmatprep.subr.mxu0 0.0
          %3790 = vmatpush2.msra.mxu0 0.0
          %3791 = vmatprep.subr.mxu0 0.0
          %3792 = vmatpush2.msra.mxu0 0.0
          %3793 = vmatprep.subr.mxu0 0.0
          %3794 = vmatpush2.msra.mxu0 0.0
          %3795 = vmatprep.subr.mxu0 0.0
          %3796 = vmatpush2.msra.mxu0 0.0
          %3797 = vmatprep.subr.mxu0 0.0
          %3798 = vmatpush2.msra.mxu0 0.0
          %3799 = vmatprep.subr.mxu0 0.0
          %3800 = vmatpush2.msra.mxu0 0.0
          %3801 = vmatprep.subr.mxu0 0.0
          %3802 = vmatpush2.msra.mxu0 0.0
          %3803 = vmatprep.subr.mxu0 0.0
          %3804 = vmatpush2.msra.mxu0 0.0
          %3805 = vmatprep.subr.mxu0 0.0
          %3806 = vmatpush2.msra.mxu0 0.0
          %3807 = vmatprep.subr.mxu0 0.0
          %3808 = vmatpush2.msra.mxu0 0.0
          %3809 = vmatprep.subr.mxu0 0.0
          %3810 = vmatpush2.msra.mxu0 0.0
          %3811 = vmatprep.subr.mxu0 0.0
          %3812 = vmatpush2.msra.mxu0 0.0
          %3813 = vmatprep.subr.mxu0 0.0
          %3814 = vmatpush2.msra.mxu0 0.0
          %3815 = vmatprep.subr.mxu0 0.0
          %3816 = vmatpush2.msra.mxu0 0.0
          %3817 = vmatprep.mubr.f32.mxu0 0.0
          %3818 = vmatmul.mubr.f32.gmra.mxu0 %v3682
          %v3819 = vpop.f32.mrf.mxu0
          %v3820 = vadd.f32 0.0, %v3819
          %v3821 = vpop.f32.mrf.mxu0
          %3822 = vmatprep.mubr.f32.mxu0 0.0
          %3823 = vmatmul.mubr.f32.gmra.mxu0 %v3684
          %v3824 = vpop.f32.mrf.mxu0
          %v3825 = vadd.f32 0.0, %v3824
          %v3826 = vpop.f32.mrf.mxu0
          %3827 = vmatprep.mubr.f32.mxu0 0.0
          %3828 = vmatmul.mubr.f32.gmra.mxu0 %v3687
          %v3829 = vpop.f32.mrf.mxu0
          %v3830 = vadd.f32 0.0, %v3829
          %v3831 = vpop.f32.mrf.mxu0
          %3832 = vmatprep.mubr.f32.mxu0 0.0
          %3833 = vmatmul.mubr.f32.gmra.mxu0 %v3689
          %v3834 = vpop.f32.mrf.mxu0
          %v3835 = vadd.f32 0.0, %v3834
          %v3836 = vpop.f32.mrf.mxu0
          %3837 = vmatprep.mubr.f32.mxu0 0.0
          %3838 = vmatmul.mubr.f32.gmra.mxu0 %v3692
          %v3839 = vpop.f32.mrf.mxu0
          %v3840 = vadd.f32 0.0, %v3839
          %v3841 = vpop.f32.mrf.mxu0
          %3842 = vmatprep.mubr.f32.mxu0 0.0
          %3843 = vmatmul.mubr.f32.gmra.mxu0 %v3694
          %v3844 = vpop.f32.mrf.mxu0
          %v3845 = vadd.f32 0.0, %v3844
          %v3846 = vpop.f32.mrf.mxu0
          %3847 = vmatprep.mubr.f32.mxu0 0.0
          %3848 = vmatmul.mubr.f32.gmra.mxu0 %v3697
          %v3849 = vpop.f32.mrf.mxu0
          %v3850 = vadd.f32 0.0, %v3849
          %v3851 = vpop.f32.mrf.mxu0
          %3852 = vmatprep.mubr.f32.mxu0 0.0
          %3853 = vmatmul.mubr.f32.gmra.mxu0 %v3699
          %v3854 = vpop.f32.mrf.mxu0
          %v3855 = vadd.f32 0.0, %v3854
          %v3856 = vpop.f32.mrf.mxu0
          %3857 = vmatprep.mubr.f32.mxu0 0.0
          %3858 = vmatmul.mubr.f32.gmra.mxu0 %v3702
          %v3859 = vpop.f32.mrf.mxu0
          %v3860 = vadd.f32 0.0, %v3859
          %v3861 = vpop.f32.mrf.mxu0
          %3862 = vmatprep.mubr.f32.mxu0 0.0
          %3863 = vmatmul.mubr.f32.gmra.mxu0 %v3704
          %v3864 = vpop.f32.mrf.mxu0
          %v3865 = vadd.f32 0.0, %v3864
          %v3866 = vpop.f32.mrf.mxu0
          %3867 = vmatprep.mubr.f32.mxu0 0.0
          %3868 = vmatmul.mubr.f32.gmra.mxu0 %v3707
          %v3869 = vpop.f32.mrf.mxu0
          %v3870 = vadd.f32 0.0, %v3869
          %v3871 = vpop.f32.mrf.mxu0
          %3872 = vmatprep.mubr.f32.mxu0 0.0
          %3873 = vmatmul.mubr.f32.gmra.mxu0 %v3709
          %v3874 = vpop.f32.mrf.mxu0
          %v3875 = vadd.f32 0.0, %v3874
          %v3876 = vpop.f32.mrf.mxu0
          %3877 = vmatprep.mubr.f32.mxu0 0.0
          %3878 = vmatmul.mubr.f32.gmra.mxu0 %v3712
          %v3879 = vpop.f32.mrf.mxu0
          %v3880 = vadd.f32 0.0, %v3879
          %v3881 = vpop.f32.mrf.mxu0
          %3882 = vmatprep.mubr.f32.mxu0 0.0
          %3883 = vmatmul.mubr.f32.gmra.mxu0 %v3714
          %v3884 = vpop.f32.mrf.mxu0
          %v3885 = vadd.f32 0.0, %v3884
          %v3886 = vpop.f32.mrf.mxu0
          %3887 = vmatprep.mubr.f32.mxu0 0.0
          %3888 = vmatmul.mubr.f32.gmra.mxu0 %v3717
          %v3889 = vpop.f32.mrf.mxu0
          %v3890 = vadd.f32 0.0, %v3889
          %v3891 = vpop.f32.mrf.mxu0
          %3892 = vmatprep.mubr.f32.mxu0 0.0
          %3893 = vmatmul.mubr.f32.gmra.mxu0 %v3719
          %v3894 = vpop.f32.mrf.mxu0
          %v3895 = vadd.f32 0.0, %v3894
          %v3896 = vpop.f32.mrf.mxu0
          %3897 = vdwg.mxu0
          %v3898 = vadd.f32 %v3664, %v3820
          %v3899 = vadd.f32 %v3665, %v3825
          %v3900 = vadd.f32 %v3666, %v3830
          %v3901 = vadd.f32 %v3667, %v3835
          %v3902 = vadd.f32 %v3668, %v3840
          %v3903 = vadd.f32 %v3669, %v3845
          %v3904 = vadd.f32 %v3670, %v3850
          %v3905 = vadd.f32 %v3671, %v3855
          %v3906 = vadd.f32 %v3672, %v3860
          %v3907 = vadd.f32 %v3673, %v3865
          %v3908 = vadd.f32 %v3674, %v3870
          %v3909 = vadd.f32 %v3675, %v3875
          %v3910 = vadd.f32 %v3676, %v3880
          %v3911 = vadd.f32 %v3677, %v3885
          %v3912 = vadd.f32 %v3678, %v3890
          %v3913 = vadd.f32 %v3679, %v3895
          %s3914 = sadd.s32 %s2551, 2
          %s3915 = smul.u32 %s3914, 24
          %s3916 = scalar_lea.vmem [#allocation3], %s3915
          %v3917 = vld [vmem:[%s3916] sm:$0xff]
          %v3918 = vld [vmem:[%s3916 + $0x8] sm:$0xff]
          %v3919 = vld [vmem:[%s3916 + $0x10] sm:$0x3]
          %v3920 = vld [vmem:[%s3916 + $0x18] sm:$0xff]
          %v3921 = vld [vmem:[%s3916 + $0x20] sm:$0xff]
          %v3922 = vld [vmem:[%s3916 + $0x28] sm:$0x3]
          %v3923 = vld [vmem:[%s3916 + $0x30] sm:$0xff]
          %v3924 = vld [vmem:[%s3916 + $0x38] sm:$0xff]
          %v3925 = vld [vmem:[%s3916 + $0x40] sm:$0x3]
          %v3926 = vld [vmem:[%s3916 + $0x48] sm:$0xff]
          %v3927 = vld [vmem:[%s3916 + $0x50] sm:$0xff]
          %v3928 = vld [vmem:[%s3916 + $0x58] sm:$0x3]
          %v3929 = vld [vmem:[%s3916 + $0x60] sm:$0xff]
          %v3930 = vld [vmem:[%s3916 + $0x68] sm:$0xff]
          %v3931 = vld [vmem:[%s3916 + $0x70] sm:$0x3]
          %v3932 = vld [vmem:[%s3916 + $0x78] sm:$0xff]
          %v3933 = vld [vmem:[%s3916 + $0x80] sm:$0xff]
          %v3934 = vld [vmem:[%s3916 + $0x88] sm:$0x3]
          %v3935 = vld [vmem:[%s3916 + $0x90] sm:$0xff]
          %v3936 = vld [vmem:[%s3916 + $0x98] sm:$0xff]
          %v3937 = vld [vmem:[%s3916 + $0xa0] sm:$0x3]
          %v3938 = vld [vmem:[%s3916 + $0xa8] sm:$0xff]
          %v3939 = vld [vmem:[%s3916 + $0xb0] sm:$0xff]
          %v3940 = vld [vmem:[%s3916 + $0xb8] sm:$0x3]
          %s3941 = scalar_lea.vmem [#allocation9], 768
          %v3942 = vld [vmem:[%s3941] sm:$0xff]
          %v3943 = vld [vmem:[%s3941 + $0x8] sm:$0xff]
          %v3944 = vld [vmem:[%s3941 + $0x10] sm:$0xff]
          %v3945 = vld [vmem:[%s3941 + $0x18] sm:$0xff]
          %v3946 = vld [vmem:[%s3941 + $0x20] sm:$0xff]
          %v3947 = vld [vmem:[%s3941 + $0x28] sm:$0xff]
          %v3948 = vld [vmem:[%s3941 + $0x30] sm:$0xff]
          %v3949 = vld [vmem:[%s3941 + $0x38] sm:$0xff]
          %v3950 = vld [vmem:[%s3941 + $0x40] sm:$0xff]
          %v3951 = vld [vmem:[%s3941 + $0x48] sm:$0xff]
          %v3952 = vld [vmem:[%s3941 + $0x50] sm:$0xff]
          %v3953 = vld [vmem:[%s3941 + $0x58] sm:$0xff]
          %v3954 = vld [vmem:[%s3941 + $0x60] sm:$0xff]
          %v3955 = vld [vmem:[%s3941 + $0x68] sm:$0xff]
          %v3956 = vld [vmem:[%s3941 + $0x70] sm:$0xff]
          %v3957 = vld [vmem:[%s3941 + $0x78] sm:$0xff]
          %3958 = vmatprep.subr.mxu0 0.0
          %3959 = vmatpush1.msra.mxu0 %v3957
          %3960 = vmatprep.subr.mxu0 0.0
          %3961 = vmatpush1.msra.mxu0 %v3956
          %3962 = vmatprep.subr.mxu0 0.0
          %3963 = vmatpush1.msra.mxu0 %v3955
          %3964 = vmatprep.subr.mxu0 0.0
          %3965 = vmatpush1.msra.mxu0 %v3954
          %3966 = vmatprep.subr.mxu0 0.0
          %3967 = vmatpush1.msra.mxu0 %v3953
          %3968 = vmatprep.subr.mxu0 0.0
          %3969 = vmatpush1.msra.mxu0 %v3952
          %3970 = vmatprep.subr.mxu0 0.0
          %3971 = vmatpush1.msra.mxu0 %v3951
          %3972 = vmatprep.subr.mxu0 0.0
          %3973 = vmatpush1.msra.mxu0 %v3950
          %3974 = vmatprep.subr.mxu0 0.0
          %3975 = vmatpush1.msra.mxu0 %v3949
          %3976 = vmatprep.subr.mxu0 0.0
          %3977 = vmatpush1.msra.mxu0 %v3948
          %3978 = vmatprep.subr.mxu0 0.0
          %3979 = vmatpush1.msra.mxu0 %v3947
          %3980 = vmatprep.subr.mxu0 0.0
          %3981 = vmatpush1.msra.mxu0 %v3946
          %3982 = vmatprep.subr.mxu0 0.0
          %3983 = vmatpush1.msra.mxu0 %v3945
          %3984 = vmatprep.subr.mxu0 0.0
          %3985 = vmatpush1.msra.mxu0 %v3944
          %3986 = vmatprep.subr.mxu0 0.0
          %3987 = vmatpush1.msra.mxu0 %v3943
          %3988 = vmatprep.subr.mxu0 0.0
          %3989 = vmatpush1.msra.mxu0 %v3942
          %3990 = vmatprep.subr.mxu0 0.0
          %3991 = vmatpush2.msra.mxu0 0.0
          %3992 = vmatprep.subr.mxu0 0.0
          %3993 = vmatpush2.msra.mxu0 0.0
          %3994 = vmatprep.subr.mxu0 0.0
          %3995 = vmatpush2.msra.mxu0 0.0
          %3996 = vmatprep.subr.mxu0 0.0
          %3997 = vmatpush2.msra.mxu0 0.0
          %3998 = vmatprep.subr.mxu0 0.0
          %3999 = vmatpush2.msra.mxu0 0.0
          %4000 = vmatprep.subr.mxu0 0.0
          %4001 = vmatpush2.msra.mxu0 0.0
          %4002 = vmatprep.subr.mxu0 0.0
          %4003 = vmatpush2.msra.mxu0 0.0
          %4004 = vmatprep.subr.mxu0 0.0
          %4005 = vmatpush2.msra.mxu0 0.0
          %4006 = vmatprep.subr.mxu0 0.0
          %4007 = vmatpush2.msra.mxu0 0.0
          %4008 = vmatprep.subr.mxu0 0.0
          %4009 = vmatpush2.msra.mxu0 0.0
          %4010 = vmatprep.subr.mxu0 0.0
          %4011 = vmatpush2.msra.mxu0 0.0
          %4012 = vmatprep.subr.mxu0 0.0
          %4013 = vmatpush2.msra.mxu0 0.0
          %4014 = vmatprep.subr.mxu0 0.0
          %4015 = vmatpush2.msra.mxu0 0.0
          %4016 = vmatprep.subr.mxu0 0.0
          %4017 = vmatpush2.msra.mxu0 0.0
          %4018 = vmatprep.subr.mxu0 0.0
          %4019 = vmatpush2.msra.mxu0 0.0
          %4020 = vmatprep.subr.mxu0 0.0
          %4021 = vmatpush2.msra.mxu0 0.0
          %4022 = vmatprep.mubr.f32.mxu0 0.0
          %4023 = vmatmul.mubr.f32.gmra.mxu0 %v3917
          %v4024 = vpop.f32.mrf.mxu0
          %v4025 = vadd.f32 0.0, %v4024
          %v4026 = vpop.f32.mrf.mxu0
          %4027 = vmatprep.mubr.f32.mxu0 0.0
          %4028 = vmatmul.mubr.f32.gmra.mxu0 %v3918
          %v4029 = vpop.f32.mrf.mxu0
          %v4030 = vadd.f32 0.0, %v4029
          %v4031 = vpop.f32.mrf.mxu0
          %4032 = vmatprep.mubr.f32.mxu0 0.0
          %4033 = vmatmul.mubr.f32.gmra.mxu0 %v3920
          %v4034 = vpop.f32.mrf.mxu0
          %v4035 = vadd.f32 0.0, %v4034
          %v4036 = vpop.f32.mrf.mxu0
          %4037 = vmatprep.mubr.f32.mxu0 0.0
          %4038 = vmatmul.mubr.f32.gmra.mxu0 %v3921
          %v4039 = vpop.f32.mrf.mxu0
          %v4040 = vadd.f32 0.0, %v4039
          %v4041 = vpop.f32.mrf.mxu0
          %4042 = vmatprep.mubr.f32.mxu0 0.0
          %4043 = vmatmul.mubr.f32.gmra.mxu0 %v3923
          %v4044 = vpop.f32.mrf.mxu0
          %v4045 = vadd.f32 0.0, %v4044
          %v4046 = vpop.f32.mrf.mxu0
          %4047 = vmatprep.mubr.f32.mxu0 0.0
          %4048 = vmatmul.mubr.f32.gmra.mxu0 %v3924
          %v4049 = vpop.f32.mrf.mxu0
          %v4050 = vadd.f32 0.0, %v4049
          %v4051 = vpop.f32.mrf.mxu0
          %4052 = vmatprep.mubr.f32.mxu0 0.0
          %4053 = vmatmul.mubr.f32.gmra.mxu0 %v3926
          %v4054 = vpop.f32.mrf.mxu0
          %v4055 = vadd.f32 0.0, %v4054
          %v4056 = vpop.f32.mrf.mxu0
          %4057 = vmatprep.mubr.f32.mxu0 0.0
          %4058 = vmatmul.mubr.f32.gmra.mxu0 %v3927
          %v4059 = vpop.f32.mrf.mxu0
          %v4060 = vadd.f32 0.0, %v4059
          %v4061 = vpop.f32.mrf.mxu0
          %4062 = vmatprep.mubr.f32.mxu0 0.0
          %4063 = vmatmul.mubr.f32.gmra.mxu0 %v3929
          %v4064 = vpop.f32.mrf.mxu0
          %v4065 = vadd.f32 0.0, %v4064
          %v4066 = vpop.f32.mrf.mxu0
          %4067 = vmatprep.mubr.f32.mxu0 0.0
          %4068 = vmatmul.mubr.f32.gmra.mxu0 %v3930
          %v4069 = vpop.f32.mrf.mxu0
          %v4070 = vadd.f32 0.0, %v4069
          %v4071 = vpop.f32.mrf.mxu0
          %4072 = vmatprep.mubr.f32.mxu0 0.0
          %4073 = vmatmul.mubr.f32.gmra.mxu0 %v3932
          %v4074 = vpop.f32.mrf.mxu0
          %v4075 = vadd.f32 0.0, %v4074
          %v4076 = vpop.f32.mrf.mxu0
          %4077 = vmatprep.mubr.f32.mxu0 0.0
          %4078 = vmatmul.mubr.f32.gmra.mxu0 %v3933
          %v4079 = vpop.f32.mrf.mxu0
          %v4080 = vadd.f32 0.0, %v4079
          %v4081 = vpop.f32.mrf.mxu0
          %4082 = vmatprep.mubr.f32.mxu0 0.0
          %4083 = vmatmul.mubr.f32.gmra.mxu0 %v3935
          %v4084 = vpop.f32.mrf.mxu0
          %v4085 = vadd.f32 0.0, %v4084
          %v4086 = vpop.f32.mrf.mxu0
          %4087 = vmatprep.mubr.f32.mxu0 0.0
          %4088 = vmatmul.mubr.f32.gmra.mxu0 %v3936
          %v4089 = vpop.f32.mrf.mxu0
          %v4090 = vadd.f32 0.0, %v4089
          %v4091 = vpop.f32.mrf.mxu0
          %4092 = vmatprep.mubr.f32.mxu0 0.0
          %4093 = vmatmul.mubr.f32.gmra.mxu0 %v3938
          %v4094 = vpop.f32.mrf.mxu0
          %v4095 = vadd.f32 0.0, %v4094
          %v4096 = vpop.f32.mrf.mxu0
          %4097 = vmatprep.mubr.f32.mxu0 0.0
          %4098 = vmatmul.mubr.f32.gmra.mxu0 %v3939
          %v4099 = vpop.f32.mrf.mxu0
          %v4100 = vadd.f32 0.0, %v4099
          %v4101 = vpop.f32.mrf.mxu0
          %4102 = vdwg.mxu0
          %v4103 = vadd.f32 %v3898, %v4025
          %v4104 = vadd.f32 %v3899, %v4030
          %v4105 = vadd.f32 %v3900, %v4035
          %v4106 = vadd.f32 %v3901, %v4040
          %v4107 = vadd.f32 %v3902, %v4045
          %v4108 = vadd.f32 %v3903, %v4050
          %v4109 = vadd.f32 %v3904, %v4055
          %v4110 = vadd.f32 %v3905, %v4060
          %v4111 = vadd.f32 %v3906, %v4065
          %v4112 = vadd.f32 %v3907, %v4070
          %v4113 = vadd.f32 %v3908, %v4075
          %v4114 = vadd.f32 %v3909, %v4080
          %v4115 = vadd.f32 %v3910, %v4085
          %v4116 = vadd.f32 %v3911, %v4090
          %v4117 = vadd.f32 %v3912, %v4095
          %v4118 = vadd.f32 %v3913, %v4100
          %v4143 = vrot.slane %v3917, 1
          %v4144 = vrot.slane %v3918, 1
          %v4145 = vsel %vm2618, %v4143, %v4144
          %v4146 = vrot.slane %v3919, 1
          %v4147 = vsel %vm2618, %v4144, %v4146
          %v4148 = vrot.slane %v3920, 1
          %v4149 = vrot.slane %v3921, 1
          %v4150 = vsel %vm2618, %v4148, %v4149
          %v4151 = vrot.slane %v3922, 1
          %v4152 = vsel %vm2618, %v4149, %v4151
          %v4153 = vrot.slane %v3923, 1
          %v4154 = vrot.slane %v3924, 1
          %v4155 = vsel %vm2618, %v4153, %v4154
          %v4156 = vrot.slane %v3925, 1
          %v4157 = vsel %vm2618, %v4154, %v4156
          %v4158 = vrot.slane %v3926, 1
          %v4159 = vrot.slane %v3927, 1
          %v4160 = vsel %vm2618, %v4158, %v4159
          %v4161 = vrot.slane %v3928, 1
          %v4162 = vsel %vm2618, %v4159, %v4161
          %v4163 = vrot.slane %v3929, 1
          %v4164 = vrot.slane %v3930, 1
          %v4165 = vsel %vm2618, %v4163, %v4164
          %v4166 = vrot.slane %v3931, 1
          %v4167 = vsel %vm2618, %v4164, %v4166
          %v4168 = vrot.slane %v3932, 1
          %v4169 = vrot.slane %v3933, 1
          %v4170 = vsel %vm2618, %v4168, %v4169
          %v4171 = vrot.slane %v3934, 1
          %v4172 = vsel %vm2618, %v4169, %v4171
          %v4173 = vrot.slane %v3935, 1
          %v4174 = vrot.slane %v3936, 1
          %v4175 = vsel %vm2618, %v4173, %v4174
          %v4176 = vrot.slane %v3937, 1
          %v4177 = vsel %vm2618, %v4174, %v4176
          %v4178 = vrot.slane %v3938, 1
          %v4179 = vrot.slane %v3939, 1
          %v4180 = vsel %vm2618, %v4178, %v4179
          %v4181 = vrot.slane %v3940, 1
          %v4182 = vsel %vm2618, %v4179, %v4181
          %s4199 = scalar_lea.vmem [#allocation9], 896
          %v4200 = vld [vmem:[%s4199] sm:$0xff]
          %v4201 = vld [vmem:[%s4199 + $0x8] sm:$0xff]
          %v4202 = vld [vmem:[%s4199 + $0x10] sm:$0xff]
          %v4203 = vld [vmem:[%s4199 + $0x18] sm:$0xff]
          %v4204 = vld [vmem:[%s4199 + $0x20] sm:$0xff]
          %v4205 = vld [vmem:[%s4199 + $0x28] sm:$0xff]
          %v4206 = vld [vmem:[%s4199 + $0x30] sm:$0xff]
          %v4207 = vld [vmem:[%s4199 + $0x38] sm:$0xff]
          %v4208 = vld [vmem:[%s4199 + $0x40] sm:$0xff]
          %v4209 = vld [vmem:[%s4199 + $0x48] sm:$0xff]
          %v4210 = vld [vmem:[%s4199 + $0x50] sm:$0xff]
          %v4211 = vld [vmem:[%s4199 + $0x58] sm:$0xff]
          %v4212 = vld [vmem:[%s4199 + $0x60] sm:$0xff]
          %v4213 = vld [vmem:[%s4199 + $0x68] sm:$0xff]
          %v4214 = vld [vmem:[%s4199 + $0x70] sm:$0xff]
          %v4215 = vld [vmem:[%s4199 + $0x78] sm:$0xff]
          %4216 = vmatprep.subr.mxu0 0.0
          %4217 = vmatpush1.msra.mxu0 %v4215
          %4218 = vmatprep.subr.mxu0 0.0
          %4219 = vmatpush1.msra.mxu0 %v4214
          %4220 = vmatprep.subr.mxu0 0.0
          %4221 = vmatpush1.msra.mxu0 %v4213
          %4222 = vmatprep.subr.mxu0 0.0
          %4223 = vmatpush1.msra.mxu0 %v4212
          %4224 = vmatprep.subr.mxu0 0.0
          %4225 = vmatpush1.msra.mxu0 %v4211
          %4226 = vmatprep.subr.mxu0 0.0
          %4227 = vmatpush1.msra.mxu0 %v4210
          %4228 = vmatprep.subr.mxu0 0.0
          %4229 = vmatpush1.msra.mxu0 %v4209
          %4230 = vmatprep.subr.mxu0 0.0
          %4231 = vmatpush1.msra.mxu0 %v4208
          %4232 = vmatprep.subr.mxu0 0.0
          %4233 = vmatpush1.msra.mxu0 %v4207
          %4234 = vmatprep.subr.mxu0 0.0
          %4235 = vmatpush1.msra.mxu0 %v4206
          %4236 = vmatprep.subr.mxu0 0.0
          %4237 = vmatpush1.msra.mxu0 %v4205
          %4238 = vmatprep.subr.mxu0 0.0
          %4239 = vmatpush1.msra.mxu0 %v4204
          %4240 = vmatprep.subr.mxu0 0.0
          %4241 = vmatpush1.msra.mxu0 %v4203
          %4242 = vmatprep.subr.mxu0 0.0
          %4243 = vmatpush1.msra.mxu0 %v4202
          %4244 = vmatprep.subr.mxu0 0.0
          %4245 = vmatpush1.msra.mxu0 %v4201
          %4246 = vmatprep.subr.mxu0 0.0
          %4247 = vmatpush1.msra.mxu0 %v4200
          %4248 = vmatprep.subr.mxu0 0.0
          %4249 = vmatpush2.msra.mxu0 0.0
          %4250 = vmatprep.subr.mxu0 0.0
          %4251 = vmatpush2.msra.mxu0 0.0
          %4252 = vmatprep.subr.mxu0 0.0
          %4253 = vmatpush2.msra.mxu0 0.0
          %4254 = vmatprep.subr.mxu0 0.0
          %4255 = vmatpush2.msra.mxu0 0.0
          %4256 = vmatprep.subr.mxu0 0.0
          %4257 = vmatpush2.msra.mxu0 0.0
          %4258 = vmatprep.subr.mxu0 0.0
          %4259 = vmatpush2.msra.mxu0 0.0
          %4260 = vmatprep.subr.mxu0 0.0
          %4261 = vmatpush2.msra.mxu0 0.0
          %4262 = vmatprep.subr.mxu0 0.0
          %4263 = vmatpush2.msra.mxu0 0.0
          %4264 = vmatprep.subr.mxu0 0.0
          %4265 = vmatpush2.msra.mxu0 0.0
          %4266 = vmatprep.subr.mxu0 0.0
          %4267 = vmatpush2.msra.mxu0 0.0
          %4268 = vmatprep.subr.mxu0 0.0
          %4269 = vmatpush2.msra.mxu0 0.0
          %4270 = vmatprep.subr.mxu0 0.0
          %4271 = vmatpush2.msra.mxu0 0.0
          %4272 = vmatprep.subr.mxu0 0.0
          %4273 = vmatpush2.msra.mxu0 0.0
          %4274 = vmatprep.subr.mxu0 0.0
          %4275 = vmatpush2.msra.mxu0 0.0
          %4276 = vmatprep.subr.mxu0 0.0
          %4277 = vmatpush2.msra.mxu0 0.0
          %4278 = vmatprep.subr.mxu0 0.0
          %4279 = vmatpush2.msra.mxu0 0.0
          %4280 = vmatprep.mubr.f32.mxu0 0.0
          %4281 = vmatmul.mubr.f32.gmra.mxu0 %v4145
          %v4282 = vpop.f32.mrf.mxu0
          %v4283 = vadd.f32 0.0, %v4282
          %v4284 = vpop.f32.mrf.mxu0
          %4285 = vmatprep.mubr.f32.mxu0 0.0
          %4286 = vmatmul.mubr.f32.gmra.mxu0 %v4147
          %v4287 = vpop.f32.mrf.mxu0
          %v4288 = vadd.f32 0.0, %v4287
          %v4289 = vpop.f32.mrf.mxu0
          %4290 = vmatprep.mubr.f32.mxu0 0.0
          %4291 = vmatmul.mubr.f32.gmra.mxu0 %v4150
          %v4292 = vpop.f32.mrf.mxu0
          %v4293 = vadd.f32 0.0, %v4292
          %v4294 = vpop.f32.mrf.mxu0
          %4295 = vmatprep.mubr.f32.mxu0 0.0
          %4296 = vmatmul.mubr.f32.gmra.mxu0 %v4152
          %v4297 = vpop.f32.mrf.mxu0
          %v4298 = vadd.f32 0.0, %v4297
          %v4299 = vpop.f32.mrf.mxu0
          %4300 = vmatprep.mubr.f32.mxu0 0.0
          %4301 = vmatmul.mubr.f32.gmra.mxu0 %v4155
          %v4302 = vpop.f32.mrf.mxu0
          %v4303 = vadd.f32 0.0, %v4302
          %v4304 = vpop.f32.mrf.mxu0
          %4305 = vmatprep.mubr.f32.mxu0 0.0
          %4306 = vmatmul.mubr.f32.gmra.mxu0 %v4157
          %v4307 = vpop.f32.mrf.mxu0
          %v4308 = vadd.f32 0.0, %v4307
          %v4309 = vpop.f32.mrf.mxu0
          %4310 = vmatprep.mubr.f32.mxu0 0.0
          %4311 = vmatmul.mubr.f32.gmra.mxu0 %v4160
          %v4312 = vpop.f32.mrf.mxu0
          %v4313 = vadd.f32 0.0, %v4312
          %v4314 = vpop.f32.mrf.mxu0
          %4315 = vmatprep.mubr.f32.mxu0 0.0
          %4316 = vmatmul.mubr.f32.gmra.mxu0 %v4162
          %v4317 = vpop.f32.mrf.mxu0
          %v4318 = vadd.f32 0.0, %v4317
          %v4319 = vpop.f32.mrf.mxu0
          %4320 = vmatprep.mubr.f32.mxu0 0.0
          %4321 = vmatmul.mubr.f32.gmra.mxu0 %v4165
          %v4322 = vpop.f32.mrf.mxu0
          %v4323 = vadd.f32 0.0, %v4322
          %v4324 = vpop.f32.mrf.mxu0
          %4325 = vmatprep.mubr.f32.mxu0 0.0
          %4326 = vmatmul.mubr.f32.gmra.mxu0 %v4167
          %v4327 = vpop.f32.mrf.mxu0
          %v4328 = vadd.f32 0.0, %v4327
          %v4329 = vpop.f32.mrf.mxu0
          %4330 = vmatprep.mubr.f32.mxu0 0.0
          %4331 = vmatmul.mubr.f32.gmra.mxu0 %v4170
          %v4332 = vpop.f32.mrf.mxu0
          %v4333 = vadd.f32 0.0, %v4332
          %v4334 = vpop.f32.mrf.mxu0
          %4335 = vmatprep.mubr.f32.mxu0 0.0
          %4336 = vmatmul.mubr.f32.gmra.mxu0 %v4172
          %v4337 = vpop.f32.mrf.mxu0
          %v4338 = vadd.f32 0.0, %v4337
          %v4339 = vpop.f32.mrf.mxu0
          %4340 = vmatprep.mubr.f32.mxu0 0.0
          %4341 = vmatmul.mubr.f32.gmra.mxu0 %v4175
          %v4342 = vpop.f32.mrf.mxu0
          %v4343 = vadd.f32 0.0, %v4342
          %v4344 = vpop.f32.mrf.mxu0
          %4345 = vmatprep.mubr.f32.mxu0 0.0
          %4346 = vmatmul.mubr.f32.gmra.mxu0 %v4177
          %v4347 = vpop.f32.mrf.mxu0
          %v4348 = vadd.f32 0.0, %v4347
          %v4349 = vpop.f32.mrf.mxu0
          %4350 = vmatprep.mubr.f32.mxu0 0.0
          %4351 = vmatmul.mubr.f32.gmra.mxu0 %v4180
          %v4352 = vpop.f32.mrf.mxu0
          %v4353 = vadd.f32 0.0, %v4352
          %v4354 = vpop.f32.mrf.mxu0
          %4355 = vmatprep.mubr.f32.mxu0 0.0
          %4356 = vmatmul.mubr.f32.gmra.mxu0 %v4182
          %v4357 = vpop.f32.mrf.mxu0
          %v4358 = vadd.f32 0.0, %v4357
          %v4359 = vpop.f32.mrf.mxu0
          %4360 = vdwg.mxu0
          %v4361 = vadd.f32 %v4103, %v4283
          %v4362 = vadd.f32 %v4104, %v4288
          %v4363 = vadd.f32 %v4105, %v4293
          %v4364 = vadd.f32 %v4106, %v4298
          %v4365 = vadd.f32 %v4107, %v4303
          %v4366 = vadd.f32 %v4108, %v4308
          %v4367 = vadd.f32 %v4109, %v4313
          %v4368 = vadd.f32 %v4110, %v4318
          %v4369 = vadd.f32 %v4111, %v4323
          %v4370 = vadd.f32 %v4112, %v4328
          %v4371 = vadd.f32 %v4113, %v4333
          %v4372 = vadd.f32 %v4114, %v4338
          %v4373 = vadd.f32 %v4115, %v4343
          %v4374 = vadd.f32 %v4116, %v4348
          %v4375 = vadd.f32 %v4117, %v4353
          %v4376 = vadd.f32 %v4118, %v4358
          %v4377 = vrot.slane %v3917, 2
          %v4378 = vrot.slane %v3918, 2
          %v4379 = vsel %vm2982, %v4377, %v4378
          %v4380 = vrot.slane %v3919, 2
          %v4381 = vsel %vm2982, %v4378, %v4380
          %v4382 = vrot.slane %v3920, 2
          %v4383 = vrot.slane %v3921, 2
          %v4384 = vsel %vm2982, %v4382, %v4383
          %v4385 = vrot.slane %v3922, 2
          %v4386 = vsel %vm2982, %v4383, %v4385
          %v4387 = vrot.slane %v3923, 2
          %v4388 = vrot.slane %v3924, 2
          %v4389 = vsel %vm2982, %v4387, %v4388
          %v4390 = vrot.slane %v3925, 2
          %v4391 = vsel %vm2982, %v4388, %v4390
          %v4392 = vrot.slane %v3926, 2
          %v4393 = vrot.slane %v3927, 2
          %v4394 = vsel %vm2982, %v4392, %v4393
          %v4395 = vrot.slane %v3928, 2
          %v4396 = vsel %vm2982, %v4393, %v4395
          %v4397 = vrot.slane %v3929, 2
          %v4398 = vrot.slane %v3930, 2
          %v4399 = vsel %vm2982, %v4397, %v4398
          %v4400 = vrot.slane %v3931, 2
          %v4401 = vsel %vm2982, %v4398, %v4400
          %v4402 = vrot.slane %v3932, 2
          %v4403 = vrot.slane %v3933, 2
          %v4404 = vsel %vm2982, %v4402, %v4403
          %v4405 = vrot.slane %v3934, 2
          %v4406 = vsel %vm2982, %v4403, %v4405
          %v4407 = vrot.slane %v3935, 2
          %v4408 = vrot.slane %v3936, 2
          %v4409 = vsel %vm2982, %v4407, %v4408
          %v4410 = vrot.slane %v3937, 2
          %v4411 = vsel %vm2982, %v4408, %v4410
          %v4412 = vrot.slane %v3938, 2
          %v4413 = vrot.slane %v3939, 2
          %v4414 = vsel %vm2982, %v4412, %v4413
          %v4415 = vrot.slane %v3940, 2
          %v4416 = vsel %vm2982, %v4413, %v4415
          %s4433 = scalar_lea.vmem [#allocation9], 1024
          %v4434 = vld [vmem:[%s4433] sm:$0xff]
          %v4435 = vld [vmem:[%s4433 + $0x8] sm:$0xff]
          %v4436 = vld [vmem:[%s4433 + $0x10] sm:$0xff]
          %v4437 = vld [vmem:[%s4433 + $0x18] sm:$0xff]
          %v4438 = vld [vmem:[%s4433 + $0x20] sm:$0xff]
          %v4439 = vld [vmem:[%s4433 + $0x28] sm:$0xff]
          %v4440 = vld [vmem:[%s4433 + $0x30] sm:$0xff]
          %v4441 = vld [vmem:[%s4433 + $0x38] sm:$0xff]
          %v4442 = vld [vmem:[%s4433 + $0x40] sm:$0xff]
          %v4443 = vld [vmem:[%s4433 + $0x48] sm:$0xff]
          %v4444 = vld [vmem:[%s4433 + $0x50] sm:$0xff]
          %v4445 = vld [vmem:[%s4433 + $0x58] sm:$0xff]
          %v4446 = vld [vmem:[%s4433 + $0x60] sm:$0xff]
          %v4447 = vld [vmem:[%s4433 + $0x68] sm:$0xff]
          %v4448 = vld [vmem:[%s4433 + $0x70] sm:$0xff]
          %v4449 = vld [vmem:[%s4433 + $0x78] sm:$0xff]
          %4450 = vmatprep.subr.mxu0 0.0
          %4451 = vmatpush1.msra.mxu0 %v4449
          %4452 = vmatprep.subr.mxu0 0.0
          %4453 = vmatpush1.msra.mxu0 %v4448
          %4454 = vmatprep.subr.mxu0 0.0
          %4455 = vmatpush1.msra.mxu0 %v4447
          %4456 = vmatprep.subr.mxu0 0.0
          %4457 = vmatpush1.msra.mxu0 %v4446
          %4458 = vmatprep.subr.mxu0 0.0
          %4459 = vmatpush1.msra.mxu0 %v4445
          %4460 = vmatprep.subr.mxu0 0.0
          %4461 = vmatpush1.msra.mxu0 %v4444
          %4462 = vmatprep.subr.mxu0 0.0
          %4463 = vmatpush1.msra.mxu0 %v4443
          %4464 = vmatprep.subr.mxu0 0.0
          %4465 = vmatpush1.msra.mxu0 %v4442
          %4466 = vmatprep.subr.mxu0 0.0
          %4467 = vmatpush1.msra.mxu0 %v4441
          %4468 = vmatprep.subr.mxu0 0.0
          %4469 = vmatpush1.msra.mxu0 %v4440
          %4470 = vmatprep.subr.mxu0 0.0
          %4471 = vmatpush1.msra.mxu0 %v4439
          %4472 = vmatprep.subr.mxu0 0.0
          %4473 = vmatpush1.msra.mxu0 %v4438
          %4474 = vmatprep.subr.mxu0 0.0
          %4475 = vmatpush1.msra.mxu0 %v4437
          %4476 = vmatprep.subr.mxu0 0.0
          %4477 = vmatpush1.msra.mxu0 %v4436
          %4478 = vmatprep.subr.mxu0 0.0
          %4479 = vmatpush1.msra.mxu0 %v4435
          %4480 = vmatprep.subr.mxu0 0.0
          %4481 = vmatpush1.msra.mxu0 %v4434
          %4482 = vmatprep.subr.mxu0 0.0
          %4483 = vmatpush2.msra.mxu0 0.0
          %4484 = vmatprep.subr.mxu0 0.0
          %4485 = vmatpush2.msra.mxu0 0.0
          %4486 = vmatprep.subr.mxu0 0.0
          %4487 = vmatpush2.msra.mxu0 0.0
          %4488 = vmatprep.subr.mxu0 0.0
          %4489 = vmatpush2.msra.mxu0 0.0
          %4490 = vmatprep.subr.mxu0 0.0
          %4491 = vmatpush2.msra.mxu0 0.0
          %4492 = vmatprep.subr.mxu0 0.0
          %4493 = vmatpush2.msra.mxu0 0.0
          %4494 = vmatprep.subr.mxu0 0.0
          %4495 = vmatpush2.msra.mxu0 0.0
          %4496 = vmatprep.subr.mxu0 0.0
          %4497 = vmatpush2.msra.mxu0 0.0
          %4498 = vmatprep.subr.mxu0 0.0
          %4499 = vmatpush2.msra.mxu0 0.0
          %4500 = vmatprep.subr.mxu0 0.0
          %4501 = vmatpush2.msra.mxu0 0.0
          %4502 = vmatprep.subr.mxu0 0.0
          %4503 = vmatpush2.msra.mxu0 0.0
          %4504 = vmatprep.subr.mxu0 0.0
          %4505 = vmatpush2.msra.mxu0 0.0
          %4506 = vmatprep.subr.mxu0 0.0
          %4507 = vmatpush2.msra.mxu0 0.0
          %4508 = vmatprep.subr.mxu0 0.0
          %4509 = vmatpush2.msra.mxu0 0.0
          %4510 = vmatprep.subr.mxu0 0.0
          %4511 = vmatpush2.msra.mxu0 0.0
          %4512 = vmatprep.subr.mxu0 0.0
          %4513 = vmatpush2.msra.mxu0 0.0
          %4514 = vmatprep.mubr.f32.mxu0 0.0
          %4515 = vmatmul.mubr.f32.gmra.mxu0 %v4379
          %v4516 = vpop.f32.mrf.mxu0
          %v4517 = vadd.f32 0.0, %v4516
          %v4518 = vpop.f32.mrf.mxu0
          %4519 = vmatprep.mubr.f32.mxu0 0.0
          %4520 = vmatmul.mubr.f32.gmra.mxu0 %v4381
          %v4521 = vpop.f32.mrf.mxu0
          %v4522 = vadd.f32 0.0, %v4521
          %v4523 = vpop.f32.mrf.mxu0
          %4524 = vmatprep.mubr.f32.mxu0 0.0
          %4525 = vmatmul.mubr.f32.gmra.mxu0 %v4384
          %v4526 = vpop.f32.mrf.mxu0
          %v4527 = vadd.f32 0.0, %v4526
          %v4528 = vpop.f32.mrf.mxu0
          %4529 = vmatprep.mubr.f32.mxu0 0.0
          %4530 = vmatmul.mubr.f32.gmra.mxu0 %v4386
          %v4531 = vpop.f32.mrf.mxu0
          %v4532 = vadd.f32 0.0, %v4531
          %v4533 = vpop.f32.mrf.mxu0
          %4534 = vmatprep.mubr.f32.mxu0 0.0
          %4535 = vmatmul.mubr.f32.gmra.mxu0 %v4389
          %v4536 = vpop.f32.mrf.mxu0
          %v4537 = vadd.f32 0.0, %v4536
          %v4538 = vpop.f32.mrf.mxu0
          %4539 = vmatprep.mubr.f32.mxu0 0.0
          %4540 = vmatmul.mubr.f32.gmra.mxu0 %v4391
          %v4541 = vpop.f32.mrf.mxu0
          %v4542 = vadd.f32 0.0, %v4541
          %v4543 = vpop.f32.mrf.mxu0
          %4544 = vmatprep.mubr.f32.mxu0 0.0
          %4545 = vmatmul.mubr.f32.gmra.mxu0 %v4394
          %v4546 = vpop.f32.mrf.mxu0
          %v4547 = vadd.f32 0.0, %v4546
          %v4548 = vpop.f32.mrf.mxu0
          %4549 = vmatprep.mubr.f32.mxu0 0.0
          %4550 = vmatmul.mubr.f32.gmra.mxu0 %v4396
          %v4551 = vpop.f32.mrf.mxu0
          %v4552 = vadd.f32 0.0, %v4551
          %v4553 = vpop.f32.mrf.mxu0
          %4554 = vmatprep.mubr.f32.mxu0 0.0
          %4555 = vmatmul.mubr.f32.gmra.mxu0 %v4399
          %v4556 = vpop.f32.mrf.mxu0
          %v4557 = vadd.f32 0.0, %v4556
          %v4558 = vpop.f32.mrf.mxu0
          %4559 = vmatprep.mubr.f32.mxu0 0.0
          %4560 = vmatmul.mubr.f32.gmra.mxu0 %v4401
          %v4561 = vpop.f32.mrf.mxu0
          %v4562 = vadd.f32 0.0, %v4561
          %v4563 = vpop.f32.mrf.mxu0
          %4564 = vmatprep.mubr.f32.mxu0 0.0
          %4565 = vmatmul.mubr.f32.gmra.mxu0 %v4404
          %v4566 = vpop.f32.mrf.mxu0
          %v4567 = vadd.f32 0.0, %v4566
          %v4568 = vpop.f32.mrf.mxu0
          %4569 = vmatprep.mubr.f32.mxu0 0.0
          %4570 = vmatmul.mubr.f32.gmra.mxu0 %v4406
          %v4571 = vpop.f32.mrf.mxu0
          %v4572 = vadd.f32 0.0, %v4571
          %v4573 = vpop.f32.mrf.mxu0
          %4574 = vmatprep.mubr.f32.mxu0 0.0
          %4575 = vmatmul.mubr.f32.gmra.mxu0 %v4409
          %v4576 = vpop.f32.mrf.mxu0
          %v4577 = vadd.f32 0.0, %v4576
          %v4578 = vpop.f32.mrf.mxu0
          %4579 = vmatprep.mubr.f32.mxu0 0.0
          %4580 = vmatmul.mubr.f32.gmra.mxu0 %v4411
          %v4581 = vpop.f32.mrf.mxu0
          %v4582 = vadd.f32 0.0, %v4581
          %v4583 = vpop.f32.mrf.mxu0
          %4584 = vmatprep.mubr.f32.mxu0 0.0
          %4585 = vmatmul.mubr.f32.gmra.mxu0 %v4414
          %v4586 = vpop.f32.mrf.mxu0
          %v4587 = vadd.f32 0.0, %v4586
          %v4588 = vpop.f32.mrf.mxu0
          %4589 = vmatprep.mubr.f32.mxu0 0.0
          %4590 = vmatmul.mubr.f32.gmra.mxu0 %v4416
          %v4591 = vpop.f32.mrf.mxu0
          %v4592 = vadd.f32 0.0, %v4591
          %v4593 = vpop.f32.mrf.mxu0
          %4594 = vdwg.mxu0
          %v4595 = vadd.f32 %v4361, %v4517
          %v4596 = vadd.f32 %v4362, %v4522
          %v4597 = vadd.f32 %v4363, %v4527
          %v4598 = vadd.f32 %v4364, %v4532
          %v4599 = vadd.f32 %v4365, %v4537
          %v4600 = vadd.f32 %v4366, %v4542
          %v4601 = vadd.f32 %v4367, %v4547
          %v4602 = vadd.f32 %v4368, %v4552
          %v4603 = vadd.f32 %v4369, %v4557
          %v4604 = vadd.f32 %v4370, %v4562
          %v4605 = vadd.f32 %v4371, %v4567
          %v4606 = vadd.f32 %v4372, %v4572
          %v4607 = vadd.f32 %v4373, %v4577
          %v4608 = vadd.f32 %v4374, %v4582
          %v4609 = vadd.f32 %v4375, %v4587
          %v4610 = vadd.f32 %v4376, %v4592
          %v4611 = vld [vmem:[%s4] sm:$0x1]
          %v4613 = vlaneseq
          %v4614 = vshrl.u32 %v4613, 7
          %v4615 = vsub.s32 0, %v4614
          %v4616 = vrot.slane %v4611, %v4615
          %v4618 = vadd.f32 %v4595, %v4616
          %v4619 = vadd.f32 %v4596, %v4616
          %v4620 = vadd.f32 %v4597, %v4616
          %v4621 = vadd.f32 %v4598, %v4616
          %v4622 = vadd.f32 %v4599, %v4616
          %v4623 = vadd.f32 %v4600, %v4616
          %v4624 = vadd.f32 %v4601, %v4616
          %v4625 = vadd.f32 %v4602, %v4616
          %v4626 = vadd.f32 %v4603, %v4616
          %v4627 = vadd.f32 %v4604, %v4616
          %v4628 = vadd.f32 %v4605, %v4616
          %v4629 = vadd.f32 %v4606, %v4616
          %v4630 = vadd.f32 %v4607, %v4616
          %v4631 = vadd.f32 %v4608, %v4616
          %v4632 = vadd.f32 %v4609, %v4616
          %v4633 = vadd.f32 %v4610, %v4616
          %s4634 = smul.u32 %s2551, 16
          %s4635 = scalar_lea.vmem %s237, %s4634 [#allocation4]
          %v4636 = vld [vmem:[%s4635] sm:$0xff]
          %v4637 = vld [vmem:[%s4635 + $0x8] sm:$0xff]
          %v4638 = vld [vmem:[%s4635 + $0x10] sm:$0xff]
          %v4639 = vld [vmem:[%s4635 + $0x18] sm:$0xff]
          %v4640 = vld [vmem:[%s4635 + $0x20] sm:$0xff]
          %v4641 = vld [vmem:[%s4635 + $0x28] sm:$0xff]
          %v4642 = vld [vmem:[%s4635 + $0x30] sm:$0xff]
          %v4643 = vld [vmem:[%s4635 + $0x38] sm:$0xff]
          %v4644 = vld [vmem:[%s4635 + $0x40] sm:$0xff]
          %v4645 = vld [vmem:[%s4635 + $0x48] sm:$0xff]
          %v4646 = vld [vmem:[%s4635 + $0x50] sm:$0xff]
          %v4647 = vld [vmem:[%s4635 + $0x58] sm:$0xff]
          %v4648 = vld [vmem:[%s4635 + $0x60] sm:$0xff]
          %v4649 = vld [vmem:[%s4635 + $0x68] sm:$0xff]
          %v4650 = vld [vmem:[%s4635 + $0x70] sm:$0xff]
          %v4651 = vld [vmem:[%s4635 + $0x78] sm:$0xff]
          %v4652 = vmul.f32 %v4618, 0.1
          %v4653 = vmul.f32 %v4619, 0.1
          %v4654 = vmul.f32 %v4620, 0.1
          %v4655 = vmul.f32 %v4621, 0.1
          %v4656 = vmul.f32 %v4622, 0.1
          %v4657 = vmul.f32 %v4623, 0.1
          %v4658 = vmul.f32 %v4624, 0.1
          %v4659 = vmul.f32 %v4625, 0.1
          %v4660 = vmul.f32 %v4626, 0.1
          %v4661 = vmul.f32 %v4627, 0.1
          %v4662 = vmul.f32 %v4628, 0.1
          %v4663 = vmul.f32 %v4629, 0.1
          %v4664 = vmul.f32 %v4630, 0.1
          %v4665 = vmul.f32 %v4631, 0.1
          %v4666 = vmul.f32 %v4632, 0.1
          %v4667 = vmul.f32 %v4633, 0.1
          %v4668 = vadd.f32 %v4636, %v4652
          %v4669 = vadd.f32 %v4637, %v4653
          %v4670 = vadd.f32 %v4638, %v4654
          %v4671 = vadd.f32 %v4639, %v4655
          %v4672 = vadd.f32 %v4640, %v4656
          %v4673 = vadd.f32 %v4641, %v4657
          %v4674 = vadd.f32 %v4642, %v4658
          %v4675 = vadd.f32 %v4643, %v4659
          %v4676 = vadd.f32 %v4644, %v4660
          %v4677 = vadd.f32 %v4645, %v4661
          %v4678 = vadd.f32 %v4646, %v4662
          %v4679 = vadd.f32 %v4647, %v4663
          %v4680 = vadd.f32 %v4648, %v4664
          %v4681 = vadd.f32 %v4649, %v4665
          %v4682 = vadd.f32 %v4650, %v4666
          %v4683 = vadd.f32 %v4651, %v4667
          %s4684 = scalar_lea.vmem %s271, %s4634 [#allocation10]
          %4685 = vst [vmem:[%s4684] sm:$0xff] %v4668
          %4686 = vst [vmem:[%s4684 + $0x8] sm:$0xff] %v4669
          %4687 = vst [vmem:[%s4684 + $0x10] sm:$0xff] %v4670
          %4688 = vst [vmem:[%s4684 + $0x18] sm:$0xff] %v4671
          %4689 = vst [vmem:[%s4684 + $0x20] sm:$0xff] %v4672
          %4690 = vst [vmem:[%s4684 + $0x28] sm:$0xff] %v4673
          %4691 = vst [vmem:[%s4684 + $0x30] sm:$0xff] %v4674
          %4692 = vst [vmem:[%s4684 + $0x38] sm:$0xff] %v4675
          %4693 = vst [vmem:[%s4684 + $0x40] sm:$0xff] %v4676
          %4694 = vst [vmem:[%s4684 + $0x48] sm:$0xff] %v4677
          %4695 = vst [vmem:[%s4684 + $0x50] sm:$0xff] %v4678
          %4696 = vst [vmem:[%s4684 + $0x58] sm:$0xff] %v4679
          %4697 = vst [vmem:[%s4684 + $0x60] sm:$0xff] %v4680
          %4698 = vst [vmem:[%s4684 + $0x68] sm:$0xff] %v4681
          %4699 = vst [vmem:[%s4684 + $0x70] sm:$0xff] %v4682
          %4700 = vst [vmem:[%s4684 + $0x78] sm:$0xff] %v4683
        $region64: #{tpu_custom_call.1} parent=39 // loop_footer
          %s2550 = sadd.s32 1, %s2546
        $region65: #{tpu_custom_call.1} parent=39 // loop_footer_branch
          %2545 = sbr.rel target = $region61
        $region66: #{tpu_custom_call.1} parent=39 // loop_exit
          _
        %s4701 = sand.u32 %s141, 1
        %s4702 = scalar_lea.sflag [#allocation6], %s4701
        %s4703 = sand.u32 %s141, 1
        %s4704 = smul.addr %s4703, 256
        %s4705 = scalar_lea.vmem [#allocation10], %s4704
        // Predicated region
        $region67: #{tpu_custom_call.1} parent=39 // pred_check
          %p4706 = pneg %p151
        $region68: #{tpu_custom_call.1} parent=39 // pred_check_branch
          %4708 = sbr.rel (%p4706) target = $region70
        $region69: #{tpu_custom_call.1} parent=39 // pred_region
          %s4710 = ssub.s32 4096, 4096
          %4711 = vsyncadd %s4702, %s4710
          %s4712 = smul.addr %s23, 32
          %s4713 = smul.addr %s4712, 128
          %s4714 = scalar_lea.hbm %s5, %s4713
          %s4715 = sshll.u32 %s4705, 4
          %s4716 = int_to_ptr.vmem [resolvable:$true] %s4715
          %4721 = dma.vmem_to_hbm [thread:$0]  %s4716, 4096, %s4714, %s4702, 128, 128, 8
        $region70: #{tpu_custom_call.1} parent=39 // pred_fallthru
          _
      $region40: #{tpu_custom_call.1} parent=5 // pred_fallthru
        _
      %p4722 = scmp.le.s32.totalorder 2, %s18
      // Predicated region
      $region71: #{tpu_custom_call.1} parent=5 // pred_check
        %p4723 = pneg %p4722
      $region72: #{tpu_custom_call.1} parent=5 // pred_check_branch
        %4725 = sbr.rel (%p4723) target = $region74
      $region73: #{tpu_custom_call.1} parent=5 // pred_region
        %s4726 = ssub.s32 %s18, 2
        // Predicated region
        $region75: #{tpu_custom_call.1} parent=73 // pred_check
          %p4727 = pneg %p157
        $region76: #{tpu_custom_call.1} parent=73 // pred_check_branch
          %4729 = sbr.rel (%p4727) target = $region78
        $region77: #{tpu_custom_call.1} parent=73 // pred_region
          %s4730 = sand.u32 %s142, 1
          %s4731 = scalar_lea.sflag [#allocation6], %s4730
          %s4732 = sand.u32 %s142, 1
          %s4733 = smul.addr %s4732, 256
          %s4734 = scalar_lea.vmem [#allocation10], %s4733
          %4735 = dma.done %s4731, 4096
        $region78: #{tpu_custom_call.1} parent=73 // pred_fallthru
          _
      $region74: #{tpu_custom_call.1} parent=5 // pred_fallthru
        _
    $region6: #{tpu_custom_call.1} parent=1 // loop_footer
      %s22 = sadd.s32 1, %s18
    $region7: #{tpu_custom_call.1} parent=1 // loop_footer_branch
      %17 = sbr.rel target = $region3
    $region8: #{tpu_custom_call.1} parent=1 // loop_exit
      _
    %4736 = vsyncpa [#allocation5], 1
    %s4737 = scalar_lea.sflag [#allocation5], 1
    %4738 = vsyncpa %s4737, 1
    %4739 = vsyncpa [#allocation8], 1
    %4740 = vsyncpa [#allocation6], 1
    %s4741 = scalar_lea.sflag [#allocation6], 1
    %4742 = vsyncpa %s4741, 1

</llo_original>
